<compile_context>
chip_gen: v7x
topology: tpu7x:2x2x1
jax: 0.10.0
libtpu: 0.0.40
codegen_flags: <defaults>
</compile_context>

<pallas_src>
import math
import functools

import jax
import jax.numpy as jnp
from jax.experimental import pallas as pl
from jax.experimental.pallas import tpu as pltpu

CFG = dict(
    vocab_size=64,
    max_seq_length=16,
    emb_dim=32,
    n_heads=4,
    n_layers=2,
    drop_rate=0.0,   # dropout is identity in eval / rate 0
)
EPS = 1e-5


def _layer_norm(v, g, s):
    # v: (N, D); g, s: (1, D); statistics kept in f32 (EUP rsqrt).
    mean = jnp.mean(v, axis=-1, keepdims=True)
    c = v - mean
    var = jnp.mean(c * c, axis=-1, keepdims=True)
    return c * jax.lax.rsqrt(var + EPS) * g + s


# ----------------------------------------------------------------------------
# Single fused kernel: in-kernel embedding gather -> n_layers blocks -> head.
# ----------------------------------------------------------------------------
def _ngpt_kernel(ids_ref,                                   # SMEM (BT,) int32  (scalar prefetch)
                 tok_emb_ref, pos_ref,
                 wqkv_ref, wo_ref, bo_ref,
                 g1_ref, s1_ref, g2_ref, s2_ref,
                 w1_ref, b1_ref, w2_ref, b2_ref,
                 fg_ref, fs_ref, wout_ref,
                 out_ref,
                 xbuf_ref,                                  # VMEM (BT, D) f32 scratch
                 *, n_heads, n_layers, batch, seq, mm_dtype):
    B, T = batch, seq
    BT = B * T
    D = pos_ref.shape[-1]
    hd = D // n_heads

    # Matmul helper: operands cast to mm_dtype (bf16 on v6e/v7x), accumulate f32.
    def mm(a, b):
        return jnp.dot(a.astype(mm_dtype), b, preferred_element_type=jnp.float32)

    # --- in-kernel embedding gather: ids in SMEM, (V,D) table in VMEM ---------
    for r in range(BT):                      # BT=16, fully unrolled scalar gather
        tid = ids_ref[r]
        xbuf_ref[pl.ds(r, 1), :] = tok_emb_ref[pl.ds(tid, 1), :]

    # --- l2-normalized token & positional embeddings (no epsilon, matches ref) -
    tok = xbuf_ref[...]                                     # (BT, D), f32
    tok = tok * jax.lax.rsqrt(jnp.sum(tok * tok, axis=-1, keepdims=True))
    pos = pos_ref[...]                                      # (T, D)
    pos = pos * jax.lax.rsqrt(jnp.sum(pos * pos, axis=-1, keepdims=True))
    x = (tok.reshape(B, T, D) + pos[None, :, :]).reshape(BT, D)   # residual stream

    # --- additive causal mask, hoisted out of all loops ------------------------
    row = jax.lax.broadcasted_iota(jnp.int32, (T, T), 0)
    col = jax.lax.broadcasted_iota(jnp.int32, (T, T), 1)
    mask_add = jnp.where(row >= col, 0.0, -1e30).astype(jnp.float32)   # (T, T)

    for l in range(n_layers):                # n_layers=2, fully unrolled
        # ---- attention sub-block (pre-norm) ----
        h = _layer_norm(x, g1_ref[l], s1_ref[l])            # (BT, D), f32
        qkv = mm(h, wqkv_ref[l])                            # (BT, 3D); scale folded into Q cols
        q3 = qkv[:, :D].reshape(B, T, D)
        k3 = qkv[:, D:2 * D].reshape(B, T, D)
        v3 = qkv[:, 2 * D:].reshape(B, T, D)

        # Per-head scores/softmax/context (batched over B inside each einsum);
        # head outputs concatenated once and projected with ONE W_o matmul.
        ctx_parts = []
        for hix in range(n_heads):
            sl = slice(hix * hd, (hix + 1) * hd)
            s = jnp.einsum('bqd,bkd->bqk',
                           q3[..., sl].astype(mm_dtype), k3[..., sl].astype(mm_dtype),
                           preferred_element_type=jnp.float32)       # (B, T, T)
            s = s + mask_add
            s = s - jnp.max(s, axis=-1, keepdims=True)
            p = jnp.exp(s)
            p = p * pl.reciprocal(jnp.sum(p, axis=-1, keepdims=True), approx=True)
            o = jnp.einsum('bqk,bkd->bqd',
                           p.astype(mm_dtype), v3[..., sl].astype(mm_dtype),
                           preferred_element_type=jnp.float32)       # (B, T, hd)
            ctx_parts.append(o)
        ctx = jnp.concatenate(ctx_parts, axis=-1).reshape(BT, D)     # (BT, D)
        x = x + mm(ctx, wo_ref[l]) + bo_ref[l]

        # ---- feed-forward sub-block (pre-norm, GELU-tanh) ----
        h2 = _layer_norm(x, g2_ref[l], s2_ref[l])
        f = mm(h2, w1_ref[l]) + b1_ref[l]
        f = jax.nn.gelu(f, approximate=True)
        f = mm(f, w2_ref[l]) + b2_ref[l]
        x = x + f

    # ---- final LayerNorm + output head (sz folded into W_out, lane-dense Vp) --
    hf = _layer_norm(x, fg_ref[...], fs_ref[...])
    out_ref[...] = mm(hf, wout_ref[...])                    # (BT, Vp) unmasked vst


def ngpt_forward(params, in_idx, cfg, *, matmul_dtype=jnp.float32):
    """matmul_dtype=jnp.bfloat16 is recommended on v6e/v7x (MXU-native);
    elementwise math stays f32 either way (v5e-safe)."""
    B, T = in_idx.shape
    D, H, L, V = cfg["emb_dim"], cfg["n_heads"], cfg["n_layers"], cfg["vocab_size"]
    hd = D // H
    Dh = 4 * D
    BT = B * T
    Vp = max(128, ((V + 127) // 128) * 128)   # lane-dense padded vocab

    # ---- parameter prep (in practice do this once at init, not per call) ----
    blocks = params["blocks"]
    stack = lambda name: jnp.stack([blk[name] for blk in blocks], axis=0)
    scale = 1.0 / math.sqrt(hd)
    wqkv = jnp.concatenate([stack("wq") * scale, stack("wk"), stack("wv")],
                           axis=-1)                          # (L, D, 3D), scale folded into Q
    wo = stack("wo")                                         # (L, D, D)
    bo, g1, s1 = stack("bo"), stack("g1"), stack("s1")       # (L, 1, D)
    g2, s2 = stack("g2"), stack("s2")
    w1, b1 = stack("w1"), stack("b1")                        # (L, D, 4D), (L, 1, 4D)
    w2, b2 = stack("w2"), stack("b2")                        # (L, 4D, D), (L, 1, D)

    # Fold sz * (1 / sz_init_scaling) = sz * sqrt(D) into W_out's columns.
    sz_eff = params["sz"] * math.sqrt(D)                     # (1, V)
    w_out_eff = params["w_out"] * sz_eff                     # (D, V)
    w_out_eff = jnp.pad(w_out_eff, ((0, 0), (0, Vp - V)))    # (D, Vp)

    # Pre-cast matmul weights to the MXU operand dtype (bf16 on v6e/v7x).
    wd = jnp.dtype(matmul_dtype)
    wqkv, wo, w1, w2, w_out_eff = (w.astype(wd) for w in (wqkv, wo, w1, w2, w_out_eff))

    ids = in_idx.reshape(-1).astype(jnp.int32)               # (BT,), scalar-prefetched to SMEM
    pos = params["pos_emb"][:T]                              # (T, D)

    inputs = (params["tok_emb"], pos, wqkv, wo, bo, g1, s1, g2, s2,
              w1, b1, w2, b2, params["fin_g"], params["fin_s"], w_out_eff)

    def full_spec(shape):
        nd = len(shape)
        return pl.BlockSpec(shape, lambda i, ids_ref, _nd=nd: (0,) * _nd)

    # Advisory cost estimate for XLA scheduling.
    flops = int(L * (2 * BT * D * 3 * D            # QKV
                     + 4 * B * T * T * D           # scores + p@v over all heads
                     + 2 * BT * D * D              # W_o
                     + 2 * BT * D * Dh + 2 * BT * Dh * D)   # MLP
                + 2 * BT * D * Vp)                 # head
    transcendentals = int(L * (H * B * T * T + BT * Dh))
    bytes_accessed = int(sum(int(a.size) * a.dtype.itemsize for a in inputs)
                         + ids.size * 4 + BT * Vp * 4)

    out = pl.pallas_call(
        functools.partial(_ngpt_kernel, n_heads=H, n_layers=L, batch=B, seq=T,
                          mm_dtype=wd),
        out_shape=jax.ShapeDtypeStruct((BT, Vp), jnp.float32),
        grid_spec=pltpu.PrefetchScalarGridSpec(
            num_scalar_prefetch=1,
            grid=(1,),
            in_specs=[full_spec(a.shape) for a in inputs],
            out_specs=pl.BlockSpec((BT, Vp), lambda i, ids_ref: (0, 0)),
            scratch_shapes=[pltpu.VMEM((BT, D), jnp.float32)]),
        compiler_params=pltpu.CompilerParams(dimension_semantics=("arbitrary",)),
        cost_estimate=pl.CostEstimate(flops=flops, transcendentals=transcendentals,
                                      bytes_accessed=bytes_accessed),
    )(ids, *inputs)
    return out.reshape(B, T, Vp)[..., :V]


# ----------------------------------------------------------------------------
# Parameter init (deterministic, mirrors _init_weights / reset_parameters).
# ----------------------------------------------------------------------------
def init_params(key, cfg):
    D, V, S = cfg["emb_dim"], cfg["vocab_size"], cfg["max_seq_length"]
    Dh = 4 * D
    keys = iter(jax.random.split(key, 64))
    nrm = lambda shape: 0.02 * jax.random.normal(next(keys), shape, jnp.float32)

    params = {
        "tok_emb": nrm((V, D)),
        "pos_emb": nrm((S, D)),
        "blocks": [],
        "fin_g": jnp.ones((1, D), jnp.float32),
        "fin_s": jnp.zeros((1, D), jnp.float32),
        "w_out": nrm((D, V)),                           # stored as (in, out)
        "sz": jnp.ones((1, V), jnp.float32) / math.sqrt(D),
    }
    for _ in range(cfg["n_layers"]):
        params["blocks"].append(dict(
            wq=nrm((D, D)), wk=nrm((D, D)), wv=nrm((D, D)),
            wo=nrm((D, D)), bo=jnp.zeros((1, D), jnp.float32),
            g1=jnp.ones((1, D), jnp.float32), s1=jnp.zeros((1, D), jnp.float32),
            g2=jnp.ones((1, D), jnp.float32), s2=jnp.zeros((1, D), jnp.float32),
            w1=nrm((D, Dh)), b1=jnp.zeros((1, Dh), jnp.float32),
            w2=nrm((Dh, D)), b2=jnp.zeros((1, D), jnp.float32),
        ))
    return params


# ----------------------------------------------------------------------------
# Pure-JAX reference for a correctness check.
# ----------------------------------------------------------------------------
def ngpt_reference(params, in_idx, cfg):
    D, H = cfg["emb_dim"], cfg["n_heads"]
    hd = D // H
    B, T = in_idx.shape
    tok = jnp.take(params["tok_emb"], in_idx, axis=0)
    pos = params["pos_emb"][:T]
    tok = tok / jnp.linalg.norm(tok, axis=-1, keepdims=True)
    pos = pos / jnp.linalg.norm(pos, axis=-1, keepdims=True)
    x = tok + pos

    def ln(v, g, s):
        m = jnp.mean(v, -1, keepdims=True)
        var = jnp.mean((v - m) ** 2, -1, keepdims=True)
        return (v - m) / jnp.sqrt(var + EPS) * g[0] + s[0]

    mask = jnp.tril(jnp.ones((T, T), bool))
    for p in params["blocks"]:
        h = ln(x, p["g1"], p["s1"])
        q = h @ p["wq"]; k = h @ p["wk"]; v = h @ p["wv"]
        q = q.reshape(B, T, H, hd); k = k.reshape(B, T, H, hd); v = v.reshape(B, T, H, hd)
        s = jnp.einsum("bqhd,bkhd->bhqk", q, k) / math.sqrt(hd)
        s = jnp.where(mask, s, -jnp.inf)
        a = jax.nn.softmax(s, axis=-1)
        o = jnp.einsum("bhqk,bkhd->bqhd", a, v).reshape(B, T, D)
        x = x + (o @ p["wo"] + p["bo"][0])
        h2 = ln(x, p["g2"], p["s2"])
        f = jax.nn.gelu(h2 @ p["w1"] + p["b1"][0], approximate=True)
        x = x + (f @ p["w2"] + p["b2"][0])
    h = ln(x, params["fin_g"], params["fin_s"])
    sz_eff = params["sz"][0] * math.sqrt(D)
    return sz_eff * (h @ params["w_out"])


if __name__ == "__main__":
    key = jax.random.PRNGKey(0)
    pkey, ikey = jax.random.split(key)
    params = init_params(pkey, CFG)

    B, T = 2, 8
    in_idx = jax.random.randint(ikey, (B, T), 0, CFG["vocab_size"], dtype=jnp.int32)

    ref = ngpt_reference(params, in_idx, CFG)

    # f32 matmul-operand path: strict parity with the reference.
    logits = jax.block_until_ready(ngpt_forward(params, in_idx, CFG))
    assert logits.shape == (B, T, CFG["vocab_size"])
    assert jnp.allclose(logits, ref, atol=2e-3, rtol=2e-3)

    # bf16 matmul-operand path (recommended on v6e/v7x): looser tolerance.
    logits_bf16 = jax.block_until_ready(
        ngpt_forward(params, in_idx, CFG, matmul_dtype=jnp.bfloat16))
    assert logits_bf16.shape == (B, T, CFG["vocab_size"])
    assert jnp.allclose(logits_bf16, ref, atol=5e-2, rtol=5e-2)

    print("KERNEL_OK")
</pallas_src>

<mosaic_0001>
module attributes {stable_mosaic.version = 11 : i64} {
  func.func @_ngpt_kernel(%arg0: i32, %arg1: memref<16xi32, #tpu.memory_space<smem>>, %arg2: memref<64x32xf32, #tpu.memory_space<vmem>>, %arg3: memref<8x32xf32, #tpu.memory_space<vmem>>, %arg4: memref<2x32x96xf32, #tpu.memory_space<vmem>>, %arg5: memref<2x32x32xf32, #tpu.memory_space<vmem>>, %arg6: memref<2x1x32xf32, #tpu.memory_space<vmem>>, %arg7: memref<2x1x32xf32, #tpu.memory_space<vmem>>, %arg8: memref<2x1x32xf32, #tpu.memory_space<vmem>>, %arg9: memref<2x1x32xf32, #tpu.memory_space<vmem>>, %arg10: memref<2x1x32xf32, #tpu.memory_space<vmem>>, %arg11: memref<2x32x128xf32, #tpu.memory_space<vmem>>, %arg12: memref<2x1x128xf32, #tpu.memory_space<vmem>>, %arg13: memref<2x128x32xf32, #tpu.memory_space<vmem>>, %arg14: memref<2x1x32xf32, #tpu.memory_space<vmem>>, %arg15: memref<1x32xf32, #tpu.memory_space<vmem>>, %arg16: memref<1x32xf32, #tpu.memory_space<vmem>>, %arg17: memref<32x128xf32, #tpu.memory_space<vmem>>, %arg18: memref<16x128xf32, #tpu.memory_space<vmem>>, %arg19: memref<16x32xf32, #tpu.memory_space<vmem>>) attributes {dimension_semantics = [#tpu.dimension_semantics<arbitrary>], iteration_bounds = array<i64: 1>, scalar_prefetch = 1 : i64, scratch_operands = 1 : i64, tpu.core_type = #tpu.core_type<tc>, window_params = [{pipeline_mode = #tpu.pipeline_mode<synchronous>, transform_indices = @transform_0, window_bounds = array<i64: 64, 32>}, {pipeline_mode = #tpu.pipeline_mode<synchronous>, transform_indices = @transform_1, window_bounds = array<i64: 8, 32>}, {pipeline_mode = #tpu.pipeline_mode<synchronous>, transform_indices = @transform_2, window_bounds = array<i64: 2, 32, 96>}, {pipeline_mode = #tpu.pipeline_mode<synchronous>, transform_indices = @transform_3, window_bounds = array<i64: 2, 32, 32>}, {pipeline_mode = #tpu.pipeline_mode<synchronous>, transform_indices = @transform_4, window_bounds = array<i64: 2, 1, 32>}, {pipeline_mode = #tpu.pipeline_mode<synchronous>, transform_indices = @transform_5, window_bounds = array<i64: 2, 1, 32>}, {pipeline_mode = #tpu.pipeline_mode<synchronous>, transform_indices = @transform_6, window_bounds = array<i64: 2, 1, 32>}, {pipeline_mode = #tpu.pipeline_mode<synchronous>, transform_indices = @transform_7, window_bounds = array<i64: 2, 1, 32>}, {pipeline_mode = #tpu.pipeline_mode<synchronous>, transform_indices = @transform_8, window_bounds = array<i64: 2, 1, 32>}, {pipeline_mode = #tpu.pipeline_mode<synchronous>, transform_indices = @transform_9, window_bounds = array<i64: 2, 32, 128>}, {pipeline_mode = #tpu.pipeline_mode<synchronous>, transform_indices = @transform_10, window_bounds = array<i64: 2, 1, 128>}, {pipeline_mode = #tpu.pipeline_mode<synchronous>, transform_indices = @transform_11, window_bounds = array<i64: 2, 128, 32>}, {pipeline_mode = #tpu.pipeline_mode<synchronous>, transform_indices = @transform_12, window_bounds = array<i64: 2, 1, 32>}, {pipeline_mode = #tpu.pipeline_mode<synchronous>, transform_indices = @transform_13, window_bounds = array<i64: 1, 32>}, {pipeline_mode = #tpu.pipeline_mode<synchronous>, transform_indices = @transform_14, window_bounds = array<i64: 1, 32>}, {pipeline_mode = #tpu.pipeline_mode<synchronous>, transform_indices = @transform_15, window_bounds = array<i64: 32, 128>}, {pipeline_mode = #tpu.pipeline_mode<synchronous>, transform_indices = @transform_16, window_bounds = array<i64: 16, 128>}]} {
    %c0 = arith.constant 0 : index
    %0 = memref.load %arg1[%c0] : memref<16xi32, #tpu.memory_space<smem>>
    %1 = arith.index_cast %0 : i32 to index
    %c0_0 = arith.constant 0 : index
    %2 = vector.load %arg2[%1, %c0_0] : memref<64x32xf32, #tpu.memory_space<vmem>>, vector<1x32xf32>
    %c0_1 = arith.constant 0 : index
    %c0_2 = arith.constant 0 : index
    %3 = vector.load %arg19[%c0_1, %c0_2] : memref<16x32xf32, #tpu.memory_space<vmem>>, vector<1x32xf32>
    tpu.vector_store %arg19[%c0_1, %c0_2], %2 {strides = array<i32>} : memref<16x32xf32, #tpu.memory_space<vmem>>, vector<1x32xf32>,
    %c1 = arith.constant 1 : index
    %4 = memref.load %arg1[%c1] : memref<16xi32, #tpu.memory_space<smem>>
    %5 = arith.index_cast %4 : i32 to index
    %c0_3 = arith.constant 0 : index
    %6 = vector.load %arg2[%5, %c0_3] : memref<64x32xf32, #tpu.memory_space<vmem>>, vector<1x32xf32>
    %c1_4 = arith.constant 1 : index
    %c0_5 = arith.constant 0 : index
    %7 = vector.load %arg19[%c1_4, %c0_5] : memref<16x32xf32, #tpu.memory_space<vmem>>, vector<1x32xf32>
    tpu.vector_store %arg19[%c1_4, %c0_5], %6 {strides = array<i32>} : memref<16x32xf32, #tpu.memory_space<vmem>>, vector<1x32xf32>,
    %c2 = arith.constant 2 : index
    %8 = memref.load %arg1[%c2] : memref<16xi32, #tpu.memory_space<smem>>
    %9 = arith.index_cast %8 : i32 to index
    %c0_6 = arith.constant 0 : index
    %10 = vector.load %arg2[%9, %c0_6] : memref<64x32xf32, #tpu.memory_space<vmem>>, vector<1x32xf32>
    %c2_7 = arith.constant 2 : index
    %c0_8 = arith.constant 0 : index
    %11 = vector.load %arg19[%c2_7, %c0_8] : memref<16x32xf32, #tpu.memory_space<vmem>>, vector<1x32xf32>
    tpu.vector_store %arg19[%c2_7, %c0_8], %10 {strides = array<i32>} : memref<16x32xf32, #tpu.memory_space<vmem>>, vector<1x32xf32>,
    %c3 = arith.constant 3 : index
    %12 = memref.load %arg1[%c3] : memref<16xi32, #tpu.memory_space<smem>>
    %13 = arith.index_cast %12 : i32 to index
    %c0_9 = arith.constant 0 : index
    %14 = vector.load %arg2[%13, %c0_9] : memref<64x32xf32, #tpu.memory_space<vmem>>, vector<1x32xf32>
    %c3_10 = arith.constant 3 : index
    %c0_11 = arith.constant 0 : index
    %15 = vector.load %arg19[%c3_10, %c0_11] : memref<16x32xf32, #tpu.memory_space<vmem>>, vector<1x32xf32>
    tpu.vector_store %arg19[%c3_10, %c0_11], %14 {strides = array<i32>} : memref<16x32xf32, #tpu.memory_space<vmem>>, vector<1x32xf32>,
    %c4 = arith.constant 4 : index
    %16 = memref.load %arg1[%c4] : memref<16xi32, #tpu.memory_space<smem>>
    %17 = arith.index_cast %16 : i32 to index
    %c0_12 = arith.constant 0 : index
    %18 = vector.load %arg2[%17, %c0_12] : memref<64x32xf32, #tpu.memory_space<vmem>>, vector<1x32xf32>
    %c4_13 = arith.constant 4 : index
    %c0_14 = arith.constant 0 : index
    %19 = vector.load %arg19[%c4_13, %c0_14] : memref<16x32xf32, #tpu.memory_space<vmem>>, vector<1x32xf32>
    tpu.vector_store %arg19[%c4_13, %c0_14], %18 {strides = array<i32>} : memref<16x32xf32, #tpu.memory_space<vmem>>, vector<1x32xf32>,
    %c5 = arith.constant 5 : index
    %20 = memref.load %arg1[%c5] : memref<16xi32, #tpu.memory_space<smem>>
    %21 = arith.index_cast %20 : i32 to index
    %c0_15 = arith.constant 0 : index
    %22 = vector.load %arg2[%21, %c0_15] : memref<64x32xf32, #tpu.memory_space<vmem>>, vector<1x32xf32>
    %c5_16 = arith.constant 5 : index
    %c0_17 = arith.constant 0 : index
    %23 = vector.load %arg19[%c5_16, %c0_17] : memref<16x32xf32, #tpu.memory_space<vmem>>, vector<1x32xf32>
    tpu.vector_store %arg19[%c5_16, %c0_17], %22 {strides = array<i32>} : memref<16x32xf32, #tpu.memory_space<vmem>>, vector<1x32xf32>,
    %c6 = arith.constant 6 : index
    %24 = memref.load %arg1[%c6] : memref<16xi32, #tpu.memory_space<smem>>
    %25 = arith.index_cast %24 : i32 to index
    %c0_18 = arith.constant 0 : index
    %26 = vector.load %arg2[%25, %c0_18] : memref<64x32xf32, #tpu.memory_space<vmem>>, vector<1x32xf32>
    %c6_19 = arith.constant 6 : index
    %c0_20 = arith.constant 0 : index
    %27 = vector.load %arg19[%c6_19, %c0_20] : memref<16x32xf32, #tpu.memory_space<vmem>>, vector<1x32xf32>
    tpu.vector_store %arg19[%c6_19, %c0_20], %26 {strides = array<i32>} : memref<16x32xf32, #tpu.memory_space<vmem>>, vector<1x32xf32>,
    %c7 = arith.constant 7 : index
    %28 = memref.load %arg1[%c7] : memref<16xi32, #tpu.memory_space<smem>>
    %29 = arith.index_cast %28 : i32 to index
    %c0_21 = arith.constant 0 : index
    %30 = vector.load %arg2[%29, %c0_21] : memref<64x32xf32, #tpu.memory_space<vmem>>, vector<1x32xf32>
    %c7_22 = arith.constant 7 : index
    %c0_23 = arith.constant 0 : index
    %31 = vector.load %arg19[%c7_22, %c0_23] : memref<16x32xf32, #tpu.memory_space<vmem>>, vector<1x32xf32>
    tpu.vector_store %arg19[%c7_22, %c0_23], %30 {strides = array<i32>} : memref<16x32xf32, #tpu.memory_space<vmem>>, vector<1x32xf32>,
    %c8 = arith.constant 8 : index
    %32 = memref.load %arg1[%c8] : memref<16xi32, #tpu.memory_space<smem>>
    %33 = arith.index_cast %32 : i32 to index
    %c0_24 = arith.constant 0 : index
    %34 = vector.load %arg2[%33, %c0_24] : memref<64x32xf32, #tpu.memory_space<vmem>>, vector<1x32xf32>
    %c8_25 = arith.constant 8 : index
    %c0_26 = arith.constant 0 : index
    %35 = vector.load %arg19[%c8_25, %c0_26] : memref<16x32xf32, #tpu.memory_space<vmem>>, vector<1x32xf32>
    tpu.vector_store %arg19[%c8_25, %c0_26], %34 {strides = array<i32>} : memref<16x32xf32, #tpu.memory_space<vmem>>, vector<1x32xf32>,
    %c9 = arith.constant 9 : index
    %36 = memref.load %arg1[%c9] : memref<16xi32, #tpu.memory_space<smem>>
    %37 = arith.index_cast %36 : i32 to index
    %c0_27 = arith.constant 0 : index
    %38 = vector.load %arg2[%37, %c0_27] : memref<64x32xf32, #tpu.memory_space<vmem>>, vector<1x32xf32>
    %c9_28 = arith.constant 9 : index
    %c0_29 = arith.constant 0 : index
    %39 = vector.load %arg19[%c9_28, %c0_29] : memref<16x32xf32, #tpu.memory_space<vmem>>, vector<1x32xf32>
    tpu.vector_store %arg19[%c9_28, %c0_29], %38 {strides = array<i32>} : memref<16x32xf32, #tpu.memory_space<vmem>>, vector<1x32xf32>,
    %c10 = arith.constant 10 : index
    %40 = memref.load %arg1[%c10] : memref<16xi32, #tpu.memory_space<smem>>
    %41 = arith.index_cast %40 : i32 to index
    %c0_30 = arith.constant 0 : index
    %42 = vector.load %arg2[%41, %c0_30] : memref<64x32xf32, #tpu.memory_space<vmem>>, vector<1x32xf32>
    %c10_31 = arith.constant 10 : index
    %c0_32 = arith.constant 0 : index
    %43 = vector.load %arg19[%c10_31, %c0_32] : memref<16x32xf32, #tpu.memory_space<vmem>>, vector<1x32xf32>
    tpu.vector_store %arg19[%c10_31, %c0_32], %42 {strides = array<i32>} : memref<16x32xf32, #tpu.memory_space<vmem>>, vector<1x32xf32>,
    %c11 = arith.constant 11 : index
    %44 = memref.load %arg1[%c11] : memref<16xi32, #tpu.memory_space<smem>>
    %45 = arith.index_cast %44 : i32 to index
    %c0_33 = arith.constant 0 : index
    %46 = vector.load %arg2[%45, %c0_33] : memref<64x32xf32, #tpu.memory_space<vmem>>, vector<1x32xf32>
    %c11_34 = arith.constant 11 : index
    %c0_35 = arith.constant 0 : index
    %47 = vector.load %arg19[%c11_34, %c0_35] : memref<16x32xf32, #tpu.memory_space<vmem>>, vector<1x32xf32>
    tpu.vector_store %arg19[%c11_34, %c0_35], %46 {strides = array<i32>} : memref<16x32xf32, #tpu.memory_space<vmem>>, vector<1x32xf32>,
    %c12 = arith.constant 12 : index
    %48 = memref.load %arg1[%c12] : memref<16xi32, #tpu.memory_space<smem>>
    %49 = arith.index_cast %48 : i32 to index
    %c0_36 = arith.constant 0 : index
    %50 = vector.load %arg2[%49, %c0_36] : memref<64x32xf32, #tpu.memory_space<vmem>>, vector<1x32xf32>
    %c12_37 = arith.constant 12 : index
    %c0_38 = arith.constant 0 : index
    %51 = vector.load %arg19[%c12_37, %c0_38] : memref<16x32xf32, #tpu.memory_space<vmem>>, vector<1x32xf32>
    tpu.vector_store %arg19[%c12_37, %c0_38], %50 {strides = array<i32>} : memref<16x32xf32, #tpu.memory_space<vmem>>, vector<1x32xf32>,
    %c13 = arith.constant 13 : index
    %52 = memref.load %arg1[%c13] : memref<16xi32, #tpu.memory_space<smem>>
    %53 = arith.index_cast %52 : i32 to index
    %c0_39 = arith.constant 0 : index
    %54 = vector.load %arg2[%53, %c0_39] : memref<64x32xf32, #tpu.memory_space<vmem>>, vector<1x32xf32>
    %c13_40 = arith.constant 13 : index
    %c0_41 = arith.constant 0 : index
    %55 = vector.load %arg19[%c13_40, %c0_41] : memref<16x32xf32, #tpu.memory_space<vmem>>, vector<1x32xf32>
    tpu.vector_store %arg19[%c13_40, %c0_41], %54 {strides = array<i32>} : memref<16x32xf32, #tpu.memory_space<vmem>>, vector<1x32xf32>,
    %c14 = arith.constant 14 : index
    %56 = memref.load %arg1[%c14] : memref<16xi32, #tpu.memory_space<smem>>
    %57 = arith.index_cast %56 : i32 to index
    %c0_42 = arith.constant 0 : index
    %58 = vector.load %arg2[%57, %c0_42] : memref<64x32xf32, #tpu.memory_space<vmem>>, vector<1x32xf32>
    %c14_43 = arith.constant 14 : index
    %c0_44 = arith.constant 0 : index
    %59 = vector.load %arg19[%c14_43, %c0_44] : memref<16x32xf32, #tpu.memory_space<vmem>>, vector<1x32xf32>
    tpu.vector_store %arg19[%c14_43, %c0_44], %58 {strides = array<i32>} : memref<16x32xf32, #tpu.memory_space<vmem>>, vector<1x32xf32>,
    %c15 = arith.constant 15 : index
    %60 = memref.load %arg1[%c15] : memref<16xi32, #tpu.memory_space<smem>>
    %61 = arith.index_cast %60 : i32 to index
    %c0_45 = arith.constant 0 : index
    %62 = vector.load %arg2[%61, %c0_45] : memref<64x32xf32, #tpu.memory_space<vmem>>, vector<1x32xf32>
    %c15_46 = arith.constant 15 : index
    %c0_47 = arith.constant 0 : index
    %63 = vector.load %arg19[%c15_46, %c0_47] : memref<16x32xf32, #tpu.memory_space<vmem>>, vector<1x32xf32>
    tpu.vector_store %arg19[%c15_46, %c0_47], %62 {strides = array<i32>} : memref<16x32xf32, #tpu.memory_space<vmem>>, vector<1x32xf32>,
    %c0_48 = arith.constant 0 : index
    %c0_49 = arith.constant 0 : index
    %64 = vector.load %arg19[%c0_48, %c0_49] : memref<16x32xf32, #tpu.memory_space<vmem>>, vector<16x32xf32>
    %65 = arith.mulf %64, %64 : vector<16x32xf32>
    %cst = arith.constant dense<0.000000e+00> : vector<16xf32>
    %66 = vector.multi_reduction <add>, %65, %cst [1] : vector<16x32xf32> to vector<16xf32>
    %67 = vector.shape_cast %66 : vector<16xf32> to vector<16x1xf32>
    %68 = math.rsqrt %67 : vector<16x1xf32>
    %69 = vector.broadcast %68 : vector<16x1xf32> to vector<16x32xf32>
    %70 = arith.mulf %64, %69 : vector<16x32xf32>
    %c0_50 = arith.constant 0 : index
    %c0_51 = arith.constant 0 : index
    %71 = vector.load %arg3[%c0_50, %c0_51] : memref<8x32xf32, #tpu.memory_space<vmem>>, vector<8x32xf32>
    %72 = arith.mulf %71, %71 : vector<8x32xf32>
    %cst_52 = arith.constant dense<0.000000e+00> : vector<8xf32>
    %73 = vector.multi_reduction <add>, %72, %cst_52 [1] : vector<8x32xf32> to vector<8xf32>
    %74 = vector.shape_cast %73 : vector<8xf32> to vector<8x1xf32>
    %75 = math.rsqrt %74 : vector<8x1xf32>
    %76 = vector.broadcast %75 : vector<8x1xf32> to vector<8x32xf32>
    %77 = arith.mulf %71, %76 : vector<8x32xf32>
    %78 = vector.shape_cast %70 : vector<16x32xf32> to vector<2x8x32xf32>
    %79 = vector.shape_cast %77 : vector<8x32xf32> to vector<1x8x32xf32>
    %80 = vector.broadcast %79 : vector<1x8x32xf32> to vector<2x8x32xf32>
    %81 = arith.addf %78, %80 : vector<2x8x32xf32>
    %82 = vector.shape_cast %81 : vector<2x8x32xf32> to vector<16x32xf32>
    %83 = tpu.iota {dimensions = array<i32: 0>} : vector<8x8xi32>
    %84 = tpu.iota {dimensions = array<i32: 1>} : vector<8x8xi32>
    %85 = arith.cmpi sge, %83, %84 : vector<8x8xi32>
    %cst_53 = arith.constant 0.000000e+00 : f32
    %cst_54 = arith.constant -1.000000e+30 : f32
    %86 = vector.broadcast %cst_53 : f32 to vector<8x8xf32>
    %87 = vector.broadcast %cst_54 : f32 to vector<8x8xf32>
    %88 = arith.select %85, %86, %87 : vector<8x8xi1>, vector<8x8xf32>
    %c0_55 = arith.constant 0 : index
    %c0_56 = arith.constant 0 : index
    %c0_57 = arith.constant 0 : index
    %89 = vector.load %arg7[%c0_55, %c0_56, %c0_57] : memref<2x1x32xf32, #tpu.memory_space<vmem>>, vector<1x1x32xf32>
    %90 = vector.shape_cast %89 : vector<1x1x32xf32> to vector<1x32xf32>
    %c0_58 = arith.constant 0 : index
    %c0_59 = arith.constant 0 : index
    %c0_60 = arith.constant 0 : index
    %91 = vector.load %arg8[%c0_58, %c0_59, %c0_60] : memref<2x1x32xf32, #tpu.memory_space<vmem>>, vector<1x1x32xf32>
    %92 = vector.shape_cast %91 : vector<1x1x32xf32> to vector<1x32xf32>
    %cst_61 = arith.constant dense<0.000000e+00> : vector<16xf32>
    %93 = vector.multi_reduction <add>, %82, %cst_61 [1] : vector<16x32xf32> to vector<16xf32>
    %94 = vector.shape_cast %93 : vector<16xf32> to vector<16x1xf32>
    %cst_62 = arith.constant 3.200000e+01 : f32
    %95 = vector.broadcast %cst_62 : f32 to vector<16x1xf32>
    %96 = arith.divf %94, %95 : vector<16x1xf32>
    %97 = vector.broadcast %96 : vector<16x1xf32> to vector<16x32xf32>
    %98 = arith.subf %82, %97 : vector<16x32xf32>
    %99 = arith.mulf %98, %98 : vector<16x32xf32>
    %cst_63 = arith.constant dense<0.000000e+00> : vector<16xf32>
    %100 = vector.multi_reduction <add>, %99, %cst_63 [1] : vector<16x32xf32> to vector<16xf32>
    %101 = vector.shape_cast %100 : vector<16xf32> to vector<16x1xf32>
    %cst_64 = arith.constant 3.200000e+01 : f32
    %102 = vector.broadcast %cst_64 : f32 to vector<16x1xf32>
    %103 = arith.divf %101, %102 : vector<16x1xf32>
    %cst_65 = arith.constant 9.99999974E-6 : f32
    %104 = vector.broadcast %cst_65 : f32 to vector<16x1xf32>
    %105 = arith.addf %103, %104 : vector<16x1xf32>
    %106 = math.rsqrt %105 : vector<16x1xf32>
    %107 = vector.broadcast %106 : vector<16x1xf32> to vector<16x32xf32>
    %108 = arith.mulf %98, %107 : vector<16x32xf32>
    %109 = vector.broadcast %90 : vector<1x32xf32> to vector<16x32xf32>
    %110 = arith.mulf %108, %109 : vector<16x32xf32>
    %111 = vector.broadcast %92 : vector<1x32xf32> to vector<16x32xf32>
    %112 = arith.addf %110, %111 : vector<16x32xf32>
    %c0_66 = arith.constant 0 : index
    %c0_67 = arith.constant 0 : index
    %c0_68 = arith.constant 0 : index
    %113 = vector.load %arg4[%c0_66, %c0_67, %c0_68] : memref<2x32x96xf32, #tpu.memory_space<vmem>>, vector<1x32x96xf32>
    %114 = vector.shape_cast %113 : vector<1x32x96xf32> to vector<32x96xf32>
    %cst_69 = arith.constant dense<0.000000e+00> : vector<16x96xf32>
    %115 = tpu.matmul %112, %114, %cst_69 {dimension_numbers = #tpu.dot_dimension_numbers<[1], [0], [0], [1], [0, 0, 1, 1], [], []>} : vector<16x32xf32>, vector<32x96xf32>, vector<16x96xf32> -> vector<16x96xf32>
    %116 = vector.extract_strided_slice %115 {offsets = [0, 0], sizes = [16, 32], strides = [1, 1]} : vector<16x96xf32> to vector<16x32xf32>
    %117 = vector.shape_cast %116 : vector<16x32xf32> to vector<2x8x32xf32>
    %118 = vector.extract_strided_slice %115 {offsets = [0, 32], sizes = [16, 32], strides = [1, 1]} : vector<16x96xf32> to vector<16x32xf32>
    %119 = vector.shape_cast %118 : vector<16x32xf32> to vector<2x8x32xf32>
    %120 = vector.extract_strided_slice %115 {offsets = [0, 64], sizes = [16, 32], strides = [1, 1]} : vector<16x96xf32> to vector<16x32xf32>
    %121 = vector.shape_cast %120 : vector<16x32xf32> to vector<2x8x32xf32>
    %122 = vector.extract_strided_slice %117 {offsets = [0, 0, 0], sizes = [2, 8, 8], strides = [1, 1, 1]} : vector<2x8x32xf32> to vector<2x8x8xf32>
    %123 = vector.extract_strided_slice %119 {offsets = [0, 0, 0], sizes = [2, 8, 8], strides = [1, 1, 1]} : vector<2x8x32xf32> to vector<2x8x8xf32>
    "tpu.trace_start"() <{level = 10 : i32, message = "bqd,bkd->bqk"}> : () -> ()
    %cst_70 = arith.constant dense<0.000000e+00> : vector<2x8x8xf32>
    %124 = tpu.matmul %122, %123, %cst_70 {dimension_numbers = #tpu.dot_dimension_numbers<[2], [2], [1], [1], [0, 0, 0, 1, 1, 1], [0], [0]>} : vector<2x8x8xf32>, vector<2x8x8xf32>, vector<2x8x8xf32> -> vector<2x8x8xf32>
    "tpu.trace_stop"() : () -> ()
    %125 = vector.shape_cast %88 : vector<8x8xf32> to vector<1x8x8xf32>
    %126 = vector.broadcast %125 : vector<1x8x8xf32> to vector<2x8x8xf32>
    %127 = arith.addf %124, %126 : vector<2x8x8xf32>
    %cst_71 = arith.constant dense<0xFF800000> : vector<2x8xf32>
    %128 = vector.multi_reduction <maximumf>, %127, %cst_71 [2] : vector<2x8x8xf32> to vector<2x8xf32>
    %129 = vector.shape_cast %128 : vector<2x8xf32> to vector<2x8x1xf32>
    %130 = vector.broadcast %129 : vector<2x8x1xf32> to vector<2x8x8xf32>
    %131 = arith.subf %127, %130 : vector<2x8x8xf32>
    %132 = math.exp %131 : vector<2x8x8xf32>
    %cst_72 = arith.constant dense<0.000000e+00> : vector<2x8xf32>
    %133 = vector.multi_reduction <add>, %132, %cst_72 [2] : vector<2x8x8xf32> to vector<2x8xf32>
    %134 = vector.shape_cast %133 : vector<2x8xf32> to vector<2x8x1xf32>
    %135 = tpu.reciprocal %134 {approx = true} : vector<2x8x1xf32> -> vector<2x8x1xf32>
    %136 = vector.broadcast %135 : vector<2x8x1xf32> to vector<2x8x8xf32>
    %137 = arith.mulf %132, %136 : vector<2x8x8xf32>
    %138 = vector.extract_strided_slice %121 {offsets = [0, 0, 0], sizes = [2, 8, 8], strides = [1, 1, 1]} : vector<2x8x32xf32> to vector<2x8x8xf32>
    "tpu.trace_start"() <{level = 10 : i32, message = "bqk,bkd->bqd"}> : () -> ()
    %cst_73 = arith.constant dense<0.000000e+00> : vector<2x8x8xf32>
    %139 = tpu.matmul %137, %138, %cst_73 {dimension_numbers = #tpu.dot_dimension_numbers<[2], [1], [1], [2], [0, 0, 0, 1, 1, 2], [0], [0]>} : vector<2x8x8xf32>, vector<2x8x8xf32>, vector<2x8x8xf32> -> vector<2x8x8xf32>
    "tpu.trace_stop"() : () -> ()
    %140 = vector.extract_strided_slice %117 {offsets = [0, 0, 8], sizes = [2, 8, 8], strides = [1, 1, 1]} : vector<2x8x32xf32> to vector<2x8x8xf32>
    %141 = vector.extract_strided_slice %119 {offsets = [0, 0, 8], sizes = [2, 8, 8], strides = [1, 1, 1]} : vector<2x8x32xf32> to vector<2x8x8xf32>
    "tpu.trace_start"() <{level = 10 : i32, message = "bqd,bkd->bqk"}> : () -> ()
    %cst_74 = arith.constant dense<0.000000e+00> : vector<2x8x8xf32>
    %142 = tpu.matmul %140, %141, %cst_74 {dimension_numbers = #tpu.dot_dimension_numbers<[2], [2], [1], [1], [0, 0, 0, 1, 1, 1], [0], [0]>} : vector<2x8x8xf32>, vector<2x8x8xf32>, vector<2x8x8xf32> -> vector<2x8x8xf32>
    "tpu.trace_stop"() : () -> ()
    %143 = vector.shape_cast %88 : vector<8x8xf32> to vector<1x8x8xf32>
    %144 = vector.broadcast %143 : vector<1x8x8xf32> to vector<2x8x8xf32>
    %145 = arith.addf %142, %144 : vector<2x8x8xf32>
    %cst_75 = arith.constant dense<0xFF800000> : vector<2x8xf32>
    %146 = vector.multi_reduction <maximumf>, %145, %cst_75 [2] : vector<2x8x8xf32> to vector<2x8xf32>
    %147 = vector.shape_cast %146 : vector<2x8xf32> to vector<2x8x1xf32>
    %148 = vector.broadcast %147 : vector<2x8x1xf32> to vector<2x8x8xf32>
    %149 = arith.subf %145, %148 : vector<2x8x8xf32>
    %150 = math.exp %149 : vector<2x8x8xf32>
    %cst_76 = arith.constant dense<0.000000e+00> : vector<2x8xf32>
    %151 = vector.multi_reduction <add>, %150, %cst_76 [2] : vector<2x8x8xf32> to vector<2x8xf32>
    %152 = vector.shape_cast %151 : vector<2x8xf32> to vector<2x8x1xf32>
    %153 = tpu.reciprocal %152 {approx = true} : vector<2x8x1xf32> -> vector<2x8x1xf32>
    %154 = vector.broadcast %153 : vector<2x8x1xf32> to vector<2x8x8xf32>
    %155 = arith.mulf %150, %154 : vector<2x8x8xf32>
    %156 = vector.extract_strided_slice %121 {offsets = [0, 0, 8], sizes = [2, 8, 8], strides = [1, 1, 1]} : vector<2x8x32xf32> to vector<2x8x8xf32>
    "tpu.trace_start"() <{level = 10 : i32, message = "bqk,bkd->bqd"}> : () -> ()
    %cst_77 = arith.constant dense<0.000000e+00> : vector<2x8x8xf32>
    %157 = tpu.matmul %155, %156, %cst_77 {dimension_numbers = #tpu.dot_dimension_numbers<[2], [1], [1], [2], [0, 0, 0, 1, 1, 2], [0], [0]>} : vector<2x8x8xf32>, vector<2x8x8xf32>, vector<2x8x8xf32> -> vector<2x8x8xf32>
    "tpu.trace_stop"() : () -> ()
    %158 = vector.extract_strided_slice %117 {offsets = [0, 0, 16], sizes = [2, 8, 8], strides = [1, 1, 1]} : vector<2x8x32xf32> to vector<2x8x8xf32>
    %159 = vector.extract_strided_slice %119 {offsets = [0, 0, 16], sizes = [2, 8, 8], strides = [1, 1, 1]} : vector<2x8x32xf32> to vector<2x8x8xf32>
    "tpu.trace_start"() <{level = 10 : i32, message = "bqd,bkd->bqk"}> : () -> ()
    %cst_78 = arith.constant dense<0.000000e+00> : vector<2x8x8xf32>
    %160 = tpu.matmul %158, %159, %cst_78 {dimension_numbers = #tpu.dot_dimension_numbers<[2], [2], [1], [1], [0, 0, 0, 1, 1, 1], [0], [0]>} : vector<2x8x8xf32>, vector<2x8x8xf32>, vector<2x8x8xf32> -> vector<2x8x8xf32>
    "tpu.trace_stop"() : () -> ()
    %161 = vector.shape_cast %88 : vector<8x8xf32> to vector<1x8x8xf32>
    %162 = vector.broadcast %161 : vector<1x8x8xf32> to vector<2x8x8xf32>
    %163 = arith.addf %160, %162 : vector<2x8x8xf32>
    %cst_79 = arith.constant dense<0xFF800000> : vector<2x8xf32>
    %164 = vector.multi_reduction <maximumf>, %163, %cst_79 [2] : vector<2x8x8xf32> to vector<2x8xf32>
    %165 = vector.shape_cast %164 : vector<2x8xf32> to vector<2x8x1xf32>
    %166 = vector.broadcast %165 : vector<2x8x1xf32> to vector<2x8x8xf32>
    %167 = arith.subf %163, %166 : vector<2x8x8xf32>
    %168 = math.exp %167 : vector<2x8x8xf32>
    %cst_80 = arith.constant dense<0.000000e+00> : vector<2x8xf32>
    %169 = vector.multi_reduction <add>, %168, %cst_80 [2] : vector<2x8x8xf32> to vector<2x8xf32>
    %170 = vector.shape_cast %169 : vector<2x8xf32> to vector<2x8x1xf32>
    %171 = tpu.reciprocal %170 {approx = true} : vector<2x8x1xf32> -> vector<2x8x1xf32>
    %172 = vector.broadcast %171 : vector<2x8x1xf32> to vector<2x8x8xf32>
    %173 = arith.mulf %168, %172 : vector<2x8x8xf32>
    %174 = vector.extract_strided_slice %121 {offsets = [0, 0, 16], sizes = [2, 8, 8], strides = [1, 1, 1]} : vector<2x8x32xf32> to vector<2x8x8xf32>
    "tpu.trace_start"() <{level = 10 : i32, message = "bqk,bkd->bqd"}> : () -> ()
    %cst_81 = arith.constant dense<0.000000e+00> : vector<2x8x8xf32>
    %175 = tpu.matmul %173, %174, %cst_81 {dimension_numbers = #tpu.dot_dimension_numbers<[2], [1], [1], [2], [0, 0, 0, 1, 1, 2], [0], [0]>} : vector<2x8x8xf32>, vector<2x8x8xf32>, vector<2x8x8xf32> -> vector<2x8x8xf32>
    "tpu.trace_stop"() : () -> ()
    %176 = vector.extract_strided_slice %117 {offsets = [0, 0, 24], sizes = [2, 8, 8], strides = [1, 1, 1]} : vector<2x8x32xf32> to vector<2x8x8xf32>
    %177 = vector.extract_strided_slice %119 {offsets = [0, 0, 24], sizes = [2, 8, 8], strides = [1, 1, 1]} : vector<2x8x32xf32> to vector<2x8x8xf32>
    "tpu.trace_start"() <{level = 10 : i32, message = "bqd,bkd->bqk"}> : () -> ()
    %cst_82 = arith.constant dense<0.000000e+00> : vector<2x8x8xf32>
    %178 = tpu.matmul %176, %177, %cst_82 {dimension_numbers = #tpu.dot_dimension_numbers<[2], [2], [1], [1], [0, 0, 0, 1, 1, 1], [0], [0]>} : vector<2x8x8xf32>, vector<2x8x8xf32>, vector<2x8x8xf32> -> vector<2x8x8xf32>
    "tpu.trace_stop"() : () -> ()
    %179 = vector.shape_cast %88 : vector<8x8xf32> to vector<1x8x8xf32>
    %180 = vector.broadcast %179 : vector<1x8x8xf32> to vector<2x8x8xf32>
    %181 = arith.addf %178, %180 : vector<2x8x8xf32>
    %cst_83 = arith.constant dense<0xFF800000> : vector<2x8xf32>
    %182 = vector.multi_reduction <maximumf>, %181, %cst_83 [2] : vector<2x8x8xf32> to vector<2x8xf32>
    %183 = vector.shape_cast %182 : vector<2x8xf32> to vector<2x8x1xf32>
    %184 = vector.broadcast %183 : vector<2x8x1xf32> to vector<2x8x8xf32>
    %185 = arith.subf %181, %184 : vector<2x8x8xf32>
    %186 = math.exp %185 : vector<2x8x8xf32>
    %cst_84 = arith.constant dense<0.000000e+00> : vector<2x8xf32>
    %187 = vector.multi_reduction <add>, %186, %cst_84 [2] : vector<2x8x8xf32> to vector<2x8xf32>
    %188 = vector.shape_cast %187 : vector<2x8xf32> to vector<2x8x1xf32>
    %189 = tpu.reciprocal %188 {approx = true} : vector<2x8x1xf32> -> vector<2x8x1xf32>
    %190 = vector.broadcast %189 : vector<2x8x1xf32> to vector<2x8x8xf32>
    %191 = arith.mulf %186, %190 : vector<2x8x8xf32>
    %192 = vector.extract_strided_slice %121 {offsets = [0, 0, 24], sizes = [2, 8, 8], strides = [1, 1, 1]} : vector<2x8x32xf32> to vector<2x8x8xf32>
    "tpu.trace_start"() <{level = 10 : i32, message = "bqk,bkd->bqd"}> : () -> ()
    %cst_85 = arith.constant dense<0.000000e+00> : vector<2x8x8xf32>
    %193 = tpu.matmul %191, %192, %cst_85 {dimension_numbers = #tpu.dot_dimension_numbers<[2], [1], [1], [2], [0, 0, 0, 1, 1, 2], [0], [0]>} : vector<2x8x8xf32>, vector<2x8x8xf32>, vector<2x8x8xf32> -> vector<2x8x8xf32>
    "tpu.trace_stop"() : () -> ()
    %194 = tpu.concatenate %139, %157, %175, %193 in 2 : vector<2x8x8xf32>, vector<2x8x8xf32>, vector<2x8x8xf32>, vector<2x8x8xf32> -> vector<2x8x32xf32>
    %195 = vector.shape_cast %194 : vector<2x8x32xf32> to vector<16x32xf32>
    %c0_86 = arith.constant 0 : index
    %c0_87 = arith.constant 0 : index
    %c0_88 = arith.constant 0 : index
    %196 = vector.load %arg5[%c0_86, %c0_87, %c0_88] : memref<2x32x32xf32, #tpu.memory_space<vmem>>, vector<1x32x32xf32>
    %197 = vector.shape_cast %196 : vector<1x32x32xf32> to vector<32x32xf32>
    %cst_89 = arith.constant dense<0.000000e+00> : vector<16x32xf32>
    %198 = tpu.matmul %195, %197, %cst_89 {dimension_numbers = #tpu.dot_dimension_numbers<[1], [0], [0], [1], [0, 0, 1, 1], [], []>} : vector<16x32xf32>, vector<32x32xf32>, vector<16x32xf32> -> vector<16x32xf32>
    %199 = arith.addf %82, %198 : vector<16x32xf32>
    %c0_90 = arith.constant 0 : index
    %c0_91 = arith.constant 0 : index
    %c0_92 = arith.constant 0 : index
    %200 = vector.load %arg6[%c0_90, %c0_91, %c0_92] : memref<2x1x32xf32, #tpu.memory_space<vmem>>, vector<1x1x32xf32>
    %201 = vector.shape_cast %200 : vector<1x1x32xf32> to vector<1x32xf32>
    %202 = vector.broadcast %201 : vector<1x32xf32> to vector<16x32xf32>
    %203 = arith.addf %199, %202 : vector<16x32xf32>
    %c0_93 = arith.constant 0 : index
    %c0_94 = arith.constant 0 : index
    %c0_95 = arith.constant 0 : index
    %204 = vector.load %arg9[%c0_93, %c0_94, %c0_95] : memref<2x1x32xf32, #tpu.memory_space<vmem>>, vector<1x1x32xf32>
    %205 = vector.shape_cast %204 : vector<1x1x32xf32> to vector<1x32xf32>
    %c0_96 = arith.constant 0 : index
    %c0_97 = arith.constant 0 : index
    %c0_98 = arith.constant 0 : index
    %206 = vector.load %arg10[%c0_96, %c0_97, %c0_98] : memref<2x1x32xf32, #tpu.memory_space<vmem>>, vector<1x1x32xf32>
    %207 = vector.shape_cast %206 : vector<1x1x32xf32> to vector<1x32xf32>
    %cst_99 = arith.constant dense<0.000000e+00> : vector<16xf32>
    %208 = vector.multi_reduction <add>, %203, %cst_99 [1] : vector<16x32xf32> to vector<16xf32>
    %209 = vector.shape_cast %208 : vector<16xf32> to vector<16x1xf32>
    %cst_100 = arith.constant 3.200000e+01 : f32
    %210 = vector.broadcast %cst_100 : f32 to vector<16x1xf32>
    %211 = arith.divf %209, %210 : vector<16x1xf32>
    %212 = vector.broadcast %211 : vector<16x1xf32> to vector<16x32xf32>
    %213 = arith.subf %203, %212 : vector<16x32xf32>
    %214 = arith.mulf %213, %213 : vector<16x32xf32>
    %cst_101 = arith.constant dense<0.000000e+00> : vector<16xf32>
    %215 = vector.multi_reduction <add>, %214, %cst_101 [1] : vector<16x32xf32> to vector<16xf32>
    %216 = vector.shape_cast %215 : vector<16xf32> to vector<16x1xf32>
    %cst_102 = arith.constant 3.200000e+01 : f32
    %217 = vector.broadcast %cst_102 : f32 to vector<16x1xf32>
    %218 = arith.divf %216, %217 : vector<16x1xf32>
    %cst_103 = arith.constant 9.99999974E-6 : f32
    %219 = vector.broadcast %cst_103 : f32 to vector<16x1xf32>
    %220 = arith.addf %218, %219 : vector<16x1xf32>
    %221 = math.rsqrt %220 : vector<16x1xf32>
    %222 = vector.broadcast %221 : vector<16x1xf32> to vector<16x32xf32>
    %223 = arith.mulf %213, %222 : vector<16x32xf32>
    %224 = vector.broadcast %205 : vector<1x32xf32> to vector<16x32xf32>
    %225 = arith.mulf %223, %224 : vector<16x32xf32>
    %226 = vector.broadcast %207 : vector<1x32xf32> to vector<16x32xf32>
    %227 = arith.addf %225, %226 : vector<16x32xf32>
    %c0_104 = arith.constant 0 : index
    %c0_105 = arith.constant 0 : index
    %c0_106 = arith.constant 0 : index
    %228 = vector.load %arg11[%c0_104, %c0_105, %c0_106] : memref<2x32x128xf32, #tpu.memory_space<vmem>>, vector<1x32x128xf32>
    %229 = vector.shape_cast %228 : vector<1x32x128xf32> to vector<32x128xf32>
    %cst_107 = arith.constant dense<0.000000e+00> : vector<16x128xf32>
    %230 = tpu.matmul %227, %229, %cst_107 {dimension_numbers = #tpu.dot_dimension_numbers<[1], [0], [0], [1], [0, 0, 1, 1], [], []>} : vector<16x32xf32>, vector<32x128xf32>, vector<16x128xf32> -> vector<16x128xf32>
    %c0_108 = arith.constant 0 : index
    %c0_109 = arith.constant 0 : index
    %c0_110 = arith.constant 0 : index
    %231 = vector.load %arg12[%c0_108, %c0_109, %c0_110] : memref<2x1x128xf32, #tpu.memory_space<vmem>>, vector<1x1x128xf32>
    %232 = vector.shape_cast %231 : vector<1x1x128xf32> to vector<1x128xf32>
    %233 = vector.broadcast %232 : vector<1x128xf32> to vector<16x128xf32>
    %234 = arith.addf %230, %233 : vector<16x128xf32>
    %235 = arith.mulf %234, %234 : vector<16x128xf32>
    %236 = arith.mulf %234, %235 : vector<16x128xf32>
    %cst_111 = arith.constant 4.471500e-02 : f32
    %237 = vector.broadcast %cst_111 : f32 to vector<16x128xf32>
    %238 = arith.mulf %237, %236 : vector<16x128xf32>
    %239 = arith.addf %234, %238 : vector<16x128xf32>
    %cst_112 = arith.constant 0.797884583 : f32
    %240 = vector.broadcast %cst_112 : f32 to vector<16x128xf32>
    %241 = arith.mulf %240, %239 : vector<16x128xf32>
    %242 = math.tanh %241 : vector<16x128xf32>
    %cst_113 = arith.constant 1.000000e+00 : f32
    %243 = vector.broadcast %cst_113 : f32 to vector<16x128xf32>
    %244 = arith.addf %243, %242 : vector<16x128xf32>
    %cst_114 = arith.constant 5.000000e-01 : f32
    %245 = vector.broadcast %cst_114 : f32 to vector<16x128xf32>
    %246 = arith.mulf %245, %244 : vector<16x128xf32>
    %247 = arith.mulf %234, %246 : vector<16x128xf32>
    %c0_115 = arith.constant 0 : index
    %c0_116 = arith.constant 0 : index
    %c0_117 = arith.constant 0 : index
    %248 = vector.load %arg13[%c0_115, %c0_116, %c0_117] : memref<2x128x32xf32, #tpu.memory_space<vmem>>, vector<1x128x32xf32>
    %249 = vector.shape_cast %248 : vector<1x128x32xf32> to vector<128x32xf32>
    %cst_118 = arith.constant dense<0.000000e+00> : vector<16x32xf32>
    %250 = tpu.matmul %247, %249, %cst_118 {dimension_numbers = #tpu.dot_dimension_numbers<[1], [0], [0], [1], [0, 0, 1, 1], [], []>} : vector<16x128xf32>, vector<128x32xf32>, vector<16x32xf32> -> vector<16x32xf32>
    %c0_119 = arith.constant 0 : index
    %c0_120 = arith.constant 0 : index
    %c0_121 = arith.constant 0 : index
    %251 = vector.load %arg14[%c0_119, %c0_120, %c0_121] : memref<2x1x32xf32, #tpu.memory_space<vmem>>, vector<1x1x32xf32>
    %252 = vector.shape_cast %251 : vector<1x1x32xf32> to vector<1x32xf32>
    %253 = vector.broadcast %252 : vector<1x32xf32> to vector<16x32xf32>
    %254 = arith.addf %250, %253 : vector<16x32xf32>
    %255 = arith.addf %203, %254 : vector<16x32xf32>
    %c1_122 = arith.constant 1 : index
    %c0_123 = arith.constant 0 : index
    %c0_124 = arith.constant 0 : index
    %256 = vector.load %arg7[%c1_122, %c0_123, %c0_124] : memref<2x1x32xf32, #tpu.memory_space<vmem>>, vector<1x1x32xf32>
    %257 = vector.shape_cast %256 : vector<1x1x32xf32> to vector<1x32xf32>
    %c1_125 = arith.constant 1 : index
    %c0_126 = arith.constant 0 : index
    %c0_127 = arith.constant 0 : index
    %258 = vector.load %arg8[%c1_125, %c0_126, %c0_127] : memref<2x1x32xf32, #tpu.memory_space<vmem>>, vector<1x1x32xf32>
    %259 = vector.shape_cast %258 : vector<1x1x32xf32> to vector<1x32xf32>
    %cst_128 = arith.constant dense<0.000000e+00> : vector<16xf32>
    %260 = vector.multi_reduction <add>, %255, %cst_128 [1] : vector<16x32xf32> to vector<16xf32>
    %261 = vector.shape_cast %260 : vector<16xf32> to vector<16x1xf32>
    %cst_129 = arith.constant 3.200000e+01 : f32
    %262 = vector.broadcast %cst_129 : f32 to vector<16x1xf32>
    %263 = arith.divf %261, %262 : vector<16x1xf32>
    %264 = vector.broadcast %263 : vector<16x1xf32> to vector<16x32xf32>
    %265 = arith.subf %255, %264 : vector<16x32xf32>
    %266 = arith.mulf %265, %265 : vector<16x32xf32>
    %cst_130 = arith.constant dense<0.000000e+00> : vector<16xf32>
    %267 = vector.multi_reduction <add>, %266, %cst_130 [1] : vector<16x32xf32> to vector<16xf32>
    %268 = vector.shape_cast %267 : vector<16xf32> to vector<16x1xf32>
    %cst_131 = arith.constant 3.200000e+01 : f32
    %269 = vector.broadcast %cst_131 : f32 to vector<16x1xf32>
    %270 = arith.divf %268, %269 : vector<16x1xf32>
    %cst_132 = arith.constant 9.99999974E-6 : f32
    %271 = vector.broadcast %cst_132 : f32 to vector<16x1xf32>
    %272 = arith.addf %270, %271 : vector<16x1xf32>
    %273 = math.rsqrt %272 : vector<16x1xf32>
    %274 = vector.broadcast %273 : vector<16x1xf32> to vector<16x32xf32>
    %275 = arith.mulf %265, %274 : vector<16x32xf32>
    %276 = vector.broadcast %257 : vector<1x32xf32> to vector<16x32xf32>
    %277 = arith.mulf %275, %276 : vector<16x32xf32>
    %278 = vector.broadcast %259 : vector<1x32xf32> to vector<16x32xf32>
    %279 = arith.addf %277, %278 : vector<16x32xf32>
    %c1_133 = arith.constant 1 : index
    %c0_134 = arith.constant 0 : index
    %c0_135 = arith.constant 0 : index
    %280 = vector.load %arg4[%c1_133, %c0_134, %c0_135] : memref<2x32x96xf32, #tpu.memory_space<vmem>>, vector<1x32x96xf32>
    %281 = vector.shape_cast %280 : vector<1x32x96xf32> to vector<32x96xf32>
    %cst_136 = arith.constant dense<0.000000e+00> : vector<16x96xf32>
    %282 = tpu.matmul %279, %281, %cst_136 {dimension_numbers = #tpu.dot_dimension_numbers<[1], [0], [0], [1], [0, 0, 1, 1], [], []>} : vector<16x32xf32>, vector<32x96xf32>, vector<16x96xf32> -> vector<16x96xf32>
    %283 = vector.extract_strided_slice %282 {offsets = [0, 0], sizes = [16, 32], strides = [1, 1]} : vector<16x96xf32> to vector<16x32xf32>
    %284 = vector.shape_cast %283 : vector<16x32xf32> to vector<2x8x32xf32>
    %285 = vector.extract_strided_slice %282 {offsets = [0, 32], sizes = [16, 32], strides = [1, 1]} : vector<16x96xf32> to vector<16x32xf32>
    %286 = vector.shape_cast %285 : vector<16x32xf32> to vector<2x8x32xf32>
    %287 = vector.extract_strided_slice %282 {offsets = [0, 64], sizes = [16, 32], strides = [1, 1]} : vector<16x96xf32> to vector<16x32xf32>
    %288 = vector.shape_cast %287 : vector<16x32xf32> to vector<2x8x32xf32>
    %289 = vector.extract_strided_slice %284 {offsets = [0, 0, 0], sizes = [2, 8, 8], strides = [1, 1, 1]} : vector<2x8x32xf32> to vector<2x8x8xf32>
    %290 = vector.extract_strided_slice %286 {offsets = [0, 0, 0], sizes = [2, 8, 8], strides = [1, 1, 1]} : vector<2x8x32xf32> to vector<2x8x8xf32>
    "tpu.trace_start"() <{level = 10 : i32, message = "bqd,bkd->bqk"}> : () -> ()
    %cst_137 = arith.constant dense<0.000000e+00> : vector<2x8x8xf32>
    %291 = tpu.matmul %289, %290, %cst_137 {dimension_numbers = #tpu.dot_dimension_numbers<[2], [2], [1], [1], [0, 0, 0, 1, 1, 1], [0], [0]>} : vector<2x8x8xf32>, vector<2x8x8xf32>, vector<2x8x8xf32> -> vector<2x8x8xf32>
    "tpu.trace_stop"() : () -> ()
    %292 = vector.shape_cast %88 : vector<8x8xf32> to vector<1x8x8xf32>
    %293 = vector.broadcast %292 : vector<1x8x8xf32> to vector<2x8x8xf32>
    %294 = arith.addf %291, %293 : vector<2x8x8xf32>
    %cst_138 = arith.constant dense<0xFF800000> : vector<2x8xf32>
    %295 = vector.multi_reduction <maximumf>, %294, %cst_138 [2] : vector<2x8x8xf32> to vector<2x8xf32>
    %296 = vector.shape_cast %295 : vector<2x8xf32> to vector<2x8x1xf32>
    %297 = vector.broadcast %296 : vector<2x8x1xf32> to vector<2x8x8xf32>
    %298 = arith.subf %294, %297 : vector<2x8x8xf32>
    %299 = math.exp %298 : vector<2x8x8xf32>
    %cst_139 = arith.constant dense<0.000000e+00> : vector<2x8xf32>
    %300 = vector.multi_reduction <add>, %299, %cst_139 [2] : vector<2x8x8xf32> to vector<2x8xf32>
    %301 = vector.shape_cast %300 : vector<2x8xf32> to vector<2x8x1xf32>
    %302 = tpu.reciprocal %301 {approx = true} : vector<2x8x1xf32> -> vector<2x8x1xf32>
    %303 = vector.broadcast %302 : vector<2x8x1xf32> to vector<2x8x8xf32>
    %304 = arith.mulf %299, %303 : vector<2x8x8xf32>
    %305 = vector.extract_strided_slice %288 {offsets = [0, 0, 0], sizes = [2, 8, 8], strides = [1, 1, 1]} : vector<2x8x32xf32> to vector<2x8x8xf32>
    "tpu.trace_start"() <{level = 10 : i32, message = "bqk,bkd->bqd"}> : () -> ()
    %cst_140 = arith.constant dense<0.000000e+00> : vector<2x8x8xf32>
    %306 = tpu.matmul %304, %305, %cst_140 {dimension_numbers = #tpu.dot_dimension_numbers<[2], [1], [1], [2], [0, 0, 0, 1, 1, 2], [0], [0]>} : vector<2x8x8xf32>, vector<2x8x8xf32>, vector<2x8x8xf32> -> vector<2x8x8xf32>
    "tpu.trace_stop"() : () -> ()
    %307 = vector.extract_strided_slice %284 {offsets = [0, 0, 8], sizes = [2, 8, 8], strides = [1, 1, 1]} : vector<2x8x32xf32> to vector<2x8x8xf32>
    %308 = vector.extract_strided_slice %286 {offsets = [0, 0, 8], sizes = [2, 8, 8], strides = [1, 1, 1]} : vector<2x8x32xf32> to vector<2x8x8xf32>
    "tpu.trace_start"() <{level = 10 : i32, message = "bqd,bkd->bqk"}> : () -> ()
    %cst_141 = arith.constant dense<0.000000e+00> : vector<2x8x8xf32>
    %309 = tpu.matmul %307, %308, %cst_141 {dimension_numbers = #tpu.dot_dimension_numbers<[2], [2], [1], [1], [0, 0, 0, 1, 1, 1], [0], [0]>} : vector<2x8x8xf32>, vector<2x8x8xf32>, vector<2x8x8xf32> -> vector<2x8x8xf32>
    "tpu.trace_stop"() : () -> ()
    %310 = vector.shape_cast %88 : vector<8x8xf32> to vector<1x8x8xf32>
    %311 = vector.broadcast %310 : vector<1x8x8xf32> to vector<2x8x8xf32>
    %312 = arith.addf %309, %311 : vector<2x8x8xf32>
    %cst_142 = arith.constant dense<0xFF800000> : vector<2x8xf32>
    %313 = vector.multi_reduction <maximumf>, %312, %cst_142 [2] : vector<2x8x8xf32> to vector<2x8xf32>
    %314 = vector.shape_cast %313 : vector<2x8xf32> to vector<2x8x1xf32>
    %315 = vector.broadcast %314 : vector<2x8x1xf32> to vector<2x8x8xf32>
    %316 = arith.subf %312, %315 : vector<2x8x8xf32>
    %317 = math.exp %316 : vector<2x8x8xf32>
    %cst_143 = arith.constant dense<0.000000e+00> : vector<2x8xf32>
    %318 = vector.multi_reduction <add>, %317, %cst_143 [2] : vector<2x8x8xf32> to vector<2x8xf32>
    %319 = vector.shape_cast %318 : vector<2x8xf32> to vector<2x8x1xf32>
    %320 = tpu.reciprocal %319 {approx = true} : vector<2x8x1xf32> -> vector<2x8x1xf32>
    %321 = vector.broadcast %320 : vector<2x8x1xf32> to vector<2x8x8xf32>
    %322 = arith.mulf %317, %321 : vector<2x8x8xf32>
    %323 = vector.extract_strided_slice %288 {offsets = [0, 0, 8], sizes = [2, 8, 8], strides = [1, 1, 1]} : vector<2x8x32xf32> to vector<2x8x8xf32>
    "tpu.trace_start"() <{level = 10 : i32, message = "bqk,bkd->bqd"}> : () -> ()
    %cst_144 = arith.constant dense<0.000000e+00> : vector<2x8x8xf32>
    %324 = tpu.matmul %322, %323, %cst_144 {dimension_numbers = #tpu.dot_dimension_numbers<[2], [1], [1], [2], [0, 0, 0, 1, 1, 2], [0], [0]>} : vector<2x8x8xf32>, vector<2x8x8xf32>, vector<2x8x8xf32> -> vector<2x8x8xf32>
    "tpu.trace_stop"() : () -> ()
    %325 = vector.extract_strided_slice %284 {offsets = [0, 0, 16], sizes = [2, 8, 8], strides = [1, 1, 1]} : vector<2x8x32xf32> to vector<2x8x8xf32>
    %326 = vector.extract_strided_slice %286 {offsets = [0, 0, 16], sizes = [2, 8, 8], strides = [1, 1, 1]} : vector<2x8x32xf32> to vector<2x8x8xf32>
    "tpu.trace_start"() <{level = 10 : i32, message = "bqd,bkd->bqk"}> : () -> ()
    %cst_145 = arith.constant dense<0.000000e+00> : vector<2x8x8xf32>
    %327 = tpu.matmul %325, %326, %cst_145 {dimension_numbers = #tpu.dot_dimension_numbers<[2], [2], [1], [1], [0, 0, 0, 1, 1, 1], [0], [0]>} : vector<2x8x8xf32>, vector<2x8x8xf32>, vector<2x8x8xf32> -> vector<2x8x8xf32>
    "tpu.trace_stop"() : () -> ()
    %328 = vector.shape_cast %88 : vector<8x8xf32> to vector<1x8x8xf32>
    %329 = vector.broadcast %328 : vector<1x8x8xf32> to vector<2x8x8xf32>
    %330 = arith.addf %327, %329 : vector<2x8x8xf32>
    %cst_146 = arith.constant dense<0xFF800000> : vector<2x8xf32>
    %331 = vector.multi_reduction <maximumf>, %330, %cst_146 [2] : vector<2x8x8xf32> to vector<2x8xf32>
    %332 = vector.shape_cast %331 : vector<2x8xf32> to vector<2x8x1xf32>
    %333 = vector.broadcast %332 : vector<2x8x1xf32> to vector<2x8x8xf32>
    %334 = arith.subf %330, %333 : vector<2x8x8xf32>
    %335 = math.exp %334 : vector<2x8x8xf32>
    %cst_147 = arith.constant dense<0.000000e+00> : vector<2x8xf32>
    %336 = vector.multi_reduction <add>, %335, %cst_147 [2] : vector<2x8x8xf32> to vector<2x8xf32>
    %337 = vector.shape_cast %336 : vector<2x8xf32> to vector<2x8x1xf32>
    %338 = tpu.reciprocal %337 {approx = true} : vector<2x8x1xf32> -> vector<2x8x1xf32>
    %339 = vector.broadcast %338 : vector<2x8x1xf32> to vector<2x8x8xf32>
    %340 = arith.mulf %335, %339 : vector<2x8x8xf32>
    %341 = vector.extract_strided_slice %288 {offsets = [0, 0, 16], sizes = [2, 8, 8], strides = [1, 1, 1]} : vector<2x8x32xf32> to vector<2x8x8xf32>
    "tpu.trace_start"() <{level = 10 : i32, message = "bqk,bkd->bqd"}> : () -> ()
    %cst_148 = arith.constant dense<0.000000e+00> : vector<2x8x8xf32>
    %342 = tpu.matmul %340, %341, %cst_148 {dimension_numbers = #tpu.dot_dimension_numbers<[2], [1], [1], [2], [0, 0, 0, 1, 1, 2], [0], [0]>} : vector<2x8x8xf32>, vector<2x8x8xf32>, vector<2x8x8xf32> -> vector<2x8x8xf32>
    "tpu.trace_stop"() : () -> ()
    %343 = vector.extract_strided_slice %284 {offsets = [0, 0, 24], sizes = [2, 8, 8], strides = [1, 1, 1]} : vector<2x8x32xf32> to vector<2x8x8xf32>
    %344 = vector.extract_strided_slice %286 {offsets = [0, 0, 24], sizes = [2, 8, 8], strides = [1, 1, 1]} : vector<2x8x32xf32> to vector<2x8x8xf32>
    "tpu.trace_start"() <{level = 10 : i32, message = "bqd,bkd->bqk"}> : () -> ()
    %cst_149 = arith.constant dense<0.000000e+00> : vector<2x8x8xf32>
    %345 = tpu.matmul %343, %344, %cst_149 {dimension_numbers = #tpu.dot_dimension_numbers<[2], [2], [1], [1], [0, 0, 0, 1, 1, 1], [0], [0]>} : vector<2x8x8xf32>, vector<2x8x8xf32>, vector<2x8x8xf32> -> vector<2x8x8xf32>
    "tpu.trace_stop"() : () -> ()
    %346 = vector.shape_cast %88 : vector<8x8xf32> to vector<1x8x8xf32>
    %347 = vector.broadcast %346 : vector<1x8x8xf32> to vector<2x8x8xf32>
    %348 = arith.addf %345, %347 : vector<2x8x8xf32>
    %cst_150 = arith.constant dense<0xFF800000> : vector<2x8xf32>
    %349 = vector.multi_reduction <maximumf>, %348, %cst_150 [2] : vector<2x8x8xf32> to vector<2x8xf32>
    %350 = vector.shape_cast %349 : vector<2x8xf32> to vector<2x8x1xf32>
    %351 = vector.broadcast %350 : vector<2x8x1xf32> to vector<2x8x8xf32>
    %352 = arith.subf %348, %351 : vector<2x8x8xf32>
    %353 = math.exp %352 : vector<2x8x8xf32>
    %cst_151 = arith.constant dense<0.000000e+00> : vector<2x8xf32>
    %354 = vector.multi_reduction <add>, %353, %cst_151 [2] : vector<2x8x8xf32> to vector<2x8xf32>
    %355 = vector.shape_cast %354 : vector<2x8xf32> to vector<2x8x1xf32>
    %356 = tpu.reciprocal %355 {approx = true} : vector<2x8x1xf32> -> vector<2x8x1xf32>
    %357 = vector.broadcast %356 : vector<2x8x1xf32> to vector<2x8x8xf32>
    %358 = arith.mulf %353, %357 : vector<2x8x8xf32>
    %359 = vector.extract_strided_slice %288 {offsets = [0, 0, 24], sizes = [2, 8, 8], strides = [1, 1, 1]} : vector<2x8x32xf32> to vector<2x8x8xf32>
    "tpu.trace_start"() <{level = 10 : i32, message = "bqk,bkd->bqd"}> : () -> ()
    %cst_152 = arith.constant dense<0.000000e+00> : vector<2x8x8xf32>
    %360 = tpu.matmul %358, %359, %cst_152 {dimension_numbers = #tpu.dot_dimension_numbers<[2], [1], [1], [2], [0, 0, 0, 1, 1, 2], [0], [0]>} : vector<2x8x8xf32>, vector<2x8x8xf32>, vector<2x8x8xf32> -> vector<2x8x8xf32>
    "tpu.trace_stop"() : () -> ()
    %361 = tpu.concatenate %306, %324, %342, %360 in 2 : vector<2x8x8xf32>, vector<2x8x8xf32>, vector<2x8x8xf32>, vector<2x8x8xf32> -> vector<2x8x32xf32>
    %362 = vector.shape_cast %361 : vector<2x8x32xf32> to vector<16x32xf32>
    %c1_153 = arith.constant 1 : index
    %c0_154 = arith.constant 0 : index
    %c0_155 = arith.constant 0 : index
    %363 = vector.load %arg5[%c1_153, %c0_154, %c0_155] : memref<2x32x32xf32, #tpu.memory_space<vmem>>, vector<1x32x32xf32>
    %364 = vector.shape_cast %363 : vector<1x32x32xf32> to vector<32x32xf32>
    %cst_156 = arith.constant dense<0.000000e+00> : vector<16x32xf32>
    %365 = tpu.matmul %362, %364, %cst_156 {dimension_numbers = #tpu.dot_dimension_numbers<[1], [0], [0], [1], [0, 0, 1, 1], [], []>} : vector<16x32xf32>, vector<32x32xf32>, vector<16x32xf32> -> vector<16x32xf32>
    %366 = arith.addf %255, %365 : vector<16x32xf32>
    %c1_157 = arith.constant 1 : index
    %c0_158 = arith.constant 0 : index
    %c0_159 = arith.constant 0 : index
    %367 = vector.load %arg6[%c1_157, %c0_158, %c0_159] : memref<2x1x32xf32, #tpu.memory_space<vmem>>, vector<1x1x32xf32>
    %368 = vector.shape_cast %367 : vector<1x1x32xf32> to vector<1x32xf32>
    %369 = vector.broadcast %368 : vector<1x32xf32> to vector<16x32xf32>
    %370 = arith.addf %366, %369 : vector<16x32xf32>
    %c1_160 = arith.constant 1 : index
    %c0_161 = arith.constant 0 : index
    %c0_162 = arith.constant 0 : index
    %371 = vector.load %arg9[%c1_160, %c0_161, %c0_162] : memref<2x1x32xf32, #tpu.memory_space<vmem>>, vector<1x1x32xf32>
    %372 = vector.shape_cast %371 : vector<1x1x32xf32> to vector<1x32xf32>
    %c1_163 = arith.constant 1 : index
    %c0_164 = arith.constant 0 : index
    %c0_165 = arith.constant 0 : index
    %373 = vector.load %arg10[%c1_163, %c0_164, %c0_165] : memref<2x1x32xf32, #tpu.memory_space<vmem>>, vector<1x1x32xf32>
    %374 = vector.shape_cast %373 : vector<1x1x32xf32> to vector<1x32xf32>
    %cst_166 = arith.constant dense<0.000000e+00> : vector<16xf32>
    %375 = vector.multi_reduction <add>, %370, %cst_166 [1] : vector<16x32xf32> to vector<16xf32>
    %376 = vector.shape_cast %375 : vector<16xf32> to vector<16x1xf32>
    %cst_167 = arith.constant 3.200000e+01 : f32
    %377 = vector.broadcast %cst_167 : f32 to vector<16x1xf32>
    %378 = arith.divf %376, %377 : vector<16x1xf32>
    %379 = vector.broadcast %378 : vector<16x1xf32> to vector<16x32xf32>
    %380 = arith.subf %370, %379 : vector<16x32xf32>
    %381 = arith.mulf %380, %380 : vector<16x32xf32>
    %cst_168 = arith.constant dense<0.000000e+00> : vector<16xf32>
    %382 = vector.multi_reduction <add>, %381, %cst_168 [1] : vector<16x32xf32> to vector<16xf32>
    %383 = vector.shape_cast %382 : vector<16xf32> to vector<16x1xf32>
    %cst_169 = arith.constant 3.200000e+01 : f32
    %384 = vector.broadcast %cst_169 : f32 to vector<16x1xf32>
    %385 = arith.divf %383, %384 : vector<16x1xf32>
    %cst_170 = arith.constant 9.99999974E-6 : f32
    %386 = vector.broadcast %cst_170 : f32 to vector<16x1xf32>
    %387 = arith.addf %385, %386 : vector<16x1xf32>
    %388 = math.rsqrt %387 : vector<16x1xf32>
    %389 = vector.broadcast %388 : vector<16x1xf32> to vector<16x32xf32>
    %390 = arith.mulf %380, %389 : vector<16x32xf32>
    %391 = vector.broadcast %372 : vector<1x32xf32> to vector<16x32xf32>
    %392 = arith.mulf %390, %391 : vector<16x32xf32>
    %393 = vector.broadcast %374 : vector<1x32xf32> to vector<16x32xf32>
    %394 = arith.addf %392, %393 : vector<16x32xf32>
    %c1_171 = arith.constant 1 : index
    %c0_172 = arith.constant 0 : index
    %c0_173 = arith.constant 0 : index
    %395 = vector.load %arg11[%c1_171, %c0_172, %c0_173] : memref<2x32x128xf32, #tpu.memory_space<vmem>>, vector<1x32x128xf32>
    %396 = vector.shape_cast %395 : vector<1x32x128xf32> to vector<32x128xf32>
    %cst_174 = arith.constant dense<0.000000e+00> : vector<16x128xf32>
    %397 = tpu.matmul %394, %396, %cst_174 {dimension_numbers = #tpu.dot_dimension_numbers<[1], [0], [0], [1], [0, 0, 1, 1], [], []>} : vector<16x32xf32>, vector<32x128xf32>, vector<16x128xf32> -> vector<16x128xf32>
    %c1_175 = arith.constant 1 : index
    %c0_176 = arith.constant 0 : index
    %c0_177 = arith.constant 0 : index
    %398 = vector.load %arg12[%c1_175, %c0_176, %c0_177] : memref<2x1x128xf32, #tpu.memory_space<vmem>>, vector<1x1x128xf32>
    %399 = vector.shape_cast %398 : vector<1x1x128xf32> to vector<1x128xf32>
    %400 = vector.broadcast %399 : vector<1x128xf32> to vector<16x128xf32>
    %401 = arith.addf %397, %400 : vector<16x128xf32>
    %402 = arith.mulf %401, %401 : vector<16x128xf32>
    %403 = arith.mulf %401, %402 : vector<16x128xf32>
    %cst_178 = arith.constant 4.471500e-02 : f32
    %404 = vector.broadcast %cst_178 : f32 to vector<16x128xf32>
    %405 = arith.mulf %404, %403 : vector<16x128xf32>
    %406 = arith.addf %401, %405 : vector<16x128xf32>
    %cst_179 = arith.constant 0.797884583 : f32
    %407 = vector.broadcast %cst_179 : f32 to vector<16x128xf32>
    %408 = arith.mulf %407, %406 : vector<16x128xf32>
    %409 = math.tanh %408 : vector<16x128xf32>
    %cst_180 = arith.constant 1.000000e+00 : f32
    %410 = vector.broadcast %cst_180 : f32 to vector<16x128xf32>
    %411 = arith.addf %410, %409 : vector<16x128xf32>
    %cst_181 = arith.constant 5.000000e-01 : f32
    %412 = vector.broadcast %cst_181 : f32 to vector<16x128xf32>
    %413 = arith.mulf %412, %411 : vector<16x128xf32>
    %414 = arith.mulf %401, %413 : vector<16x128xf32>
    %c1_182 = arith.constant 1 : index
    %c0_183 = arith.constant 0 : index
    %c0_184 = arith.constant 0 : index
    %415 = vector.load %arg13[%c1_182, %c0_183, %c0_184] : memref<2x128x32xf32, #tpu.memory_space<vmem>>, vector<1x128x32xf32>
    %416 = vector.shape_cast %415 : vector<1x128x32xf32> to vector<128x32xf32>
    %cst_185 = arith.constant dense<0.000000e+00> : vector<16x32xf32>
    %417 = tpu.matmul %414, %416, %cst_185 {dimension_numbers = #tpu.dot_dimension_numbers<[1], [0], [0], [1], [0, 0, 1, 1], [], []>} : vector<16x128xf32>, vector<128x32xf32>, vector<16x32xf32> -> vector<16x32xf32>
    %c1_186 = arith.constant 1 : index
    %c0_187 = arith.constant 0 : index
    %c0_188 = arith.constant 0 : index
    %418 = vector.load %arg14[%c1_186, %c0_187, %c0_188] : memref<2x1x32xf32, #tpu.memory_space<vmem>>, vector<1x1x32xf32>
    %419 = vector.shape_cast %418 : vector<1x1x32xf32> to vector<1x32xf32>
    %420 = vector.broadcast %419 : vector<1x32xf32> to vector<16x32xf32>
    %421 = arith.addf %417, %420 : vector<16x32xf32>
    %422 = arith.addf %370, %421 : vector<16x32xf32>
    %c0_189 = arith.constant 0 : index
    %c0_190 = arith.constant 0 : index
    %423 = vector.load %arg15[%c0_189, %c0_190] : memref<1x32xf32, #tpu.memory_space<vmem>>, vector<1x32xf32>
    %c0_191 = arith.constant 0 : index
    %c0_192 = arith.constant 0 : index
    %424 = vector.load %arg16[%c0_191, %c0_192] : memref<1x32xf32, #tpu.memory_space<vmem>>, vector<1x32xf32>
    %cst_193 = arith.constant dense<0.000000e+00> : vector<16xf32>
    %425 = vector.multi_reduction <add>, %422, %cst_193 [1] : vector<16x32xf32> to vector<16xf32>
    %426 = vector.shape_cast %425 : vector<16xf32> to vector<16x1xf32>
    %cst_194 = arith.constant 3.200000e+01 : f32
    %427 = vector.broadcast %cst_194 : f32 to vector<16x1xf32>
    %428 = arith.divf %426, %427 : vector<16x1xf32>
    %429 = vector.broadcast %428 : vector<16x1xf32> to vector<16x32xf32>
    %430 = arith.subf %422, %429 : vector<16x32xf32>
    %431 = arith.mulf %430, %430 : vector<16x32xf32>
    %cst_195 = arith.constant dense<0.000000e+00> : vector<16xf32>
    %432 = vector.multi_reduction <add>, %431, %cst_195 [1] : vector<16x32xf32> to vector<16xf32>
    %433 = vector.shape_cast %432 : vector<16xf32> to vector<16x1xf32>
    %cst_196 = arith.constant 3.200000e+01 : f32
    %434 = vector.broadcast %cst_196 : f32 to vector<16x1xf32>
    %435 = arith.divf %433, %434 : vector<16x1xf32>
    %cst_197 = arith.constant 9.99999974E-6 : f32
    %436 = vector.broadcast %cst_197 : f32 to vector<16x1xf32>
    %437 = arith.addf %435, %436 : vector<16x1xf32>
    %438 = math.rsqrt %437 : vector<16x1xf32>
    %439 = vector.broadcast %438 : vector<16x1xf32> to vector<16x32xf32>
    %440 = arith.mulf %430, %439 : vector<16x32xf32>
    %441 = vector.broadcast %423 : vector<1x32xf32> to vector<16x32xf32>
    %442 = arith.mulf %440, %441 : vector<16x32xf32>
    %443 = vector.broadcast %424 : vector<1x32xf32> to vector<16x32xf32>
    %444 = arith.addf %442, %443 : vector<16x32xf32>
    %c0_198 = arith.constant 0 : index
    %c0_199 = arith.constant 0 : index
    %445 = vector.load %arg17[%c0_198, %c0_199] : memref<32x128xf32, #tpu.memory_space<vmem>>, vector<32x128xf32>
    %cst_200 = arith.constant dense<0.000000e+00> : vector<16x128xf32>
    %446 = tpu.matmul %444, %445, %cst_200 {dimension_numbers = #tpu.dot_dimension_numbers<[1], [0], [0], [1], [0, 0, 1, 1], [], []>} : vector<16x32xf32>, vector<32x128xf32>, vector<16x128xf32> -> vector<16x128xf32>
    %c0_201 = arith.constant 0 : index
    %c0_202 = arith.constant 0 : index
    %447 = vector.load %arg18[%c0_201, %c0_202] : memref<16x128xf32, #tpu.memory_space<vmem>>, vector<16x128xf32>
    tpu.vector_store %arg18[%c0_201, %c0_202], %446 {strides = array<i32>} : memref<16x128xf32, #tpu.memory_space<vmem>>, vector<16x128xf32>,
    return
  }
  func.func @transform_0(%arg0: i32, %arg1: memref<16xi32, #tpu.memory_space<smem>>) -> (i32, i32) {
    %c0_i32 = arith.constant 0 : i32
    %c0_i32_0 = arith.constant 0 : i32
    %c0_i32_1 = arith.constant 0 : i32
    return %c0_i32, %c0_i32_0 : i32, i32
  }
  func.func @transform_1(%arg0: i32, %arg1: memref<16xi32, #tpu.memory_space<smem>>) -> (i32, i32) {
    %c0_i32 = arith.constant 0 : i32
    %c0_i32_0 = arith.constant 0 : i32
    %c0_i32_1 = arith.constant 0 : i32
    return %c0_i32, %c0_i32_0 : i32, i32
  }
  func.func @transform_2(%arg0: i32, %arg1: memref<16xi32, #tpu.memory_space<smem>>) -> (i32, i32, i32) {
    %c0_i32 = arith.constant 0 : i32
    %c0_i32_0 = arith.constant 0 : i32
    %c0_i32_1 = arith.constant 0 : i32
    %c0_i32_2 = arith.constant 0 : i32
    return %c0_i32, %c0_i32_0, %c0_i32_1 : i32, i32, i32
  }
  func.func @transform_3(%arg0: i32, %arg1: memref<16xi32, #tpu.memory_space<smem>>) -> (i32, i32, i32) {
    %c0_i32 = arith.constant 0 : i32
    %c0_i32_0 = arith.constant 0 : i32
    %c0_i32_1 = arith.constant 0 : i32
    %c0_i32_2 = arith.constant 0 : i32
    return %c0_i32, %c0_i32_0, %c0_i32_1 : i32, i32, i32
  }
  func.func @transform_4(%arg0: i32, %arg1: memref<16xi32, #tpu.memory_space<smem>>) -> (i32, i32, i32) {
    %c0_i32 = arith.constant 0 : i32
    %c0_i32_0 = arith.constant 0 : i32
    %c0_i32_1 = arith.constant 0 : i32
    %c0_i32_2 = arith.constant 0 : i32
    return %c0_i32, %c0_i32_0, %c0_i32_1 : i32, i32, i32
  }
  func.func @transform_5(%arg0: i32, %arg1: memref<16xi32, #tpu.memory_space<smem>>) -> (i32, i32, i32) {
    %c0_i32 = arith.constant 0 : i32
    %c0_i32_0 = arith.constant 0 : i32
    %c0_i32_1 = arith.constant 0 : i32
    %c0_i32_2 = arith.constant 0 : i32
    return %c0_i32, %c0_i32_0, %c0_i32_1 : i32, i32, i32
  }
  func.func @transform_6(%arg0: i32, %arg1: memref<16xi32, #tpu.memory_space<smem>>) -> (i32, i32, i32) {
    %c0_i32 = arith.constant 0 : i32
    %c0_i32_0 = arith.constant 0 : i32
    %c0_i32_1 = arith.constant 0 : i32
    %c0_i32_2 = arith.constant 0 : i32
    return %c0_i32, %c0_i32_0, %c0_i32_1 : i32, i32, i32
  }
  func.func @transform_7(%arg0: i32, %arg1: memref<16xi32, #tpu.memory_space<smem>>) -> (i32, i32, i32) {
    %c0_i32 = arith.constant 0 : i32
    %c0_i32_0 = arith.constant 0 : i32
    %c0_i32_1 = arith.constant 0 : i32
    %c0_i32_2 = arith.constant 0 : i32
    return %c0_i32, %c0_i32_0, %c0_i32_1 : i32, i32, i32
  }
  func.func @transform_8(%arg0: i32, %arg1: memref<16xi32, #tpu.memory_space<smem>>) -> (i32, i32, i32) {
    %c0_i32 = arith.constant 0 : i32
    %c0_i32_0 = arith.constant 0 : i32
    %c0_i32_1 = arith.constant 0 : i32
    %c0_i32_2 = arith.constant 0 : i32
    return %c0_i32, %c0_i32_0, %c0_i32_1 : i32, i32, i32
  }
  func.func @transform_9(%arg0: i32, %arg1: memref<16xi32, #tpu.memory_space<smem>>) -> (i32, i32, i32) {
    %c0_i32 = arith.constant 0 : i32
    %c0_i32_0 = arith.constant 0 : i32
    %c0_i32_1 = arith.constant 0 : i32
    %c0_i32_2 = arith.constant 0 : i32
    return %c0_i32, %c0_i32_0, %c0_i32_1 : i32, i32, i32
  }
  func.func @transform_10(%arg0: i32, %arg1: memref<16xi32, #tpu.memory_space<smem>>) -> (i32, i32, i32) {
    %c0_i32 = arith.constant 0 : i32
    %c0_i32_0 = arith.constant 0 : i32
    %c0_i32_1 = arith.constant 0 : i32
    %c0_i32_2 = arith.constant 0 : i32
    return %c0_i32, %c0_i32_0, %c0_i32_1 : i32, i32, i32
  }
  func.func @transform_11(%arg0: i32, %arg1: memref<16xi32, #tpu.memory_space<smem>>) -> (i32, i32, i32) {
    %c0_i32 = arith.constant 0 : i32
    %c0_i32_0 = arith.constant 0 : i32
    %c0_i32_1 = arith.constant 0 : i32
    %c0_i32_2 = arith.constant 0 : i32
    return %c0_i32, %c0_i32_0, %c0_i32_1 : i32, i32, i32
  }
  func.func @transform_12(%arg0: i32, %arg1: memref<16xi32, #tpu.memory_space<smem>>) -> (i32, i32, i32) {
    %c0_i32 = arith.constant 0 : i32
    %c0_i32_0 = arith.constant 0 : i32
    %c0_i32_1 = arith.constant 0 : i32
    %c0_i32_2 = arith.constant 0 : i32
    return %c0_i32, %c0_i32_0, %c0_i32_1 : i32, i32, i32
  }
  func.func @transform_13(%arg0: i32, %arg1: memref<16xi32, #tpu.memory_space<smem>>) -> (i32, i32) {
    %c0_i32 = arith.constant 0 : i32
    %c0_i32_0 = arith.constant 0 : i32
    %c0_i32_1 = arith.constant 0 : i32
    return %c0_i32, %c0_i32_0 : i32, i32
  }
  func.func @transform_14(%arg0: i32, %arg1: memref<16xi32, #tpu.memory_space<smem>>) -> (i32, i32) {
    %c0_i32 = arith.constant 0 : i32
    %c0_i32_0 = arith.constant 0 : i32
    %c0_i32_1 = arith.constant 0 : i32
    return %c0_i32, %c0_i32_0 : i32, i32
  }
  func.func @transform_15(%arg0: i32, %arg1: memref<16xi32, #tpu.memory_space<smem>>) -> (i32, i32) {
    %c0_i32 = arith.constant 0 : i32
    %c0_i32_0 = arith.constant 0 : i32
    %c0_i32_1 = arith.constant 0 : i32
    return %c0_i32, %c0_i32_0 : i32, i32
  }
  func.func @transform_16(%arg0: i32, %arg1: memref<16xi32, #tpu.memory_space<smem>>) -> (i32, i32) {
    %c0_i32 = arith.constant 0 : i32
    %c0_i32_0 = arith.constant 0 : i32
    %c0_i32_1 = arith.constant 0 : i32
    return %c0_i32, %c0_i32_0 : i32, i32
  }
}

</mosaic_0001>

<llo_original>
// kernel: tpu_custom_call.1
$region0: #{tpu_custom_call.1}
  #allocation0 [shape = 'u32[]', space=smem, size = 0x4, offset = 0x4, fixed_abs, tag = 'smem constant byte address 0x4 - core index']
  #allocation1 [shape = 'u32[144,128]{1,0:T(1,128)}', space=vmem, size = 0x12000, scoped, tag = 'internal scratch']
  #allocation2 [shape = 'f32[16,32]{1,0:T(8,128)}', space=vmem, size = 0x2000, scoped, tag = 'scratch operand']
  #allocation3 [shape = 's32[1]{0}', space=sflag, size = 0x4, scoped, tag = 'scoped memory for tpu_custom_call.1']
  #allocation4 [shape = 'u8[512]{0}', space=smem, size = 0x200, scoped, tag = 'prefetched SMEM operand 0']
  %s0 = inlined_call_operand.vmem [shape: s32[16], index: 0, kind: input, shape index: {}]
  %s1 = inlined_call_operand.vmem [shape: f32[64,32], index: 1, kind: input, shape index: {}]
  %s2 = inlined_call_operand.vmem [shape: f32[8,32], index: 2, kind: input, shape index: {}]
  %s3 = inlined_call_operand.vmem [shape: f32[2,32,96], index: 3, kind: input, shape index: {}]
  %s4 = inlined_call_operand.vmem [shape: f32[2,32,32], index: 4, kind: input, shape index: {}]
  %s5 = inlined_call_operand.vmem [shape: f32[2,1,32], index: 5, kind: input, shape index: {}]
  %s6 = inlined_call_operand.vmem [shape: f32[2,1,32], index: 6, kind: input, shape index: {}]
  %s7 = inlined_call_operand.vmem [shape: f32[2,1,32], index: 7, kind: input, shape index: {}]
  %s8 = inlined_call_operand.vmem [shape: f32[2,1,32], index: 8, kind: input, shape index: {}]
  %s9 = inlined_call_operand.vmem [shape: f32[2,1,32], index: 9, kind: input, shape index: {}]
  %s10 = inlined_call_operand.vmem [shape: f32[2,32,128], index: 10, kind: input, shape index: {}]
  %s11 = inlined_call_operand.vmem [shape: f32[2,1,128], index: 11, kind: input, shape index: {}]
  %s12 = inlined_call_operand.vmem [shape: f32[2,128,32], index: 12, kind: input, shape index: {}]
  %s13 = inlined_call_operand.vmem [shape: f32[2,1,32], index: 13, kind: input, shape index: {}]
  %s14 = inlined_call_operand.vmem [shape: f32[1,32], index: 14, kind: input, shape index: {}]
  %s15 = inlined_call_operand.vmem [shape: f32[1,32], index: 15, kind: input, shape index: {}]
  %s16 = inlined_call_operand.vmem [shape: f32[32,128], index: 16, kind: input, shape index: {}]
  %s17 = inlined_call_operand.hbm [shape: f32[16,128], index: 17, kind: output, shape index: {}]
  %s18 = sld [smem:[#allocation0]]
  $region74: #{tpu_custom_call.1} parent=0
    _
  %s20 = ssub.s32 1, %s18
  %s21 = scalar_select 0, %s20, %s18
  %s22 = sshll.u32 %s0, 4
  %s23 = int_to_ptr.vmem [resolvable:$true] %s22
  %25 = dma.vmem_to_smem %s23, 16, [#allocation4], [#allocation3]
  %26 = dma.done [#allocation3], 16
  %27 = sfence
  $region1: #{tpu_custom_call.1} parent=0
    #allocation5 [shape = 'u8[8192]{0}', space=vmem, size = 0x2000, scoped, tag = 'output window, operand 0, single buffered']
    #allocation6 [shape = 's32[1]{0}', space=sflag, size = 0x4, scoped, tag = 'scoped memory for tpu_custom_call.1']
    %28 = vsyncpa [#allocation6], 0
    // Predicated region
    $region2: #{tpu_custom_call.1} parent=1 // pred_check
      _
    $region3: #{tpu_custom_call.1} parent=1 // pred_check_branch
      %30 = sbr.rel (0) target = $region5
    $region4: #{tpu_custom_call.1} parent=1 // pred_region
      _
    $region5: #{tpu_custom_call.1} parent=1 // pred_fallthru
      _
    // Predicated region
    $region6: #{tpu_custom_call.1} parent=1 // pred_check
      _
    $region7: #{tpu_custom_call.1} parent=1 // pred_check_branch
      %32 = sbr.rel (0) target = $region9
    $region8: #{tpu_custom_call.1} parent=1 // pred_region
      _
    $region9: #{tpu_custom_call.1} parent=1 // pred_fallthru
      _
    // Predicated region
    $region10: #{tpu_custom_call.1} parent=1 // pred_check
      _
    $region11: #{tpu_custom_call.1} parent=1 // pred_check_branch
      %34 = sbr.rel (0) target = $region13
    $region12: #{tpu_custom_call.1} parent=1 // pred_region
      _
    $region13: #{tpu_custom_call.1} parent=1 // pred_fallthru
      _
    // Predicated region
    $region14: #{tpu_custom_call.1} parent=1 // pred_check
      _
    $region15: #{tpu_custom_call.1} parent=1 // pred_check_branch
      %36 = sbr.rel (0) target = $region17
    $region16: #{tpu_custom_call.1} parent=1 // pred_region
      _
    $region17: #{tpu_custom_call.1} parent=1 // pred_fallthru
      _
    // Predicated region
    $region18: #{tpu_custom_call.1} parent=1 // pred_check
      _
    $region19: #{tpu_custom_call.1} parent=1 // pred_check_branch
      %38 = sbr.rel (0) target = $region21
    $region20: #{tpu_custom_call.1} parent=1 // pred_region
      _
    $region21: #{tpu_custom_call.1} parent=1 // pred_fallthru
      _
    // Predicated region
    $region22: #{tpu_custom_call.1} parent=1 // pred_check
      _
    $region23: #{tpu_custom_call.1} parent=1 // pred_check_branch
      %40 = sbr.rel (0) target = $region25
    $region24: #{tpu_custom_call.1} parent=1 // pred_region
      _
    $region25: #{tpu_custom_call.1} parent=1 // pred_fallthru
      _
    // Predicated region
    $region26: #{tpu_custom_call.1} parent=1 // pred_check
      _
    $region27: #{tpu_custom_call.1} parent=1 // pred_check_branch
      %42 = sbr.rel (0) target = $region29
    $region28: #{tpu_custom_call.1} parent=1 // pred_region
      _
    $region29: #{tpu_custom_call.1} parent=1 // pred_fallthru
      _
    // Predicated region
    $region30: #{tpu_custom_call.1} parent=1 // pred_check
      _
    $region31: #{tpu_custom_call.1} parent=1 // pred_check_branch
      %44 = sbr.rel (0) target = $region33
    $region32: #{tpu_custom_call.1} parent=1 // pred_region
      _
    $region33: #{tpu_custom_call.1} parent=1 // pred_fallthru
      _
    // Predicated region
    $region34: #{tpu_custom_call.1} parent=1 // pred_check
      _
    $region35: #{tpu_custom_call.1} parent=1 // pred_check_branch
      %46 = sbr.rel (0) target = $region37
    $region36: #{tpu_custom_call.1} parent=1 // pred_region
      _
    $region37: #{tpu_custom_call.1} parent=1 // pred_fallthru
      _
    // Predicated region
    $region38: #{tpu_custom_call.1} parent=1 // pred_check
      _
    $region39: #{tpu_custom_call.1} parent=1 // pred_check_branch
      %48 = sbr.rel (0) target = $region41
    $region40: #{tpu_custom_call.1} parent=1 // pred_region
      _
    $region41: #{tpu_custom_call.1} parent=1 // pred_fallthru
      _
    // Predicated region
    $region42: #{tpu_custom_call.1} parent=1 // pred_check
      _
    $region43: #{tpu_custom_call.1} parent=1 // pred_check_branch
      %50 = sbr.rel (0) target = $region45
    $region44: #{tpu_custom_call.1} parent=1 // pred_region
      _
    $region45: #{tpu_custom_call.1} parent=1 // pred_fallthru
      _
    // Predicated region
    $region46: #{tpu_custom_call.1} parent=1 // pred_check
      _
    $region47: #{tpu_custom_call.1} parent=1 // pred_check_branch
      %52 = sbr.rel (0) target = $region49
    $region48: #{tpu_custom_call.1} parent=1 // pred_region
      _
    $region49: #{tpu_custom_call.1} parent=1 // pred_fallthru
      _
    // Predicated region
    $region50: #{tpu_custom_call.1} parent=1 // pred_check
      _
    $region51: #{tpu_custom_call.1} parent=1 // pred_check_branch
      %54 = sbr.rel (0) target = $region53
    $region52: #{tpu_custom_call.1} parent=1 // pred_region
      _
    $region53: #{tpu_custom_call.1} parent=1 // pred_fallthru
      _
    // Predicated region
    $region54: #{tpu_custom_call.1} parent=1 // pred_check
      _
    $region55: #{tpu_custom_call.1} parent=1 // pred_check_branch
      %56 = sbr.rel (0) target = $region57
    $region56: #{tpu_custom_call.1} parent=1 // pred_region
      _
    $region57: #{tpu_custom_call.1} parent=1 // pred_fallthru
      _
    // Predicated region
    $region58: #{tpu_custom_call.1} parent=1 // pred_check
      _
    $region59: #{tpu_custom_call.1} parent=1 // pred_check_branch
      %58 = sbr.rel (0) target = $region61
    $region60: #{tpu_custom_call.1} parent=1 // pred_region
      _
    $region61: #{tpu_custom_call.1} parent=1 // pred_fallthru
      _
    // Predicated region
    $region62: #{tpu_custom_call.1} parent=1 // pred_check
      _
    $region63: #{tpu_custom_call.1} parent=1 // pred_check_branch
      %60 = sbr.rel (0) target = $region65
    $region64: #{tpu_custom_call.1} parent=1 // pred_region
      _
    $region65: #{tpu_custom_call.1} parent=1 // pred_fallthru
      _
    %s61 = sld [smem:[#allocation4]]
    %s62 = scalar_lea.vmem %s1, %s61
    %v63 = vld [vmem:[%s62] sm:$0x1]
    %vm64 = vcmask 253952
    %65 = vst.msk [vmem:[#allocation2] sm:$0x1] %vm64, %v63
    %s66 = sld [smem:[#allocation4 + $0x1]]
    %s67 = scalar_lea.vmem %s1, %s66
    %v68 = vld [vmem:[%s67] sm:$0x1]
    %69 = vst.msk [vmem:[#allocation2 + $0x1] sm:$0x1] %vm64, %v68
    %s70 = sld [smem:[#allocation4 + $0x2]]
    %s71 = scalar_lea.vmem %s1, %s70
    %v72 = vld [vmem:[%s71] sm:$0x1]
    %73 = vst.msk [vmem:[#allocation2 + $0x2] sm:$0x1] %vm64, %v72
    %s74 = sld [smem:[#allocation4 + $0x3]]
    %s75 = scalar_lea.vmem %s1, %s74
    %v76 = vld [vmem:[%s75] sm:$0x1]
    %77 = vst.msk [vmem:[#allocation2 + $0x3] sm:$0x1] %vm64, %v76
    %s78 = sld [smem:[#allocation4 + $0x4]]
    %s79 = scalar_lea.vmem %s1, %s78
    %v80 = vld [vmem:[%s79] sm:$0x1]
    %81 = vst.msk [vmem:[#allocation2 + $0x4] sm:$0x1] %vm64, %v80
    %s82 = sld [smem:[#allocation4 + $0x5]]
    %s83 = scalar_lea.vmem %s1, %s82
    %v84 = vld [vmem:[%s83] sm:$0x1]
    %85 = vst.msk [vmem:[#allocation2 + $0x5] sm:$0x1] %vm64, %v84
    %s86 = sld [smem:[#allocation4 + $0x6]]
    %s87 = scalar_lea.vmem %s1, %s86
    %v88 = vld [vmem:[%s87] sm:$0x1]
    %89 = vst.msk [vmem:[#allocation2 + $0x6] sm:$0x1] %vm64, %v88
    %s90 = sld [smem:[#allocation4 + $0x7]]
    %s91 = scalar_lea.vmem %s1, %s90
    %v92 = vld [vmem:[%s91] sm:$0x1]
    %93 = vst.msk [vmem:[#allocation2 + $0x7] sm:$0x1] %vm64, %v92
    %s94 = sld [smem:[#allocation4 + $0x8]]
    %s95 = scalar_lea.vmem %s1, %s94
    %v96 = vld [vmem:[%s95] sm:$0x1]
    %97 = vst.msk [vmem:[#allocation2 + $0x8] sm:$0x1] %vm64, %v96
    %s98 = sld [smem:[#allocation4 + $0x9]]
    %s99 = scalar_lea.vmem %s1, %s98
    %v100 = vld [vmem:[%s99] sm:$0x1]
    %101 = vst.msk [vmem:[#allocation2 + $0x9] sm:$0x1] %vm64, %v100
    %s102 = sld [smem:[#allocation4 + $0xa]]
    %s103 = scalar_lea.vmem %s1, %s102
    %v104 = vld [vmem:[%s103] sm:$0x1]
    %105 = vst.msk [vmem:[#allocation2 + $0xa] sm:$0x1] %vm64, %v104
    %s106 = sld [smem:[#allocation4 + $0xb]]
    %s107 = scalar_lea.vmem %s1, %s106
    %v108 = vld [vmem:[%s107] sm:$0x1]
    %109 = vst.msk [vmem:[#allocation2 + $0xb] sm:$0x1] %vm64, %v108
    %s110 = sld [smem:[#allocation4 + $0xc]]
    %s111 = scalar_lea.vmem %s1, %s110
    %v112 = vld [vmem:[%s111] sm:$0x1]
    %113 = vst.msk [vmem:[#allocation2 + $0xc] sm:$0x1] %vm64, %v112
    %s114 = sld [smem:[#allocation4 + $0xd]]
    %s115 = scalar_lea.vmem %s1, %s114
    %v116 = vld [vmem:[%s115] sm:$0x1]
    %117 = vst.msk [vmem:[#allocation2 + $0xd] sm:$0x1] %vm64, %v116
    %s118 = sld [smem:[#allocation4 + $0xe]]
    %s119 = scalar_lea.vmem %s1, %s118
    %v120 = vld [vmem:[%s119] sm:$0x1]
    %121 = vst.msk [vmem:[#allocation2 + $0xe] sm:$0x1] %vm64, %v120
    %s122 = sld [smem:[#allocation4 + $0xf]]
    %s123 = scalar_lea.vmem %s1, %s122
    %v124 = vld [vmem:[%s123] sm:$0x1]
    %125 = vst.msk [vmem:[#allocation2 + $0xf] sm:$0x1] %vm64, %v124
    %v126 = vld [vmem:[#allocation2] sm:$0xff]
    %v127 = vld [vmem:[#allocation2 + $0x8] sm:$0xff]
    %v128 = vmul.f32 %v126, %v126
    %v129 = vmul.f32 %v127, %v127
    %vm130 = vcmask 261120
    %v131 = vsel %vm130, %v128, 0.0
    %132 = vadd.xlane.f32.xlu0 %v131
    %v133 = vpop.xlane.xlu0 %132
    %v134 = vsel %vm130, %v129, 0.0
    %135 = vadd.xlane.f32.xlu0 %v134
    %v136 = vpop.xlane.xlu0 %135
    %v137 = vrsqrt.pop %v133
    %v138 = vrsqrt.pop %v136
    %v139 = vmul.f32 %v126, %v137
    %v140 = vmul.f32 %v127, %v138
    %v141 = vld [vmem:[%s2] sm:$0xff]
    %v142 = vmul.f32 %v141, %v141
    %v143 = vsel %vm130, %v142, 0.0
    %144 = vadd.xlane.f32.xlu0 %v143
    %v145 = vpop.xlane.xlu0 %144
    %v146 = vrsqrt.pop %v145
    %v147 = vmul.f32 %v141, %v146
    %v148 = vadd.f32 %v139, %v147
    %v149 = vadd.f32 %v140, %v147
    %v150 = vlaneseq
    %v151 = vshrl.u32 %v150, 7
    %v152 = vlaneseq
    %v153 = vand.u32 %v152, 127
    %vm154 = vcmp.ge.s32.totalorder %v151, %v153
    %v155 = vsel %vm154, 0.0, -1e+30
    %v156 = vld [vmem:[%s6] sm:$0x1]
    %v157 = vld [vmem:[%s7] sm:$0x1]
    %v158 = vsel %vm130, %v148, 0.0
    %159 = vadd.xlane.f32.xlu0 %v158
    %v160 = vpop.xlane.xlu0 %159
    %v161 = vsel %vm130, %v149, 0.0
    %162 = vadd.xlane.f32.xlu0 %v161
    %v163 = vpop.xlane.xlu0 %162
    %v164 = vrcp.pop 32.0
    %v165 = vmul.f32 %v160, %v164
    %v166 = vmul.f32 %v163, %v164
    %v167 = vsub.f32 %v148, %v165
    %v168 = vsub.f32 %v149, %v166
    %v169 = vmul.f32 %v167, %v167
    %v170 = vmul.f32 %v168, %v168
    %v171 = vsel %vm130, %v169, 0.0
    %172 = vadd.xlane.f32.xlu0 %v171
    %v173 = vpop.xlane.xlu0 %172
    %v174 = vsel %vm130, %v170, 0.0
    %175 = vadd.xlane.f32.xlu0 %v174
    %v176 = vpop.xlane.xlu0 %175
    %v177 = vmul.f32 %v173, %v164
    %v178 = vmul.f32 %v176, %v164
    %v179 = vadd.f32 %v177, 1e-05
    %v180 = vadd.f32 %v178, 1e-05
    %v181 = vrsqrt.pop %v179
    %v182 = vrsqrt.pop %v180
    %v183 = vmul.f32 %v167, %v181
    %v184 = vmul.f32 %v168, %v182
    %v186 = vlaneseq
    %v187 = vshrl.u32 %v186, 7
    %v188 = vsub.s32 0, %v187
    %v189 = vrot.slane %v156, %v188
    %v191 = vmul.f32 %v183, %v189
    %v192 = vmul.f32 %v184, %v189
    %v194 = vlaneseq
    %v195 = vshrl.u32 %v194, 7
    %v196 = vsub.s32 0, %v195
    %v197 = vrot.slane %v157, %v196
    %v199 = vadd.f32 %v191, %v197
    %v200 = vadd.f32 %v192, %v197
    %v201 = vld [vmem:[%s3] sm:$0xff]
    %v202 = vld [vmem:[%s3 + $0x8] sm:$0xff]
    %v203 = vld [vmem:[%s3 + $0x10] sm:$0xff]
    %v204 = vld [vmem:[%s3 + $0x18] sm:$0xff]
    %v206 = vsel %vm130, %v199, 0
    %v209 = vsel %vm130, %v200, 0
    %211 = vmatprep.subr.mxu0 0.0
    %212 = vmatpush1.msra.mxu0 %v201
    %213 = vmatprep.subr.mxu0 0.0
    %214 = vmatpush1.msra.mxu0 %v202
    %215 = vmatprep.subr.mxu0 0.0
    %216 = vmatpush1.msra.mxu0 %v203
    %217 = vmatprep.subr.mxu0 0.0
    %218 = vmatpush1.msra.mxu0 %v204
    %219 = vmatprep.subr.mxu0 0.0
    %220 = vmatpush1.msra.mxu0 0.0
    %221 = vmatprep.subr.mxu0 0.0
    %222 = vmatpush1.msra.mxu0 0.0
    %223 = vmatprep.subr.mxu0 0.0
    %224 = vmatpush1.msra.mxu0 0.0
    %225 = vmatprep.subr.mxu0 0.0
    %226 = vmatpush1.msra.mxu0 0.0
    %227 = vmatprep.subr.mxu0 0.0
    %228 = vmatpush1.msra.mxu0 0.0
    %229 = vmatprep.subr.mxu0 0.0
    %230 = vmatpush1.msra.mxu0 0.0
    %231 = vmatprep.subr.mxu0 0.0
    %232 = vmatpush1.msra.mxu0 0.0
    %233 = vmatprep.subr.mxu0 0.0
    %234 = vmatpush1.msra.mxu0 0.0
    %235 = vmatprep.subr.mxu0 0.0
    %236 = vmatpush1.msra.mxu0 0.0
    %237 = vmatprep.subr.mxu0 0.0
    %238 = vmatpush1.msra.mxu0 0.0
    %239 = vmatprep.subr.mxu0 0.0
    %240 = vmatpush1.msra.mxu0 0.0
    %241 = vmatprep.subr.mxu0 0.0
    %242 = vmatpush1.msra.mxu0 0.0
    %243 = vmatprep.subr.mxu0 0.0
    %244 = vmatpush1.msra.mxu0 0.0
    %245 = vmatprep.subr.mxu0 0.0
    %246 = vmatpush1.msra.mxu0 0.0
    %247 = vmatprep.subr.mxu0 0.0
    %248 = vmatpush1.msra.mxu0 0.0
    %249 = vmatprep.subr.mxu0 0.0
    %250 = vmatpush1.msra.mxu0 0.0
    %251 = vmatprep.subr.mxu0 0.0
    %252 = vmatpush1.msra.mxu0 0.0
    %253 = vmatprep.subr.mxu0 0.0
    %254 = vmatpush1.msra.mxu0 0.0
    %255 = vmatprep.subr.mxu0 0.0
    %256 = vmatpush1.msra.mxu0 0.0
    %257 = vmatprep.subr.mxu0 0.0
    %258 = vmatpush1.msra.mxu0 0.0
    %259 = vmatprep.subr.mxu0 0.0
    %260 = vmatpush1.msra.mxu0 0.0
    %261 = vmatprep.subr.mxu0 0.0
    %262 = vmatpush1.msra.mxu0 0.0
    %263 = vmatprep.subr.mxu0 0.0
    %264 = vmatpush1.msra.mxu0 0.0
    %265 = vmatprep.subr.mxu0 0.0
    %266 = vmatpush1.msra.mxu0 0.0
    %267 = vmatprep.subr.mxu0 0.0
    %268 = vmatpush1.msra.mxu0 0.0
    %269 = vmatprep.subr.mxu0 0.0
    %270 = vmatpush1.msra.mxu0 0.0
    %271 = vmatprep.subr.mxu0 0.0
    %272 = vmatpush1.msra.mxu0 0.0
    %273 = vmatprep.subr.mxu0 0.0
    %274 = vmatpush1.msra.mxu0 0.0
    %275 = vmatprep.mubr.f32.mxu0 0.0
    %276 = vmatmul.mubr.f32.gmra.mrb[0].mxu0 %v206
    %v277 = vpop.f32.mrb[0].mxu0
    %v278 = vadd.f32 0.0, %v277
    %v279 = vpop.f32.mrb[0].mxu0
    %280 = vmatprep.mubr.f32.mxu0 0.0
    %281 = vmatmul.mubr.f32.gmra.mrb[0].mxu0 %v209
    %v282 = vpop.f32.mrb[0].mxu0
    %v283 = vadd.f32 0.0, %v282
    %v284 = vpop.f32.mrb[0].mxu0
    %285 = vdwg.mxu0
    %287 = vrot.lane.b32.xlu0 %v278, 96
    %v288 = vpop.permute.xlu0 %287
    %vm289 = vcmask 64512
    %v290 = vsel %vm289, %v278, 0
    %v292 = vsel %vm289, %v288, 0
    %294 = vmatprep.subr.mxu0 0.0
    %295 = vmatpush1.xpose.msra.mxu0 %v292
    %296 = vmatprep.subr.mxu0 0.0
    %297 = vmatpush1.xpose.msra.mxu0 0.0
    %298 = vmatprep.subr.mxu0 0.0
    %299 = vmatpush1.xpose.msra.mxu0 0.0
    %300 = vmatprep.subr.mxu0 0.0
    %301 = vmatpush1.xpose.msra.mxu0 0.0
    %302 = vmatprep.subr.mxu0 0.0
    %303 = vmatpush1.xpose.msra.mxu0 0.0
    %304 = vmatprep.subr.mxu0 0.0
    %305 = vmatpush1.xpose.msra.mxu0 0.0
    %306 = vmatprep.subr.mxu0 0.0
    %307 = vmatpush1.xpose.msra.mxu0 0.0
    %308 = vmatprep.subr.mxu0 0.0
    %309 = vmatpush1.xpose.msra.mxu0 0.0
    %310 = vmatprep.subr.mxu0 0.0
    %311 = vmatpush1.xpose.msra.mxu0 0.0
    %312 = vmatprep.subr.mxu0 0.0
    %313 = vmatpush1.xpose.msra.mxu0 0.0
    %314 = vmatprep.subr.mxu0 0.0
    %315 = vmatpush1.xpose.msra.mxu0 0.0
    %316 = vmatprep.subr.mxu0 0.0
    %317 = vmatpush1.xpose.msra.mxu0 0.0
    %318 = vmatprep.subr.mxu0 0.0
    %319 = vmatpush1.xpose.msra.mxu0 0.0
    %320 = vmatprep.subr.mxu0 0.0
    %321 = vmatpush1.xpose.msra.mxu0 0.0
    %322 = vmatprep.subr.mxu0 0.0
    %323 = vmatpush1.xpose.msra.mxu0 0.0
    %324 = vmatprep.subr.mxu0 0.0
    %325 = vmatpush1.xpose.msra.mxu0 0.0
    %326 = vmatprep.subr.mxu0 0.0
    %327 = vmatpush1.xpose.msra.mxu0 0.0
    %328 = vmatprep.subr.mxu0 0.0
    %329 = vmatpush1.xpose.msra.mxu0 0.0
    %330 = vmatprep.subr.mxu0 0.0
    %331 = vmatpush1.xpose.msra.mxu0 0.0
    %332 = vmatprep.subr.mxu0 0.0
    %333 = vmatpush1.xpose.msra.mxu0 0.0
    %334 = vmatprep.subr.mxu0 0.0
    %335 = vmatpush1.xpose.msra.mxu0 0.0
    %336 = vmatprep.subr.mxu0 0.0
    %337 = vmatpush1.xpose.msra.mxu0 0.0
    %338 = vmatprep.subr.mxu0 0.0
    %339 = vmatpush1.xpose.msra.mxu0 0.0
    %340 = vmatprep.subr.mxu0 0.0
    %341 = vmatpush1.xpose.msra.mxu0 0.0
    %342 = vmatprep.subr.mxu0 0.0
    %343 = vmatpush1.xpose.msra.mxu0 0.0
    %344 = vmatprep.subr.mxu0 0.0
    %345 = vmatpush1.xpose.msra.mxu0 0.0
    %346 = vmatprep.subr.mxu0 0.0
    %347 = vmatpush1.xpose.msra.mxu0 0.0
    %348 = vmatprep.subr.mxu0 0.0
    %349 = vmatpush1.xpose.msra.mxu0 0.0
    %350 = vmatprep.subr.mxu0 0.0
    %351 = vmatpush1.xpose.msra.mxu0 0.0
    %352 = vmatprep.subr.mxu0 0.0
    %353 = vmatpush1.xpose.msra.mxu0 0.0
    %354 = vmatprep.subr.mxu0 0.0
    %355 = vmatpush1.xpose.msra.mxu0 0.0
    %356 = vmatprep.subr.mxu0 0.0
    %357 = vmatpush1.xpose.msra.mxu0 0.0
    %358 = vmatprep.mubr.f32.mxu0 0.0
    %359 = vmatmul.mubr.f32.gmra.mrb[0].mxu0 %v290
    %v360 = vpop.f32.mrb[0].mxu0
    %v361 = vadd.f32 %v155, %v360
    %v362 = vpop.f32.mrb[0].mxu0
    %363 = vdwg.mxu0
    %365 = vrot.lane.b32.xlu0 %v283, 96
    %v366 = vpop.permute.xlu0 %365
    %v367 = vsel %vm289, %v283, 0
    %v369 = vsel %vm289, %v366, 0
    %371 = vmatprep.subr.mxu0 0.0
    %372 = vmatpush1.xpose.msra.mxu0 %v369
    %373 = vmatprep.subr.mxu0 0.0
    %374 = vmatpush1.xpose.msra.mxu0 0.0
    %375 = vmatprep.subr.mxu0 0.0
    %376 = vmatpush1.xpose.msra.mxu0 0.0
    %377 = vmatprep.subr.mxu0 0.0
    %378 = vmatpush1.xpose.msra.mxu0 0.0
    %379 = vmatprep.subr.mxu0 0.0
    %380 = vmatpush1.xpose.msra.mxu0 0.0
    %381 = vmatprep.subr.mxu0 0.0
    %382 = vmatpush1.xpose.msra.mxu0 0.0
    %383 = vmatprep.subr.mxu0 0.0
    %384 = vmatpush1.xpose.msra.mxu0 0.0
    %385 = vmatprep.subr.mxu0 0.0
    %386 = vmatpush1.xpose.msra.mxu0 0.0
    %387 = vmatprep.subr.mxu0 0.0
    %388 = vmatpush1.xpose.msra.mxu0 0.0
    %389 = vmatprep.subr.mxu0 0.0
    %390 = vmatpush1.xpose.msra.mxu0 0.0
    %391 = vmatprep.subr.mxu0 0.0
    %392 = vmatpush1.xpose.msra.mxu0 0.0
    %393 = vmatprep.subr.mxu0 0.0
    %394 = vmatpush1.xpose.msra.mxu0 0.0
    %395 = vmatprep.subr.mxu0 0.0
    %396 = vmatpush1.xpose.msra.mxu0 0.0
    %397 = vmatprep.subr.mxu0 0.0
    %398 = vmatpush1.xpose.msra.mxu0 0.0
    %399 = vmatprep.subr.mxu0 0.0
    %400 = vmatpush1.xpose.msra.mxu0 0.0
    %401 = vmatprep.subr.mxu0 0.0
    %402 = vmatpush1.xpose.msra.mxu0 0.0
    %403 = vmatprep.subr.mxu0 0.0
    %404 = vmatpush1.xpose.msra.mxu0 0.0
    %405 = vmatprep.subr.mxu0 0.0
    %406 = vmatpush1.xpose.msra.mxu0 0.0
    %407 = vmatprep.subr.mxu0 0.0
    %408 = vmatpush1.xpose.msra.mxu0 0.0
    %409 = vmatprep.subr.mxu0 0.0
    %410 = vmatpush1.xpose.msra.mxu0 0.0
    %411 = vmatprep.subr.mxu0 0.0
    %412 = vmatpush1.xpose.msra.mxu0 0.0
    %413 = vmatprep.subr.mxu0 0.0
    %414 = vmatpush1.xpose.msra.mxu0 0.0
    %415 = vmatprep.subr.mxu0 0.0
    %416 = vmatpush1.xpose.msra.mxu0 0.0
    %417 = vmatprep.subr.mxu0 0.0
    %418 = vmatpush1.xpose.msra.mxu0 0.0
    %419 = vmatprep.subr.mxu0 0.0
    %420 = vmatpush1.xpose.msra.mxu0 0.0
    %421 = vmatprep.subr.mxu0 0.0
    %422 = vmatpush1.xpose.msra.mxu0 0.0
    %423 = vmatprep.subr.mxu0 0.0
    %424 = vmatpush1.xpose.msra.mxu0 0.0
    %425 = vmatprep.subr.mxu0 0.0
    %426 = vmatpush1.xpose.msra.mxu0 0.0
    %427 = vmatprep.subr.mxu0 0.0
    %428 = vmatpush1.xpose.msra.mxu0 0.0
    %429 = vmatprep.subr.mxu0 0.0
    %430 = vmatpush1.xpose.msra.mxu0 0.0
    %431 = vmatprep.subr.mxu0 0.0
    %432 = vmatpush1.xpose.msra.mxu0 0.0
    %433 = vmatprep.subr.mxu0 0.0
    %434 = vmatpush1.xpose.msra.mxu0 0.0
    %435 = vmatprep.mubr.f32.mxu0 0.0
    %436 = vmatmul.mubr.f32.gmra.mrb[0].mxu0 %v367
    %v437 = vpop.f32.mrb[0].mxu0
    %v438 = vadd.f32 %v155, %v437
    %v439 = vpop.f32.mrb[0].mxu0
    %440 = vdwg.mxu0
    %v441 = vsel %vm289, %v361, -inf
    %442 = vmax.xlane.f32.xlu0 %v441
    %v443 = vpop.xlane.xlu0 %442
    %v444 = vsel %vm289, %v438, -inf
    %445 = vmax.xlane.f32.xlu0 %v444
    %v446 = vpop.xlane.xlu0 %445
    %v447 = vsub.f32 %v361, %v443
    %v448 = vsub.f32 %v438, %v446
    %v449 = vmul.f32 %v447, 1.442695
    %v450 = vpow.pop %v449
    %v451 = vmul.f32 %v448, 1.442695
    %v452 = vpow.pop %v451
    %v453 = vsel %vm289, %v450, 0.0
    %454 = vadd.xlane.f32.xlu0 %v453
    %v455 = vpop.xlane.xlu0 %454
    %v456 = vsel %vm289, %v452, 0.0
    %457 = vadd.xlane.f32.xlu0 %v456
    %v458 = vpop.xlane.xlu0 %457
    %v459 = vrcp.pop %v455
    %v460 = vrcp.pop %v458
    %v461 = vmul.f32 %v450, %v459
    %v462 = vmul.f32 %v452, %v460
    %463 = vrot.lane.b32.xlu0 %v278, 64
    %v464 = vpop.permute.xlu0 %463
    %v467 = vsel %vm289, %v461, 0
    %469 = vmatprep.subr.mxu0 0.0
    %470 = vmatpush1.msra.mxu0 %v464
    %471 = vmatprep.subr.mxu0 0.0
    %472 = vmatpush1.msra.mxu0 0.0
    %473 = vmatprep.subr.mxu0 0.0
    %474 = vmatpush1.msra.mxu0 0.0
    %475 = vmatprep.subr.mxu0 0.0
    %476 = vmatpush1.msra.mxu0 0.0
    %477 = vmatprep.subr.mxu0 0.0
    %478 = vmatpush1.msra.mxu0 0.0
    %479 = vmatprep.subr.mxu0 0.0
    %480 = vmatpush1.msra.mxu0 0.0
    %481 = vmatprep.subr.mxu0 0.0
    %482 = vmatpush1.msra.mxu0 0.0
    %483 = vmatprep.subr.mxu0 0.0
    %484 = vmatpush1.msra.mxu0 0.0
    %485 = vmatprep.subr.mxu0 0.0
    %486 = vmatpush1.msra.mxu0 0.0
    %487 = vmatprep.subr.mxu0 0.0
    %488 = vmatpush1.msra.mxu0 0.0
    %489 = vmatprep.subr.mxu0 0.0
    %490 = vmatpush1.msra.mxu0 0.0
    %491 = vmatprep.subr.mxu0 0.0
    %492 = vmatpush1.msra.mxu0 0.0
    %493 = vmatprep.subr.mxu0 0.0
    %494 = vmatpush1.msra.mxu0 0.0
    %495 = vmatprep.subr.mxu0 0.0
    %496 = vmatpush1.msra.mxu0 0.0
    %497 = vmatprep.subr.mxu0 0.0
    %498 = vmatpush1.msra.mxu0 0.0
    %499 = vmatprep.subr.mxu0 0.0
    %500 = vmatpush1.msra.mxu0 0.0
    %501 = vmatprep.subr.mxu0 0.0
    %502 = vmatpush1.msra.mxu0 0.0
    %503 = vmatprep.subr.mxu0 0.0
    %504 = vmatpush1.msra.mxu0 0.0
    %505 = vmatprep.subr.mxu0 0.0
    %506 = vmatpush1.msra.mxu0 0.0
    %507 = vmatprep.subr.mxu0 0.0
    %508 = vmatpush1.msra.mxu0 0.0
    %509 = vmatprep.subr.mxu0 0.0
    %510 = vmatpush1.msra.mxu0 0.0
    %511 = vmatprep.subr.mxu0 0.0
    %512 = vmatpush1.msra.mxu0 0.0
    %513 = vmatprep.subr.mxu0 0.0
    %514 = vmatpush1.msra.mxu0 0.0
    %515 = vmatprep.subr.mxu0 0.0
    %516 = vmatpush1.msra.mxu0 0.0
    %517 = vmatprep.subr.mxu0 0.0
    %518 = vmatpush1.msra.mxu0 0.0
    %519 = vmatprep.subr.mxu0 0.0
    %520 = vmatpush1.msra.mxu0 0.0
    %521 = vmatprep.subr.mxu0 0.0
    %522 = vmatpush1.msra.mxu0 0.0
    %523 = vmatprep.subr.mxu0 0.0
    %524 = vmatpush1.msra.mxu0 0.0
    %525 = vmatprep.subr.mxu0 0.0
    %526 = vmatpush1.msra.mxu0 0.0
    %527 = vmatprep.subr.mxu0 0.0
    %528 = vmatpush1.msra.mxu0 0.0
    %529 = vmatprep.subr.mxu0 0.0
    %530 = vmatpush1.msra.mxu0 0.0
    %531 = vmatprep.subr.mxu0 0.0
    %532 = vmatpush1.msra.mxu0 0.0
    %533 = vmatprep.mubr.f32.mxu0 0.0
    %534 = vmatmul.mubr.f32.gmra.mrb[0].mxu0 %v467
    %v535 = vpop.f32.mrb[0].mxu0
    %v536 = vadd.f32 0.0, %v535
    %v537 = vpop.f32.mrb[0].mxu0
    %538 = vdwg.mxu0
    %539 = vrot.lane.b32.xlu0 %v283, 64
    %v540 = vpop.permute.xlu0 %539
    %v543 = vsel %vm289, %v462, 0
    %545 = vmatprep.subr.mxu0 0.0
    %546 = vmatpush1.msra.mxu0 %v540
    %547 = vmatprep.subr.mxu0 0.0
    %548 = vmatpush1.msra.mxu0 0.0
    %549 = vmatprep.subr.mxu0 0.0
    %550 = vmatpush1.msra.mxu0 0.0
    %551 = vmatprep.subr.mxu0 0.0
    %552 = vmatpush1.msra.mxu0 0.0
    %553 = vmatprep.subr.mxu0 0.0
    %554 = vmatpush1.msra.mxu0 0.0
    %555 = vmatprep.subr.mxu0 0.0
    %556 = vmatpush1.msra.mxu0 0.0
    %557 = vmatprep.subr.mxu0 0.0
    %558 = vmatpush1.msra.mxu0 0.0
    %559 = vmatprep.subr.mxu0 0.0
    %560 = vmatpush1.msra.mxu0 0.0
    %561 = vmatprep.subr.mxu0 0.0
    %562 = vmatpush1.msra.mxu0 0.0
    %563 = vmatprep.subr.mxu0 0.0
    %564 = vmatpush1.msra.mxu0 0.0
    %565 = vmatprep.subr.mxu0 0.0
    %566 = vmatpush1.msra.mxu0 0.0
    %567 = vmatprep.subr.mxu0 0.0
    %568 = vmatpush1.msra.mxu0 0.0
    %569 = vmatprep.subr.mxu0 0.0
    %570 = vmatpush1.msra.mxu0 0.0
    %571 = vmatprep.subr.mxu0 0.0
    %572 = vmatpush1.msra.mxu0 0.0
    %573 = vmatprep.subr.mxu0 0.0
    %574 = vmatpush1.msra.mxu0 0.0
    %575 = vmatprep.subr.mxu0 0.0
    %576 = vmatpush1.msra.mxu0 0.0
    %577 = vmatprep.subr.mxu0 0.0
    %578 = vmatpush1.msra.mxu0 0.0
    %579 = vmatprep.subr.mxu0 0.0
    %580 = vmatpush1.msra.mxu0 0.0
    %581 = vmatprep.subr.mxu0 0.0
    %582 = vmatpush1.msra.mxu0 0.0
    %583 = vmatprep.subr.mxu0 0.0
    %584 = vmatpush1.msra.mxu0 0.0
    %585 = vmatprep.subr.mxu0 0.0
    %586 = vmatpush1.msra.mxu0 0.0
    %587 = vmatprep.subr.mxu0 0.0
    %588 = vmatpush1.msra.mxu0 0.0
    %589 = vmatprep.subr.mxu0 0.0
    %590 = vmatpush1.msra.mxu0 0.0
    %591 = vmatprep.subr.mxu0 0.0
    %592 = vmatpush1.msra.mxu0 0.0
    %593 = vmatprep.subr.mxu0 0.0
    %594 = vmatpush1.msra.mxu0 0.0
    %595 = vmatprep.subr.mxu0 0.0
    %596 = vmatpush1.msra.mxu0 0.0
    %597 = vmatprep.subr.mxu0 0.0
    %598 = vmatpush1.msra.mxu0 0.0
    %599 = vmatprep.subr.mxu0 0.0
    %600 = vmatpush1.msra.mxu0 0.0
    %601 = vmatprep.subr.mxu0 0.0
    %602 = vmatpush1.msra.mxu0 0.0
    %603 = vmatprep.subr.mxu0 0.0
    %604 = vmatpush1.msra.mxu0 0.0
    %605 = vmatprep.subr.mxu0 0.0
    %606 = vmatpush1.msra.mxu0 0.0
    %607 = vmatprep.subr.mxu0 0.0
    %608 = vmatpush1.msra.mxu0 0.0
    %609 = vmatprep.mubr.f32.mxu0 0.0
    %610 = vmatmul.mubr.f32.gmra.mrb[0].mxu0 %v543
    %v611 = vpop.f32.mrb[0].mxu0
    %v612 = vadd.f32 0.0, %v611
    %v613 = vpop.f32.mrb[0].mxu0
    %614 = vdwg.mxu0
    %615 = vrot.lane.b32.xlu0 %v278, 120
    %v616 = vpop.permute.xlu0 %615
    %617 = vrot.lane.b32.xlu0 %v278, 88
    %v618 = vpop.permute.xlu0 %617
    %v619 = vsel %vm289, %v616, 0
    %v621 = vsel %vm289, %v618, 0
    %623 = vmatprep.subr.mxu0 0.0
    %624 = vmatpush1.xpose.msra.mxu0 %v621
    %625 = vmatprep.subr.mxu0 0.0
    %626 = vmatpush1.xpose.msra.mxu0 0.0
    %627 = vmatprep.subr.mxu0 0.0
    %628 = vmatpush1.xpose.msra.mxu0 0.0
    %629 = vmatprep.subr.mxu0 0.0
    %630 = vmatpush1.xpose.msra.mxu0 0.0
    %631 = vmatprep.subr.mxu0 0.0
    %632 = vmatpush1.xpose.msra.mxu0 0.0
    %633 = vmatprep.subr.mxu0 0.0
    %634 = vmatpush1.xpose.msra.mxu0 0.0
    %635 = vmatprep.subr.mxu0 0.0
    %636 = vmatpush1.xpose.msra.mxu0 0.0
    %637 = vmatprep.subr.mxu0 0.0
    %638 = vmatpush1.xpose.msra.mxu0 0.0
    %639 = vmatprep.subr.mxu0 0.0
    %640 = vmatpush1.xpose.msra.mxu0 0.0
    %641 = vmatprep.subr.mxu0 0.0
    %642 = vmatpush1.xpose.msra.mxu0 0.0
    %643 = vmatprep.subr.mxu0 0.0
    %644 = vmatpush1.xpose.msra.mxu0 0.0
    %645 = vmatprep.subr.mxu0 0.0
    %646 = vmatpush1.xpose.msra.mxu0 0.0
    %647 = vmatprep.subr.mxu0 0.0
    %648 = vmatpush1.xpose.msra.mxu0 0.0
    %649 = vmatprep.subr.mxu0 0.0
    %650 = vmatpush1.xpose.msra.mxu0 0.0
    %651 = vmatprep.subr.mxu0 0.0
    %652 = vmatpush1.xpose.msra.mxu0 0.0
    %653 = vmatprep.subr.mxu0 0.0
    %654 = vmatpush1.xpose.msra.mxu0 0.0
    %655 = vmatprep.subr.mxu0 0.0
    %656 = vmatpush1.xpose.msra.mxu0 0.0
    %657 = vmatprep.subr.mxu0 0.0
    %658 = vmatpush1.xpose.msra.mxu0 0.0
    %659 = vmatprep.subr.mxu0 0.0
    %660 = vmatpush1.xpose.msra.mxu0 0.0
    %661 = vmatprep.subr.mxu0 0.0
    %662 = vmatpush1.xpose.msra.mxu0 0.0
    %663 = vmatprep.subr.mxu0 0.0
    %664 = vmatpush1.xpose.msra.mxu0 0.0
    %665 = vmatprep.subr.mxu0 0.0
    %666 = vmatpush1.xpose.msra.mxu0 0.0
    %667 = vmatprep.subr.mxu0 0.0
    %668 = vmatpush1.xpose.msra.mxu0 0.0
    %669 = vmatprep.subr.mxu0 0.0
    %670 = vmatpush1.xpose.msra.mxu0 0.0
    %671 = vmatprep.subr.mxu0 0.0
    %672 = vmatpush1.xpose.msra.mxu0 0.0
    %673 = vmatprep.subr.mxu0 0.0
    %674 = vmatpush1.xpose.msra.mxu0 0.0
    %675 = vmatprep.subr.mxu0 0.0
    %676 = vmatpush1.xpose.msra.mxu0 0.0
    %677 = vmatprep.subr.mxu0 0.0
    %678 = vmatpush1.xpose.msra.mxu0 0.0
    %679 = vmatprep.subr.mxu0 0.0
    %680 = vmatpush1.xpose.msra.mxu0 0.0
    %681 = vmatprep.subr.mxu0 0.0
    %682 = vmatpush1.xpose.msra.mxu0 0.0
    %683 = vmatprep.subr.mxu0 0.0
    %684 = vmatpush1.xpose.msra.mxu0 0.0
    %685 = vmatprep.subr.mxu0 0.0
    %686 = vmatpush1.xpose.msra.mxu0 0.0
    %687 = vmatprep.mubr.f32.mxu0 0.0
    %688 = vmatmul.mubr.f32.gmra.mrb[0].mxu0 %v619
    %v689 = vpop.f32.mrb[0].mxu0
    %v690 = vadd.f32 %v155, %v689
    %v691 = vpop.f32.mrb[0].mxu0
    %692 = vdwg.mxu0
    %693 = vrot.lane.b32.xlu0 %v283, 120
    %v694 = vpop.permute.xlu0 %693
    %695 = vrot.lane.b32.xlu0 %v283, 88
    %v696 = vpop.permute.xlu0 %695
    %v697 = vsel %vm289, %v694, 0
    %v699 = vsel %vm289, %v696, 0
    %701 = vmatprep.subr.mxu0 0.0
    %702 = vmatpush1.xpose.msra.mxu0 %v699
    %703 = vmatprep.subr.mxu0 0.0
    %704 = vmatpush1.xpose.msra.mxu0 0.0
    %705 = vmatprep.subr.mxu0 0.0
    %706 = vmatpush1.xpose.msra.mxu0 0.0
    %707 = vmatprep.subr.mxu0 0.0
    %708 = vmatpush1.xpose.msra.mxu0 0.0
    %709 = vmatprep.subr.mxu0 0.0
    %710 = vmatpush1.xpose.msra.mxu0 0.0
    %711 = vmatprep.subr.mxu0 0.0
    %712 = vmatpush1.xpose.msra.mxu0 0.0
    %713 = vmatprep.subr.mxu0 0.0
    %714 = vmatpush1.xpose.msra.mxu0 0.0
    %715 = vmatprep.subr.mxu0 0.0
    %716 = vmatpush1.xpose.msra.mxu0 0.0
    %717 = vmatprep.subr.mxu0 0.0
    %718 = vmatpush1.xpose.msra.mxu0 0.0
    %719 = vmatprep.subr.mxu0 0.0
    %720 = vmatpush1.xpose.msra.mxu0 0.0
    %721 = vmatprep.subr.mxu0 0.0
    %722 = vmatpush1.xpose.msra.mxu0 0.0
    %723 = vmatprep.subr.mxu0 0.0
    %724 = vmatpush1.xpose.msra.mxu0 0.0
    %725 = vmatprep.subr.mxu0 0.0
    %726 = vmatpush1.xpose.msra.mxu0 0.0
    %727 = vmatprep.subr.mxu0 0.0
    %728 = vmatpush1.xpose.msra.mxu0 0.0
    %729 = vmatprep.subr.mxu0 0.0
    %730 = vmatpush1.xpose.msra.mxu0 0.0
    %731 = vmatprep.subr.mxu0 0.0
    %732 = vmatpush1.xpose.msra.mxu0 0.0
    %733 = vmatprep.subr.mxu0 0.0
    %734 = vmatpush1.xpose.msra.mxu0 0.0
    %735 = vmatprep.subr.mxu0 0.0
    %736 = vmatpush1.xpose.msra.mxu0 0.0
    %737 = vmatprep.subr.mxu0 0.0
    %738 = vmatpush1.xpose.msra.mxu0 0.0
    %739 = vmatprep.subr.mxu0 0.0
    %740 = vmatpush1.xpose.msra.mxu0 0.0
    %741 = vmatprep.subr.mxu0 0.0
    %742 = vmatpush1.xpose.msra.mxu0 0.0
    %743 = vmatprep.subr.mxu0 0.0
    %744 = vmatpush1.xpose.msra.mxu0 0.0
    %745 = vmatprep.subr.mxu0 0.0
    %746 = vmatpush1.xpose.msra.mxu0 0.0
    %747 = vmatprep.subr.mxu0 0.0
    %748 = vmatpush1.xpose.msra.mxu0 0.0
    %749 = vmatprep.subr.mxu0 0.0
    %750 = vmatpush1.xpose.msra.mxu0 0.0
    %751 = vmatprep.subr.mxu0 0.0
    %752 = vmatpush1.xpose.msra.mxu0 0.0
    %753 = vmatprep.subr.mxu0 0.0
    %754 = vmatpush1.xpose.msra.mxu0 0.0
    %755 = vmatprep.subr.mxu0 0.0
    %756 = vmatpush1.xpose.msra.mxu0 0.0
    %757 = vmatprep.subr.mxu0 0.0
    %758 = vmatpush1.xpose.msra.mxu0 0.0
    %759 = vmatprep.subr.mxu0 0.0
    %760 = vmatpush1.xpose.msra.mxu0 0.0
    %761 = vmatprep.subr.mxu0 0.0
    %762 = vmatpush1.xpose.msra.mxu0 0.0
    %763 = vmatprep.subr.mxu0 0.0
    %764 = vmatpush1.xpose.msra.mxu0 0.0
    %765 = vmatprep.mubr.f32.mxu0 0.0
    %766 = vmatmul.mubr.f32.gmra.mrb[0].mxu0 %v697
    %v767 = vpop.f32.mrb[0].mxu0
    %v768 = vadd.f32 %v155, %v767
    %v769 = vpop.f32.mrb[0].mxu0
    %770 = vdwg.mxu0
    %v771 = vsel %vm289, %v690, -inf
    %772 = vmax.xlane.f32.xlu0 %v771
    %v773 = vpop.xlane.xlu0 %772
    %v774 = vsel %vm289, %v768, -inf
    %775 = vmax.xlane.f32.xlu0 %v774
    %v776 = vpop.xlane.xlu0 %775
    %v777 = vsub.f32 %v690, %v773
    %v778 = vsub.f32 %v768, %v776
    %v779 = vmul.f32 %v777, 1.442695
    %v780 = vpow.pop %v779
    %v781 = vmul.f32 %v778, 1.442695
    %v782 = vpow.pop %v781
    %v783 = vsel %vm289, %v780, 0.0
    %784 = vadd.xlane.f32.xlu0 %v783
    %v785 = vpop.xlane.xlu0 %784
    %v786 = vsel %vm289, %v782, 0.0
    %787 = vadd.xlane.f32.xlu0 %v786
    %v788 = vpop.xlane.xlu0 %787
    %v789 = vrcp.pop %v785
    %v790 = vrcp.pop %v788
    %v791 = vmul.f32 %v780, %v789
    %v792 = vmul.f32 %v782, %v790
    %793 = vrot.lane.b32.xlu0 %v278, 56
    %v794 = vpop.permute.xlu0 %793
    %v797 = vsel %vm289, %v791, 0
    %799 = vmatprep.subr.mxu0 0.0
    %800 = vmatpush1.msra.mxu0 %v794
    %801 = vmatprep.subr.mxu0 0.0
    %802 = vmatpush1.msra.mxu0 0.0
    %803 = vmatprep.subr.mxu0 0.0
    %804 = vmatpush1.msra.mxu0 0.0
    %805 = vmatprep.subr.mxu0 0.0
    %806 = vmatpush1.msra.mxu0 0.0
    %807 = vmatprep.subr.mxu0 0.0
    %808 = vmatpush1.msra.mxu0 0.0
    %809 = vmatprep.subr.mxu0 0.0
    %810 = vmatpush1.msra.mxu0 0.0
    %811 = vmatprep.subr.mxu0 0.0
    %812 = vmatpush1.msra.mxu0 0.0
    %813 = vmatprep.subr.mxu0 0.0
    %814 = vmatpush1.msra.mxu0 0.0
    %815 = vmatprep.subr.mxu0 0.0
    %816 = vmatpush1.msra.mxu0 0.0
    %817 = vmatprep.subr.mxu0 0.0
    %818 = vmatpush1.msra.mxu0 0.0
    %819 = vmatprep.subr.mxu0 0.0
    %820 = vmatpush1.msra.mxu0 0.0
    %821 = vmatprep.subr.mxu0 0.0
    %822 = vmatpush1.msra.mxu0 0.0
    %823 = vmatprep.subr.mxu0 0.0
    %824 = vmatpush1.msra.mxu0 0.0
    %825 = vmatprep.subr.mxu0 0.0
    %826 = vmatpush1.msra.mxu0 0.0
    %827 = vmatprep.subr.mxu0 0.0
    %828 = vmatpush1.msra.mxu0 0.0
    %829 = vmatprep.subr.mxu0 0.0
    %830 = vmatpush1.msra.mxu0 0.0
    %831 = vmatprep.subr.mxu0 0.0
    %832 = vmatpush1.msra.mxu0 0.0
    %833 = vmatprep.subr.mxu0 0.0
    %834 = vmatpush1.msra.mxu0 0.0
    %835 = vmatprep.subr.mxu0 0.0
    %836 = vmatpush1.msra.mxu0 0.0
    %837 = vmatprep.subr.mxu0 0.0
    %838 = vmatpush1.msra.mxu0 0.0
    %839 = vmatprep.subr.mxu0 0.0
    %840 = vmatpush1.msra.mxu0 0.0
    %841 = vmatprep.subr.mxu0 0.0
    %842 = vmatpush1.msra.mxu0 0.0
    %843 = vmatprep.subr.mxu0 0.0
    %844 = vmatpush1.msra.mxu0 0.0
    %845 = vmatprep.subr.mxu0 0.0
    %846 = vmatpush1.msra.mxu0 0.0
    %847 = vmatprep.subr.mxu0 0.0
    %848 = vmatpush1.msra.mxu0 0.0
    %849 = vmatprep.subr.mxu0 0.0
    %850 = vmatpush1.msra.mxu0 0.0
    %851 = vmatprep.subr.mxu0 0.0
    %852 = vmatpush1.msra.mxu0 0.0
    %853 = vmatprep.subr.mxu0 0.0
    %854 = vmatpush1.msra.mxu0 0.0
    %855 = vmatprep.subr.mxu0 0.0
    %856 = vmatpush1.msra.mxu0 0.0
    %857 = vmatprep.subr.mxu0 0.0
    %858 = vmatpush1.msra.mxu0 0.0
    %859 = vmatprep.subr.mxu0 0.0
    %860 = vmatpush1.msra.mxu0 0.0
    %861 = vmatprep.subr.mxu0 0.0
    %862 = vmatpush1.msra.mxu0 0.0
    %863 = vmatprep.mubr.f32.mxu0 0.0
    %864 = vmatmul.mubr.f32.gmra.mrb[0].mxu0 %v797
    %v865 = vpop.f32.mrb[0].mxu0
    %v866 = vadd.f32 0.0, %v865
    %v867 = vpop.f32.mrb[0].mxu0
    %868 = vdwg.mxu0
    %869 = vrot.lane.b32.xlu0 %v283, 56
    %v870 = vpop.permute.xlu0 %869
    %v873 = vsel %vm289, %v792, 0
    %875 = vmatprep.subr.mxu0 0.0
    %876 = vmatpush1.msra.mxu0 %v870
    %877 = vmatprep.subr.mxu0 0.0
    %878 = vmatpush1.msra.mxu0 0.0
    %879 = vmatprep.subr.mxu0 0.0
    %880 = vmatpush1.msra.mxu0 0.0
    %881 = vmatprep.subr.mxu0 0.0
    %882 = vmatpush1.msra.mxu0 0.0
    %883 = vmatprep.subr.mxu0 0.0
    %884 = vmatpush1.msra.mxu0 0.0
    %885 = vmatprep.subr.mxu0 0.0
    %886 = vmatpush1.msra.mxu0 0.0
    %887 = vmatprep.subr.mxu0 0.0
    %888 = vmatpush1.msra.mxu0 0.0
    %889 = vmatprep.subr.mxu0 0.0
    %890 = vmatpush1.msra.mxu0 0.0
    %891 = vmatprep.subr.mxu0 0.0
    %892 = vmatpush1.msra.mxu0 0.0
    %893 = vmatprep.subr.mxu0 0.0
    %894 = vmatpush1.msra.mxu0 0.0
    %895 = vmatprep.subr.mxu0 0.0
    %896 = vmatpush1.msra.mxu0 0.0
    %897 = vmatprep.subr.mxu0 0.0
    %898 = vmatpush1.msra.mxu0 0.0
    %899 = vmatprep.subr.mxu0 0.0
    %900 = vmatpush1.msra.mxu0 0.0
    %901 = vmatprep.subr.mxu0 0.0
    %902 = vmatpush1.msra.mxu0 0.0
    %903 = vmatprep.subr.mxu0 0.0
    %904 = vmatpush1.msra.mxu0 0.0
    %905 = vmatprep.subr.mxu0 0.0
    %906 = vmatpush1.msra.mxu0 0.0
    %907 = vmatprep.subr.mxu0 0.0
    %908 = vmatpush1.msra.mxu0 0.0
    %909 = vmatprep.subr.mxu0 0.0
    %910 = vmatpush1.msra.mxu0 0.0
    %911 = vmatprep.subr.mxu0 0.0
    %912 = vmatpush1.msra.mxu0 0.0
    %913 = vmatprep.subr.mxu0 0.0
    %914 = vmatpush1.msra.mxu0 0.0
    %915 = vmatprep.subr.mxu0 0.0
    %916 = vmatpush1.msra.mxu0 0.0
    %917 = vmatprep.subr.mxu0 0.0
    %918 = vmatpush1.msra.mxu0 0.0
    %919 = vmatprep.subr.mxu0 0.0
    %920 = vmatpush1.msra.mxu0 0.0
    %921 = vmatprep.subr.mxu0 0.0
    %922 = vmatpush1.msra.mxu0 0.0
    %923 = vmatprep.subr.mxu0 0.0
    %924 = vmatpush1.msra.mxu0 0.0
    %925 = vmatprep.subr.mxu0 0.0
    %926 = vmatpush1.msra.mxu0 0.0
    %927 = vmatprep.subr.mxu0 0.0
    %928 = vmatpush1.msra.mxu0 0.0
    %929 = vmatprep.subr.mxu0 0.0
    %930 = vmatpush1.msra.mxu0 0.0
    %931 = vmatprep.subr.mxu0 0.0
    %932 = vmatpush1.msra.mxu0 0.0
    %933 = vmatprep.subr.mxu0 0.0
    %934 = vmatpush1.msra.mxu0 0.0
    %935 = vmatprep.subr.mxu0 0.0
    %936 = vmatpush1.msra.mxu0 0.0
    %937 = vmatprep.subr.mxu0 0.0
    %938 = vmatpush1.msra.mxu0 0.0
    %939 = vmatprep.mubr.f32.mxu0 0.0
    %940 = vmatmul.mubr.f32.gmra.mrb[0].mxu0 %v873
    %v941 = vpop.f32.mrb[0].mxu0
    %v942 = vadd.f32 0.0, %v941
    %v943 = vpop.f32.mrb[0].mxu0
    %944 = vdwg.mxu0
    %945 = vrot.lane.b32.xlu0 %v278, 112
    %v946 = vpop.permute.xlu0 %945
    %947 = vrot.lane.b32.xlu0 %v278, 80
    %v948 = vpop.permute.xlu0 %947
    %v949 = vsel %vm289, %v946, 0
    %v951 = vsel %vm289, %v948, 0
    %953 = vmatprep.subr.mxu0 0.0
    %954 = vmatpush1.xpose.msra.mxu0 %v951
    %955 = vmatprep.subr.mxu0 0.0
    %956 = vmatpush1.xpose.msra.mxu0 0.0
    %957 = vmatprep.subr.mxu0 0.0
    %958 = vmatpush1.xpose.msra.mxu0 0.0
    %959 = vmatprep.subr.mxu0 0.0
    %960 = vmatpush1.xpose.msra.mxu0 0.0
    %961 = vmatprep.subr.mxu0 0.0
    %962 = vmatpush1.xpose.msra.mxu0 0.0
    %963 = vmatprep.subr.mxu0 0.0
    %964 = vmatpush1.xpose.msra.mxu0 0.0
    %965 = vmatprep.subr.mxu0 0.0
    %966 = vmatpush1.xpose.msra.mxu0 0.0
    %967 = vmatprep.subr.mxu0 0.0
    %968 = vmatpush1.xpose.msra.mxu0 0.0
    %969 = vmatprep.subr.mxu0 0.0
    %970 = vmatpush1.xpose.msra.mxu0 0.0
    %971 = vmatprep.subr.mxu0 0.0
    %972 = vmatpush1.xpose.msra.mxu0 0.0
    %973 = vmatprep.subr.mxu0 0.0
    %974 = vmatpush1.xpose.msra.mxu0 0.0
    %975 = vmatprep.subr.mxu0 0.0
    %976 = vmatpush1.xpose.msra.mxu0 0.0
    %977 = vmatprep.subr.mxu0 0.0
    %978 = vmatpush1.xpose.msra.mxu0 0.0
    %979 = vmatprep.subr.mxu0 0.0
    %980 = vmatpush1.xpose.msra.mxu0 0.0
    %981 = vmatprep.subr.mxu0 0.0
    %982 = vmatpush1.xpose.msra.mxu0 0.0
    %983 = vmatprep.subr.mxu0 0.0
    %984 = vmatpush1.xpose.msra.mxu0 0.0
    %985 = vmatprep.subr.mxu0 0.0
    %986 = vmatpush1.xpose.msra.mxu0 0.0
    %987 = vmatprep.subr.mxu0 0.0
    %988 = vmatpush1.xpose.msra.mxu0 0.0
    %989 = vmatprep.subr.mxu0 0.0
    %990 = vmatpush1.xpose.msra.mxu0 0.0
    %991 = vmatprep.subr.mxu0 0.0
    %992 = vmatpush1.xpose.msra.mxu0 0.0
    %993 = vmatprep.subr.mxu0 0.0
    %994 = vmatpush1.xpose.msra.mxu0 0.0
    %995 = vmatprep.subr.mxu0 0.0
    %996 = vmatpush1.xpose.msra.mxu0 0.0
    %997 = vmatprep.subr.mxu0 0.0
    %998 = vmatpush1.xpose.msra.mxu0 0.0
    %999 = vmatprep.subr.mxu0 0.0
    %1000 = vmatpush1.xpose.msra.mxu0 0.0
    %1001 = vmatprep.subr.mxu0 0.0
    %1002 = vmatpush1.xpose.msra.mxu0 0.0
    %1003 = vmatprep.subr.mxu0 0.0
    %1004 = vmatpush1.xpose.msra.mxu0 0.0
    %1005 = vmatprep.subr.mxu0 0.0
    %1006 = vmatpush1.xpose.msra.mxu0 0.0
    %1007 = vmatprep.subr.mxu0 0.0
    %1008 = vmatpush1.xpose.msra.mxu0 0.0
    %1009 = vmatprep.subr.mxu0 0.0
    %1010 = vmatpush1.xpose.msra.mxu0 0.0
    %1011 = vmatprep.subr.mxu0 0.0
    %1012 = vmatpush1.xpose.msra.mxu0 0.0
    %1013 = vmatprep.subr.mxu0 0.0
    %1014 = vmatpush1.xpose.msra.mxu0 0.0
    %1015 = vmatprep.subr.mxu0 0.0
    %1016 = vmatpush1.xpose.msra.mxu0 0.0
    %1017 = vmatprep.mubr.f32.mxu0 0.0
    %1018 = vmatmul.mubr.f32.gmra.mrb[0].mxu0 %v949
    %v1019 = vpop.f32.mrb[0].mxu0
    %v1020 = vadd.f32 %v155, %v1019
    %v1021 = vpop.f32.mrb[0].mxu0
    %1022 = vdwg.mxu0
    %1023 = vrot.lane.b32.xlu0 %v283, 112
    %v1024 = vpop.permute.xlu0 %1023
    %1025 = vrot.lane.b32.xlu0 %v283, 80
    %v1026 = vpop.permute.xlu0 %1025
    %v1027 = vsel %vm289, %v1024, 0
    %v1029 = vsel %vm289, %v1026, 0
    %1031 = vmatprep.subr.mxu0 0.0
    %1032 = vmatpush1.xpose.msra.mxu0 %v1029
    %1033 = vmatprep.subr.mxu0 0.0
    %1034 = vmatpush1.xpose.msra.mxu0 0.0
    %1035 = vmatprep.subr.mxu0 0.0
    %1036 = vmatpush1.xpose.msra.mxu0 0.0
    %1037 = vmatprep.subr.mxu0 0.0
    %1038 = vmatpush1.xpose.msra.mxu0 0.0
    %1039 = vmatprep.subr.mxu0 0.0
    %1040 = vmatpush1.xpose.msra.mxu0 0.0
    %1041 = vmatprep.subr.mxu0 0.0
    %1042 = vmatpush1.xpose.msra.mxu0 0.0
    %1043 = vmatprep.subr.mxu0 0.0
    %1044 = vmatpush1.xpose.msra.mxu0 0.0
    %1045 = vmatprep.subr.mxu0 0.0
    %1046 = vmatpush1.xpose.msra.mxu0 0.0
    %1047 = vmatprep.subr.mxu0 0.0
    %1048 = vmatpush1.xpose.msra.mxu0 0.0
    %1049 = vmatprep.subr.mxu0 0.0
    %1050 = vmatpush1.xpose.msra.mxu0 0.0
    %1051 = vmatprep.subr.mxu0 0.0
    %1052 = vmatpush1.xpose.msra.mxu0 0.0
    %1053 = vmatprep.subr.mxu0 0.0
    %1054 = vmatpush1.xpose.msra.mxu0 0.0
    %1055 = vmatprep.subr.mxu0 0.0
    %1056 = vmatpush1.xpose.msra.mxu0 0.0
    %1057 = vmatprep.subr.mxu0 0.0
    %1058 = vmatpush1.xpose.msra.mxu0 0.0
    %1059 = vmatprep.subr.mxu0 0.0
    %1060 = vmatpush1.xpose.msra.mxu0 0.0
    %1061 = vmatprep.subr.mxu0 0.0
    %1062 = vmatpush1.xpose.msra.mxu0 0.0
    %1063 = vmatprep.subr.mxu0 0.0
    %1064 = vmatpush1.xpose.msra.mxu0 0.0
    %1065 = vmatprep.subr.mxu0 0.0
    %1066 = vmatpush1.xpose.msra.mxu0 0.0
    %1067 = vmatprep.subr.mxu0 0.0
    %1068 = vmatpush1.xpose.msra.mxu0 0.0
    %1069 = vmatprep.subr.mxu0 0.0
    %1070 = vmatpush1.xpose.msra.mxu0 0.0
    %1071 = vmatprep.subr.mxu0 0.0
    %1072 = vmatpush1.xpose.msra.mxu0 0.0
    %1073 = vmatprep.subr.mxu0 0.0
    %1074 = vmatpush1.xpose.msra.mxu0 0.0
    %1075 = vmatprep.subr.mxu0 0.0
    %1076 = vmatpush1.xpose.msra.mxu0 0.0
    %1077 = vmatprep.subr.mxu0 0.0
    %1078 = vmatpush1.xpose.msra.mxu0 0.0
    %1079 = vmatprep.subr.mxu0 0.0
    %1080 = vmatpush1.xpose.msra.mxu0 0.0
    %1081 = vmatprep.subr.mxu0 0.0
    %1082 = vmatpush1.xpose.msra.mxu0 0.0
    %1083 = vmatprep.subr.mxu0 0.0
    %1084 = vmatpush1.xpose.msra.mxu0 0.0
    %1085 = vmatprep.subr.mxu0 0.0
    %1086 = vmatpush1.xpose.msra.mxu0 0.0
    %1087 = vmatprep.subr.mxu0 0.0
    %1088 = vmatpush1.xpose.msra.mxu0 0.0
    %1089 = vmatprep.subr.mxu0 0.0
    %1090 = vmatpush1.xpose.msra.mxu0 0.0
    %1091 = vmatprep.subr.mxu0 0.0
    %1092 = vmatpush1.xpose.msra.mxu0 0.0
    %1093 = vmatprep.subr.mxu0 0.0
    %1094 = vmatpush1.xpose.msra.mxu0 0.0
    %1095 = vmatprep.mubr.f32.mxu0 0.0
    %1096 = vmatmul.mubr.f32.gmra.mrb[0].mxu0 %v1027
    %v1097 = vpop.f32.mrb[0].mxu0
    %v1098 = vadd.f32 %v155, %v1097
    %v1099 = vpop.f32.mrb[0].mxu0
    %1100 = vdwg.mxu0
    %v1101 = vsel %vm289, %v1020, -inf
    %1102 = vmax.xlane.f32.xlu0 %v1101
    %v1103 = vpop.xlane.xlu0 %1102
    %v1104 = vsel %vm289, %v1098, -inf
    %1105 = vmax.xlane.f32.xlu0 %v1104
    %v1106 = vpop.xlane.xlu0 %1105
    %v1107 = vsub.f32 %v1020, %v1103
    %v1108 = vsub.f32 %v1098, %v1106
    %v1109 = vmul.f32 %v1107, 1.442695
    %v1110 = vpow.pop %v1109
    %v1111 = vmul.f32 %v1108, 1.442695
    %v1112 = vpow.pop %v1111
    %v1113 = vsel %vm289, %v1110, 0.0
    %1114 = vadd.xlane.f32.xlu0 %v1113
    %v1115 = vpop.xlane.xlu0 %1114
    %v1116 = vsel %vm289, %v1112, 0.0
    %1117 = vadd.xlane.f32.xlu0 %v1116
    %v1118 = vpop.xlane.xlu0 %1117
    %v1119 = vrcp.pop %v1115
    %v1120 = vrcp.pop %v1118
    %v1121 = vmul.f32 %v1110, %v1119
    %v1122 = vmul.f32 %v1112, %v1120
    %1123 = vrot.lane.b32.xlu0 %v278, 48
    %v1124 = vpop.permute.xlu0 %1123
    %v1127 = vsel %vm289, %v1121, 0
    %1129 = vmatprep.subr.mxu0 0.0
    %1130 = vmatpush1.msra.mxu0 %v1124
    %1131 = vmatprep.subr.mxu0 0.0
    %1132 = vmatpush1.msra.mxu0 0.0
    %1133 = vmatprep.subr.mxu0 0.0
    %1134 = vmatpush1.msra.mxu0 0.0
    %1135 = vmatprep.subr.mxu0 0.0
    %1136 = vmatpush1.msra.mxu0 0.0
    %1137 = vmatprep.subr.mxu0 0.0
    %1138 = vmatpush1.msra.mxu0 0.0
    %1139 = vmatprep.subr.mxu0 0.0
    %1140 = vmatpush1.msra.mxu0 0.0
    %1141 = vmatprep.subr.mxu0 0.0
    %1142 = vmatpush1.msra.mxu0 0.0
    %1143 = vmatprep.subr.mxu0 0.0
    %1144 = vmatpush1.msra.mxu0 0.0
    %1145 = vmatprep.subr.mxu0 0.0
    %1146 = vmatpush1.msra.mxu0 0.0
    %1147 = vmatprep.subr.mxu0 0.0
    %1148 = vmatpush1.msra.mxu0 0.0
    %1149 = vmatprep.subr.mxu0 0.0
    %1150 = vmatpush1.msra.mxu0 0.0
    %1151 = vmatprep.subr.mxu0 0.0
    %1152 = vmatpush1.msra.mxu0 0.0
    %1153 = vmatprep.subr.mxu0 0.0
    %1154 = vmatpush1.msra.mxu0 0.0
    %1155 = vmatprep.subr.mxu0 0.0
    %1156 = vmatpush1.msra.mxu0 0.0
    %1157 = vmatprep.subr.mxu0 0.0
    %1158 = vmatpush1.msra.mxu0 0.0
    %1159 = vmatprep.subr.mxu0 0.0
    %1160 = vmatpush1.msra.mxu0 0.0
    %1161 = vmatprep.subr.mxu0 0.0
    %1162 = vmatpush1.msra.mxu0 0.0
    %1163 = vmatprep.subr.mxu0 0.0
    %1164 = vmatpush1.msra.mxu0 0.0
    %1165 = vmatprep.subr.mxu0 0.0
    %1166 = vmatpush1.msra.mxu0 0.0
    %1167 = vmatprep.subr.mxu0 0.0
    %1168 = vmatpush1.msra.mxu0 0.0
    %1169 = vmatprep.subr.mxu0 0.0
    %1170 = vmatpush1.msra.mxu0 0.0
    %1171 = vmatprep.subr.mxu0 0.0
    %1172 = vmatpush1.msra.mxu0 0.0
    %1173 = vmatprep.subr.mxu0 0.0
    %1174 = vmatpush1.msra.mxu0 0.0
    %1175 = vmatprep.subr.mxu0 0.0
    %1176 = vmatpush1.msra.mxu0 0.0
    %1177 = vmatprep.subr.mxu0 0.0
    %1178 = vmatpush1.msra.mxu0 0.0
    %1179 = vmatprep.subr.mxu0 0.0
    %1180 = vmatpush1.msra.mxu0 0.0
    %1181 = vmatprep.subr.mxu0 0.0
    %1182 = vmatpush1.msra.mxu0 0.0
    %1183 = vmatprep.subr.mxu0 0.0
    %1184 = vmatpush1.msra.mxu0 0.0
    %1185 = vmatprep.subr.mxu0 0.0
    %1186 = vmatpush1.msra.mxu0 0.0
    %1187 = vmatprep.subr.mxu0 0.0
    %1188 = vmatpush1.msra.mxu0 0.0
    %1189 = vmatprep.subr.mxu0 0.0
    %1190 = vmatpush1.msra.mxu0 0.0
    %1191 = vmatprep.subr.mxu0 0.0
    %1192 = vmatpush1.msra.mxu0 0.0
    %1193 = vmatprep.mubr.f32.mxu0 0.0
    %1194 = vmatmul.mubr.f32.gmra.mrb[0].mxu0 %v1127
    %v1195 = vpop.f32.mrb[0].mxu0
    %v1196 = vadd.f32 0.0, %v1195
    %v1197 = vpop.f32.mrb[0].mxu0
    %1198 = vdwg.mxu0
    %1199 = vrot.lane.b32.xlu0 %v283, 48
    %v1200 = vpop.permute.xlu0 %1199
    %v1203 = vsel %vm289, %v1122, 0
    %1205 = vmatprep.subr.mxu0 0.0
    %1206 = vmatpush1.msra.mxu0 %v1200
    %1207 = vmatprep.subr.mxu0 0.0
    %1208 = vmatpush1.msra.mxu0 0.0
    %1209 = vmatprep.subr.mxu0 0.0
    %1210 = vmatpush1.msra.mxu0 0.0
    %1211 = vmatprep.subr.mxu0 0.0
    %1212 = vmatpush1.msra.mxu0 0.0
    %1213 = vmatprep.subr.mxu0 0.0
    %1214 = vmatpush1.msra.mxu0 0.0
    %1215 = vmatprep.subr.mxu0 0.0
    %1216 = vmatpush1.msra.mxu0 0.0
    %1217 = vmatprep.subr.mxu0 0.0
    %1218 = vmatpush1.msra.mxu0 0.0
    %1219 = vmatprep.subr.mxu0 0.0
    %1220 = vmatpush1.msra.mxu0 0.0
    %1221 = vmatprep.subr.mxu0 0.0
    %1222 = vmatpush1.msra.mxu0 0.0
    %1223 = vmatprep.subr.mxu0 0.0
    %1224 = vmatpush1.msra.mxu0 0.0
    %1225 = vmatprep.subr.mxu0 0.0
    %1226 = vmatpush1.msra.mxu0 0.0
    %1227 = vmatprep.subr.mxu0 0.0
    %1228 = vmatpush1.msra.mxu0 0.0
    %1229 = vmatprep.subr.mxu0 0.0
    %1230 = vmatpush1.msra.mxu0 0.0
    %1231 = vmatprep.subr.mxu0 0.0
    %1232 = vmatpush1.msra.mxu0 0.0
    %1233 = vmatprep.subr.mxu0 0.0
    %1234 = vmatpush1.msra.mxu0 0.0
    %1235 = vmatprep.subr.mxu0 0.0
    %1236 = vmatpush1.msra.mxu0 0.0
    %1237 = vmatprep.subr.mxu0 0.0
    %1238 = vmatpush1.msra.mxu0 0.0
    %1239 = vmatprep.subr.mxu0 0.0
    %1240 = vmatpush1.msra.mxu0 0.0
    %1241 = vmatprep.subr.mxu0 0.0
    %1242 = vmatpush1.msra.mxu0 0.0
    %1243 = vmatprep.subr.mxu0 0.0
    %1244 = vmatpush1.msra.mxu0 0.0
    %1245 = vmatprep.subr.mxu0 0.0
    %1246 = vmatpush1.msra.mxu0 0.0
    %1247 = vmatprep.subr.mxu0 0.0
    %1248 = vmatpush1.msra.mxu0 0.0
    %1249 = vmatprep.subr.mxu0 0.0
    %1250 = vmatpush1.msra.mxu0 0.0
    %1251 = vmatprep.subr.mxu0 0.0
    %1252 = vmatpush1.msra.mxu0 0.0
    %1253 = vmatprep.subr.mxu0 0.0
    %1254 = vmatpush1.msra.mxu0 0.0
    %1255 = vmatprep.subr.mxu0 0.0
    %1256 = vmatpush1.msra.mxu0 0.0
    %1257 = vmatprep.subr.mxu0 0.0
    %1258 = vmatpush1.msra.mxu0 0.0
    %1259 = vmatprep.subr.mxu0 0.0
    %1260 = vmatpush1.msra.mxu0 0.0
    %1261 = vmatprep.subr.mxu0 0.0
    %1262 = vmatpush1.msra.mxu0 0.0
    %1263 = vmatprep.subr.mxu0 0.0
    %1264 = vmatpush1.msra.mxu0 0.0
    %1265 = vmatprep.subr.mxu0 0.0
    %1266 = vmatpush1.msra.mxu0 0.0
    %1267 = vmatprep.subr.mxu0 0.0
    %1268 = vmatpush1.msra.mxu0 0.0
    %1269 = vmatprep.mubr.f32.mxu0 0.0
    %1270 = vmatmul.mubr.f32.gmra.mrb[0].mxu0 %v1203
    %v1271 = vpop.f32.mrb[0].mxu0
    %v1272 = vadd.f32 0.0, %v1271
    %v1273 = vpop.f32.mrb[0].mxu0
    %1274 = vdwg.mxu0
    %1275 = vrot.lane.b32.xlu0 %v278, 104
    %v1276 = vpop.permute.xlu0 %1275
    %1277 = vrot.lane.b32.xlu0 %v278, 72
    %v1278 = vpop.permute.xlu0 %1277
    %v1279 = vsel %vm289, %v1276, 0
    %v1281 = vsel %vm289, %v1278, 0
    %1283 = vmatprep.subr.mxu0 0.0
    %1284 = vmatpush1.xpose.msra.mxu0 %v1281
    %1285 = vmatprep.subr.mxu0 0.0
    %1286 = vmatpush1.xpose.msra.mxu0 0.0
    %1287 = vmatprep.subr.mxu0 0.0
    %1288 = vmatpush1.xpose.msra.mxu0 0.0
    %1289 = vmatprep.subr.mxu0 0.0
    %1290 = vmatpush1.xpose.msra.mxu0 0.0
    %1291 = vmatprep.subr.mxu0 0.0
    %1292 = vmatpush1.xpose.msra.mxu0 0.0
    %1293 = vmatprep.subr.mxu0 0.0
    %1294 = vmatpush1.xpose.msra.mxu0 0.0
    %1295 = vmatprep.subr.mxu0 0.0
    %1296 = vmatpush1.xpose.msra.mxu0 0.0
    %1297 = vmatprep.subr.mxu0 0.0
    %1298 = vmatpush1.xpose.msra.mxu0 0.0
    %1299 = vmatprep.subr.mxu0 0.0
    %1300 = vmatpush1.xpose.msra.mxu0 0.0
    %1301 = vmatprep.subr.mxu0 0.0
    %1302 = vmatpush1.xpose.msra.mxu0 0.0
    %1303 = vmatprep.subr.mxu0 0.0
    %1304 = vmatpush1.xpose.msra.mxu0 0.0
    %1305 = vmatprep.subr.mxu0 0.0
    %1306 = vmatpush1.xpose.msra.mxu0 0.0
    %1307 = vmatprep.subr.mxu0 0.0
    %1308 = vmatpush1.xpose.msra.mxu0 0.0
    %1309 = vmatprep.subr.mxu0 0.0
    %1310 = vmatpush1.xpose.msra.mxu0 0.0
    %1311 = vmatprep.subr.mxu0 0.0
    %1312 = vmatpush1.xpose.msra.mxu0 0.0
    %1313 = vmatprep.subr.mxu0 0.0
    %1314 = vmatpush1.xpose.msra.mxu0 0.0
    %1315 = vmatprep.subr.mxu0 0.0
    %1316 = vmatpush1.xpose.msra.mxu0 0.0
    %1317 = vmatprep.subr.mxu0 0.0
    %1318 = vmatpush1.xpose.msra.mxu0 0.0
    %1319 = vmatprep.subr.mxu0 0.0
    %1320 = vmatpush1.xpose.msra.mxu0 0.0
    %1321 = vmatprep.subr.mxu0 0.0
    %1322 = vmatpush1.xpose.msra.mxu0 0.0
    %1323 = vmatprep.subr.mxu0 0.0
    %1324 = vmatpush1.xpose.msra.mxu0 0.0
    %1325 = vmatprep.subr.mxu0 0.0
    %1326 = vmatpush1.xpose.msra.mxu0 0.0
    %1327 = vmatprep.subr.mxu0 0.0
    %1328 = vmatpush1.xpose.msra.mxu0 0.0
    %1329 = vmatprep.subr.mxu0 0.0
    %1330 = vmatpush1.xpose.msra.mxu0 0.0
    %1331 = vmatprep.subr.mxu0 0.0
    %1332 = vmatpush1.xpose.msra.mxu0 0.0
    %1333 = vmatprep.subr.mxu0 0.0
    %1334 = vmatpush1.xpose.msra.mxu0 0.0
    %1335 = vmatprep.subr.mxu0 0.0
    %1336 = vmatpush1.xpose.msra.mxu0 0.0
    %1337 = vmatprep.subr.mxu0 0.0
    %1338 = vmatpush1.xpose.msra.mxu0 0.0
    %1339 = vmatprep.subr.mxu0 0.0
    %1340 = vmatpush1.xpose.msra.mxu0 0.0
    %1341 = vmatprep.subr.mxu0 0.0
    %1342 = vmatpush1.xpose.msra.mxu0 0.0
    %1343 = vmatprep.subr.mxu0 0.0
    %1344 = vmatpush1.xpose.msra.mxu0 0.0
    %1345 = vmatprep.subr.mxu0 0.0
    %1346 = vmatpush1.xpose.msra.mxu0 0.0
    %1347 = vmatprep.mubr.f32.mxu0 0.0
    %1348 = vmatmul.mubr.f32.gmra.mrb[0].mxu0 %v1279
    %v1349 = vpop.f32.mrb[0].mxu0
    %v1350 = vadd.f32 %v155, %v1349
    %v1351 = vpop.f32.mrb[0].mxu0
    %1352 = vdwg.mxu0
    %1353 = vrot.lane.b32.xlu0 %v283, 104
    %v1354 = vpop.permute.xlu0 %1353
    %1355 = vrot.lane.b32.xlu0 %v283, 72
    %v1356 = vpop.permute.xlu0 %1355
    %v1357 = vsel %vm289, %v1354, 0
    %v1359 = vsel %vm289, %v1356, 0
    %1361 = vmatprep.subr.mxu0 0.0
    %1362 = vmatpush1.xpose.msra.mxu0 %v1359
    %1363 = vmatprep.subr.mxu0 0.0
    %1364 = vmatpush1.xpose.msra.mxu0 0.0
    %1365 = vmatprep.subr.mxu0 0.0
    %1366 = vmatpush1.xpose.msra.mxu0 0.0
    %1367 = vmatprep.subr.mxu0 0.0
    %1368 = vmatpush1.xpose.msra.mxu0 0.0
    %1369 = vmatprep.subr.mxu0 0.0
    %1370 = vmatpush1.xpose.msra.mxu0 0.0
    %1371 = vmatprep.subr.mxu0 0.0
    %1372 = vmatpush1.xpose.msra.mxu0 0.0
    %1373 = vmatprep.subr.mxu0 0.0
    %1374 = vmatpush1.xpose.msra.mxu0 0.0
    %1375 = vmatprep.subr.mxu0 0.0
    %1376 = vmatpush1.xpose.msra.mxu0 0.0
    %1377 = vmatprep.subr.mxu0 0.0
    %1378 = vmatpush1.xpose.msra.mxu0 0.0
    %1379 = vmatprep.subr.mxu0 0.0
    %1380 = vmatpush1.xpose.msra.mxu0 0.0
    %1381 = vmatprep.subr.mxu0 0.0
    %1382 = vmatpush1.xpose.msra.mxu0 0.0
    %1383 = vmatprep.subr.mxu0 0.0
    %1384 = vmatpush1.xpose.msra.mxu0 0.0
    %1385 = vmatprep.subr.mxu0 0.0
    %1386 = vmatpush1.xpose.msra.mxu0 0.0
    %1387 = vmatprep.subr.mxu0 0.0
    %1388 = vmatpush1.xpose.msra.mxu0 0.0
    %1389 = vmatprep.subr.mxu0 0.0
    %1390 = vmatpush1.xpose.msra.mxu0 0.0
    %1391 = vmatprep.subr.mxu0 0.0
    %1392 = vmatpush1.xpose.msra.mxu0 0.0
    %1393 = vmatprep.subr.mxu0 0.0
    %1394 = vmatpush1.xpose.msra.mxu0 0.0
    %1395 = vmatprep.subr.mxu0 0.0
    %1396 = vmatpush1.xpose.msra.mxu0 0.0
    %1397 = vmatprep.subr.mxu0 0.0
    %1398 = vmatpush1.xpose.msra.mxu0 0.0
    %1399 = vmatprep.subr.mxu0 0.0
    %1400 = vmatpush1.xpose.msra.mxu0 0.0
    %1401 = vmatprep.subr.mxu0 0.0
    %1402 = vmatpush1.xpose.msra.mxu0 0.0
    %1403 = vmatprep.subr.mxu0 0.0
    %1404 = vmatpush1.xpose.msra.mxu0 0.0
    %1405 = vmatprep.subr.mxu0 0.0
    %1406 = vmatpush1.xpose.msra.mxu0 0.0
    %1407 = vmatprep.subr.mxu0 0.0
    %1408 = vmatpush1.xpose.msra.mxu0 0.0
    %1409 = vmatprep.subr.mxu0 0.0
    %1410 = vmatpush1.xpose.msra.mxu0 0.0
    %1411 = vmatprep.subr.mxu0 0.0
    %1412 = vmatpush1.xpose.msra.mxu0 0.0
    %1413 = vmatprep.subr.mxu0 0.0
    %1414 = vmatpush1.xpose.msra.mxu0 0.0
    %1415 = vmatprep.subr.mxu0 0.0
    %1416 = vmatpush1.xpose.msra.mxu0 0.0
    %1417 = vmatprep.subr.mxu0 0.0
    %1418 = vmatpush1.xpose.msra.mxu0 0.0
    %1419 = vmatprep.subr.mxu0 0.0
    %1420 = vmatpush1.xpose.msra.mxu0 0.0
    %1421 = vmatprep.subr.mxu0 0.0
    %1422 = vmatpush1.xpose.msra.mxu0 0.0
    %1423 = vmatprep.subr.mxu0 0.0
    %1424 = vmatpush1.xpose.msra.mxu0 0.0
    %1425 = vmatprep.mubr.f32.mxu0 0.0
    %1426 = vmatmul.mubr.f32.gmra.mrb[0].mxu0 %v1357
    %v1427 = vpop.f32.mrb[0].mxu0
    %v1428 = vadd.f32 %v155, %v1427
    %v1429 = vpop.f32.mrb[0].mxu0
    %1430 = vdwg.mxu0
    %v1431 = vsel %vm289, %v1350, -inf
    %1432 = vmax.xlane.f32.xlu0 %v1431
    %v1433 = vpop.xlane.xlu0 %1432
    %v1434 = vsel %vm289, %v1428, -inf
    %1435 = vmax.xlane.f32.xlu0 %v1434
    %v1436 = vpop.xlane.xlu0 %1435
    %v1437 = vsub.f32 %v1350, %v1433
    %v1438 = vsub.f32 %v1428, %v1436
    %v1439 = vmul.f32 %v1437, 1.442695
    %v1440 = vpow.pop %v1439
    %v1441 = vmul.f32 %v1438, 1.442695
    %v1442 = vpow.pop %v1441
    %v1443 = vsel %vm289, %v1440, 0.0
    %1444 = vadd.xlane.f32.xlu0 %v1443
    %v1445 = vpop.xlane.xlu0 %1444
    %v1446 = vsel %vm289, %v1442, 0.0
    %1447 = vadd.xlane.f32.xlu0 %v1446
    %v1448 = vpop.xlane.xlu0 %1447
    %v1449 = vrcp.pop %v1445
    %v1450 = vrcp.pop %v1448
    %v1451 = vmul.f32 %v1440, %v1449
    %v1452 = vmul.f32 %v1442, %v1450
    %1453 = vrot.lane.b32.xlu0 %v278, 40
    %v1454 = vpop.permute.xlu0 %1453
    %v1457 = vsel %vm289, %v1451, 0
    %1459 = vmatprep.subr.mxu0 0.0
    %1460 = vmatpush1.msra.mxu0 %v1454
    %1461 = vmatprep.subr.mxu0 0.0
    %1462 = vmatpush1.msra.mxu0 0.0
    %1463 = vmatprep.subr.mxu0 0.0
    %1464 = vmatpush1.msra.mxu0 0.0
    %1465 = vmatprep.subr.mxu0 0.0
    %1466 = vmatpush1.msra.mxu0 0.0
    %1467 = vmatprep.subr.mxu0 0.0
    %1468 = vmatpush1.msra.mxu0 0.0
    %1469 = vmatprep.subr.mxu0 0.0
    %1470 = vmatpush1.msra.mxu0 0.0
    %1471 = vmatprep.subr.mxu0 0.0
    %1472 = vmatpush1.msra.mxu0 0.0
    %1473 = vmatprep.subr.mxu0 0.0
    %1474 = vmatpush1.msra.mxu0 0.0
    %1475 = vmatprep.subr.mxu0 0.0
    %1476 = vmatpush1.msra.mxu0 0.0
    %1477 = vmatprep.subr.mxu0 0.0
    %1478 = vmatpush1.msra.mxu0 0.0
    %1479 = vmatprep.subr.mxu0 0.0
    %1480 = vmatpush1.msra.mxu0 0.0
    %1481 = vmatprep.subr.mxu0 0.0
    %1482 = vmatpush1.msra.mxu0 0.0
    %1483 = vmatprep.subr.mxu0 0.0
    %1484 = vmatpush1.msra.mxu0 0.0
    %1485 = vmatprep.subr.mxu0 0.0
    %1486 = vmatpush1.msra.mxu0 0.0
    %1487 = vmatprep.subr.mxu0 0.0
    %1488 = vmatpush1.msra.mxu0 0.0
    %1489 = vmatprep.subr.mxu0 0.0
    %1490 = vmatpush1.msra.mxu0 0.0
    %1491 = vmatprep.subr.mxu0 0.0
    %1492 = vmatpush1.msra.mxu0 0.0
    %1493 = vmatprep.subr.mxu0 0.0
    %1494 = vmatpush1.msra.mxu0 0.0
    %1495 = vmatprep.subr.mxu0 0.0
    %1496 = vmatpush1.msra.mxu0 0.0
    %1497 = vmatprep.subr.mxu0 0.0
    %1498 = vmatpush1.msra.mxu0 0.0
    %1499 = vmatprep.subr.mxu0 0.0
    %1500 = vmatpush1.msra.mxu0 0.0
    %1501 = vmatprep.subr.mxu0 0.0
    %1502 = vmatpush1.msra.mxu0 0.0
    %1503 = vmatprep.subr.mxu0 0.0
    %1504 = vmatpush1.msra.mxu0 0.0
    %1505 = vmatprep.subr.mxu0 0.0
    %1506 = vmatpush1.msra.mxu0 0.0
    %1507 = vmatprep.subr.mxu0 0.0
    %1508 = vmatpush1.msra.mxu0 0.0
    %1509 = vmatprep.subr.mxu0 0.0
    %1510 = vmatpush1.msra.mxu0 0.0
    %1511 = vmatprep.subr.mxu0 0.0
    %1512 = vmatpush1.msra.mxu0 0.0
    %1513 = vmatprep.subr.mxu0 0.0
    %1514 = vmatpush1.msra.mxu0 0.0
    %1515 = vmatprep.subr.mxu0 0.0
    %1516 = vmatpush1.msra.mxu0 0.0
    %1517 = vmatprep.subr.mxu0 0.0
    %1518 = vmatpush1.msra.mxu0 0.0
    %1519 = vmatprep.subr.mxu0 0.0
    %1520 = vmatpush1.msra.mxu0 0.0
    %1521 = vmatprep.subr.mxu0 0.0
    %1522 = vmatpush1.msra.mxu0 0.0
    %1523 = vmatprep.mubr.f32.mxu0 0.0
    %1524 = vmatmul.mubr.f32.gmra.mrb[0].mxu0 %v1457
    %v1525 = vpop.f32.mrb[0].mxu0
    %v1526 = vadd.f32 0.0, %v1525
    %v1527 = vpop.f32.mrb[0].mxu0
    %1528 = vdwg.mxu0
    %1529 = vrot.lane.b32.xlu0 %v283, 40
    %v1530 = vpop.permute.xlu0 %1529
    %v1533 = vsel %vm289, %v1452, 0
    %1535 = vmatprep.subr.mxu0 0.0
    %1536 = vmatpush1.msra.mxu0 %v1530
    %1537 = vmatprep.subr.mxu0 0.0
    %1538 = vmatpush1.msra.mxu0 0.0
    %1539 = vmatprep.subr.mxu0 0.0
    %1540 = vmatpush1.msra.mxu0 0.0
    %1541 = vmatprep.subr.mxu0 0.0
    %1542 = vmatpush1.msra.mxu0 0.0
    %1543 = vmatprep.subr.mxu0 0.0
    %1544 = vmatpush1.msra.mxu0 0.0
    %1545 = vmatprep.subr.mxu0 0.0
    %1546 = vmatpush1.msra.mxu0 0.0
    %1547 = vmatprep.subr.mxu0 0.0
    %1548 = vmatpush1.msra.mxu0 0.0
    %1549 = vmatprep.subr.mxu0 0.0
    %1550 = vmatpush1.msra.mxu0 0.0
    %1551 = vmatprep.subr.mxu0 0.0
    %1552 = vmatpush1.msra.mxu0 0.0
    %1553 = vmatprep.subr.mxu0 0.0
    %1554 = vmatpush1.msra.mxu0 0.0
    %1555 = vmatprep.subr.mxu0 0.0
    %1556 = vmatpush1.msra.mxu0 0.0
    %1557 = vmatprep.subr.mxu0 0.0
    %1558 = vmatpush1.msra.mxu0 0.0
    %1559 = vmatprep.subr.mxu0 0.0
    %1560 = vmatpush1.msra.mxu0 0.0
    %1561 = vmatprep.subr.mxu0 0.0
    %1562 = vmatpush1.msra.mxu0 0.0
    %1563 = vmatprep.subr.mxu0 0.0
    %1564 = vmatpush1.msra.mxu0 0.0
    %1565 = vmatprep.subr.mxu0 0.0
    %1566 = vmatpush1.msra.mxu0 0.0
    %1567 = vmatprep.subr.mxu0 0.0
    %1568 = vmatpush1.msra.mxu0 0.0
    %1569 = vmatprep.subr.mxu0 0.0
    %1570 = vmatpush1.msra.mxu0 0.0
    %1571 = vmatprep.subr.mxu0 0.0
    %1572 = vmatpush1.msra.mxu0 0.0
    %1573 = vmatprep.subr.mxu0 0.0
    %1574 = vmatpush1.msra.mxu0 0.0
    %1575 = vmatprep.subr.mxu0 0.0
    %1576 = vmatpush1.msra.mxu0 0.0
    %1577 = vmatprep.subr.mxu0 0.0
    %1578 = vmatpush1.msra.mxu0 0.0
    %1579 = vmatprep.subr.mxu0 0.0
    %1580 = vmatpush1.msra.mxu0 0.0
    %1581 = vmatprep.subr.mxu0 0.0
    %1582 = vmatpush1.msra.mxu0 0.0
    %1583 = vmatprep.subr.mxu0 0.0
    %1584 = vmatpush1.msra.mxu0 0.0
    %1585 = vmatprep.subr.mxu0 0.0
    %1586 = vmatpush1.msra.mxu0 0.0
    %1587 = vmatprep.subr.mxu0 0.0
    %1588 = vmatpush1.msra.mxu0 0.0
    %1589 = vmatprep.subr.mxu0 0.0
    %1590 = vmatpush1.msra.mxu0 0.0
    %1591 = vmatprep.subr.mxu0 0.0
    %1592 = vmatpush1.msra.mxu0 0.0
    %1593 = vmatprep.subr.mxu0 0.0
    %1594 = vmatpush1.msra.mxu0 0.0
    %1595 = vmatprep.subr.mxu0 0.0
    %1596 = vmatpush1.msra.mxu0 0.0
    %1597 = vmatprep.subr.mxu0 0.0
    %1598 = vmatpush1.msra.mxu0 0.0
    %1599 = vmatprep.mubr.f32.mxu0 0.0
    %1600 = vmatmul.mubr.f32.gmra.mrb[0].mxu0 %v1533
    %v1601 = vpop.f32.mrb[0].mxu0
    %v1602 = vadd.f32 0.0, %v1601
    %v1603 = vpop.f32.mrb[0].mxu0
    %1604 = vdwg.mxu0
    %1607 = vrot.lane.b32.xlu0 %v866, 8
    %v1608 = vpop.permute.xlu0 %1607
    %1609 = vrot.lane.b32.xlu0 %v942, 8
    %v1610 = vpop.permute.xlu0 %1609
    %1615 = vrot.lane.b32.xlu0 %v1196, 16
    %v1616 = vpop.permute.xlu0 %1615
    %1617 = vrot.lane.b32.xlu0 %v1272, 16
    %v1618 = vpop.permute.xlu0 %1617
    %1623 = vrot.lane.b32.xlu0 %v1526, 24
    %v1624 = vpop.permute.xlu0 %1623
    %1625 = vrot.lane.b32.xlu0 %v1602, 24
    %v1626 = vpop.permute.xlu0 %1625
    %v1629 = vsel %vm289, %v536, %v1608
    %v1630 = vsel %vm289, %v612, %v1610
    %vm1631 = vcmask 130048
    %v1632 = vsel %vm1631, %v1629, %v1616
    %v1633 = vsel %vm1631, %v1630, %v1618
    %vm1634 = vcmask 195584
    %v1635 = vsel %vm1634, %v1632, %v1624
    %v1636 = vsel %vm1634, %v1633, %v1626
    %v1637 = vld [vmem:[%s4] sm:$0xff]
    %v1638 = vld [vmem:[%s4 + $0x8] sm:$0xff]
    %v1639 = vld [vmem:[%s4 + $0x10] sm:$0xff]
    %v1640 = vld [vmem:[%s4 + $0x18] sm:$0xff]
    %v1642 = vsel %vm130, %v1635, 0
    %v1645 = vsel %vm130, %v1636, 0
    %1647 = vmatprep.subr.mxu0 0.0
    %1648 = vmatpush1.msra.mxu0 %v1637
    %1649 = vmatprep.subr.mxu0 0.0
    %1650 = vmatpush1.msra.mxu0 %v1638
    %1651 = vmatprep.subr.mxu0 0.0
    %1652 = vmatpush1.msra.mxu0 %v1639
    %1653 = vmatprep.subr.mxu0 0.0
    %1654 = vmatpush1.msra.mxu0 %v1640
    %1655 = vmatprep.subr.mxu0 0.0
    %1656 = vmatpush1.msra.mxu0 0.0
    %1657 = vmatprep.subr.mxu0 0.0
    %1658 = vmatpush1.msra.mxu0 0.0
    %1659 = vmatprep.subr.mxu0 0.0
    %1660 = vmatpush1.msra.mxu0 0.0
    %1661 = vmatprep.subr.mxu0 0.0
    %1662 = vmatpush1.msra.mxu0 0.0
    %1663 = vmatprep.subr.mxu0 0.0
    %1664 = vmatpush1.msra.mxu0 0.0
    %1665 = vmatprep.subr.mxu0 0.0
    %1666 = vmatpush1.msra.mxu0 0.0
    %1667 = vmatprep.subr.mxu0 0.0
    %1668 = vmatpush1.msra.mxu0 0.0
    %1669 = vmatprep.subr.mxu0 0.0
    %1670 = vmatpush1.msra.mxu0 0.0
    %1671 = vmatprep.subr.mxu0 0.0
    %1672 = vmatpush1.msra.mxu0 0.0
    %1673 = vmatprep.subr.mxu0 0.0
    %1674 = vmatpush1.msra.mxu0 0.0
    %1675 = vmatprep.subr.mxu0 0.0
    %1676 = vmatpush1.msra.mxu0 0.0
    %1677 = vmatprep.subr.mxu0 0.0
    %1678 = vmatpush1.msra.mxu0 0.0
    %1679 = vmatprep.subr.mxu0 0.0
    %1680 = vmatpush1.msra.mxu0 0.0
    %1681 = vmatprep.subr.mxu0 0.0
    %1682 = vmatpush1.msra.mxu0 0.0
    %1683 = vmatprep.subr.mxu0 0.0
    %1684 = vmatpush1.msra.mxu0 0.0
    %1685 = vmatprep.subr.mxu0 0.0
    %1686 = vmatpush1.msra.mxu0 0.0
    %1687 = vmatprep.subr.mxu0 0.0
    %1688 = vmatpush1.msra.mxu0 0.0
    %1689 = vmatprep.subr.mxu0 0.0
    %1690 = vmatpush1.msra.mxu0 0.0
    %1691 = vmatprep.subr.mxu0 0.0
    %1692 = vmatpush1.msra.mxu0 0.0
    %1693 = vmatprep.subr.mxu0 0.0
    %1694 = vmatpush1.msra.mxu0 0.0
    %1695 = vmatprep.subr.mxu0 0.0
    %1696 = vmatpush1.msra.mxu0 0.0
    %1697 = vmatprep.subr.mxu0 0.0
    %1698 = vmatpush1.msra.mxu0 0.0
    %1699 = vmatprep.subr.mxu0 0.0
    %1700 = vmatpush1.msra.mxu0 0.0
    %1701 = vmatprep.subr.mxu0 0.0
    %1702 = vmatpush1.msra.mxu0 0.0
    %1703 = vmatprep.subr.mxu0 0.0
    %1704 = vmatpush1.msra.mxu0 0.0
    %1705 = vmatprep.subr.mxu0 0.0
    %1706 = vmatpush1.msra.mxu0 0.0
    %1707 = vmatprep.subr.mxu0 0.0
    %1708 = vmatpush1.msra.mxu0 0.0
    %1709 = vmatprep.subr.mxu0 0.0
    %1710 = vmatpush1.msra.mxu0 0.0
    %1711 = vmatprep.mubr.f32.mxu0 0.0
    %1712 = vmatmul.mubr.f32.gmra.mrb[0].mxu0 %v1642
    %v1713 = vpop.f32.mrb[0].mxu0
    %v1714 = vadd.f32 0.0, %v1713
    %v1715 = vpop.f32.mrb[0].mxu0
    %1716 = vmatprep.mubr.f32.mxu0 0.0
    %1717 = vmatmul.mubr.f32.gmra.mrb[0].mxu0 %v1645
    %v1718 = vpop.f32.mrb[0].mxu0
    %v1719 = vadd.f32 0.0, %v1718
    %v1720 = vpop.f32.mrb[0].mxu0
    %1721 = vdwg.mxu0
    %v1722 = vadd.f32 %v148, %v1714
    %v1723 = vadd.f32 %v149, %v1719
    %v1724 = vld [vmem:[%s5] sm:$0x1]
    %v1726 = vlaneseq
    %v1727 = vshrl.u32 %v1726, 7
    %v1728 = vsub.s32 0, %v1727
    %v1729 = vrot.slane %v1724, %v1728
    %v1731 = vadd.f32 %v1722, %v1729
    %v1732 = vadd.f32 %v1723, %v1729
    %v1733 = vld [vmem:[%s8] sm:$0x1]
    %v1734 = vld [vmem:[%s9] sm:$0x1]
    %v1735 = vsel %vm130, %v1731, 0.0
    %1736 = vadd.xlane.f32.xlu0 %v1735
    %v1737 = vpop.xlane.xlu0 %1736
    %v1738 = vsel %vm130, %v1732, 0.0
    %1739 = vadd.xlane.f32.xlu0 %v1738
    %v1740 = vpop.xlane.xlu0 %1739
    %v1741 = vmul.f32 %v1737, %v164
    %v1742 = vmul.f32 %v1740, %v164
    %v1743 = vsub.f32 %v1731, %v1741
    %v1744 = vsub.f32 %v1732, %v1742
    %v1745 = vmul.f32 %v1743, %v1743
    %v1746 = vmul.f32 %v1744, %v1744
    %v1747 = vsel %vm130, %v1745, 0.0
    %1748 = vadd.xlane.f32.xlu0 %v1747
    %v1749 = vpop.xlane.xlu0 %1748
    %v1750 = vsel %vm130, %v1746, 0.0
    %1751 = vadd.xlane.f32.xlu0 %v1750
    %v1752 = vpop.xlane.xlu0 %1751
    %v1753 = vmul.f32 %v1749, %v164
    %v1754 = vmul.f32 %v1752, %v164
    %v1755 = vadd.f32 %v1753, 1e-05
    %v1756 = vadd.f32 %v1754, 1e-05
    %v1757 = vrsqrt.pop %v1755
    %v1758 = vrsqrt.pop %v1756
    %v1759 = vmul.f32 %v1743, %v1757
    %v1760 = vmul.f32 %v1744, %v1758
    %v1762 = vlaneseq
    %v1763 = vshrl.u32 %v1762, 7
    %v1764 = vsub.s32 0, %v1763
    %v1765 = vrot.slane %v1733, %v1764
    %v1767 = vmul.f32 %v1759, %v1765
    %v1768 = vmul.f32 %v1760, %v1765
    %v1770 = vlaneseq
    %v1771 = vshrl.u32 %v1770, 7
    %v1772 = vsub.s32 0, %v1771
    %v1773 = vrot.slane %v1734, %v1772
    %v1775 = vadd.f32 %v1767, %v1773
    %v1776 = vadd.f32 %v1768, %v1773
    %v1777 = vld [vmem:[%s10] sm:$0xff]
    %v1778 = vld [vmem:[%s10 + $0x8] sm:$0xff]
    %v1779 = vld [vmem:[%s10 + $0x10] sm:$0xff]
    %v1780 = vld [vmem:[%s10 + $0x18] sm:$0xff]
    %v1781 = vld [vmem:[%s11] sm:$0x1]
    %v1783 = vlaneseq
    %v1784 = vshrl.u32 %v1783, 7
    %v1785 = vsub.s32 0, %v1784
    %v1786 = vrot.slane %v1781, %v1785
    %v1789 = vsel %vm130, %v1775, 0
    %v1792 = vsel %vm130, %v1776, 0
    %1794 = vmatprep.subr.mxu0 0.0
    %1795 = vmatpush1.msra.mxu0 %v1777
    %1796 = vmatprep.subr.mxu0 0.0
    %1797 = vmatpush1.msra.mxu0 %v1778
    %1798 = vmatprep.subr.mxu0 0.0
    %1799 = vmatpush1.msra.mxu0 %v1779
    %1800 = vmatprep.subr.mxu0 0.0
    %1801 = vmatpush1.msra.mxu0 %v1780
    %1802 = vmatprep.subr.mxu0 0.0
    %1803 = vmatpush1.msra.mxu0 0.0
    %1804 = vmatprep.subr.mxu0 0.0
    %1805 = vmatpush1.msra.mxu0 0.0
    %1806 = vmatprep.subr.mxu0 0.0
    %1807 = vmatpush1.msra.mxu0 0.0
    %1808 = vmatprep.subr.mxu0 0.0
    %1809 = vmatpush1.msra.mxu0 0.0
    %1810 = vmatprep.subr.mxu0 0.0
    %1811 = vmatpush1.msra.mxu0 0.0
    %1812 = vmatprep.subr.mxu0 0.0
    %1813 = vmatpush1.msra.mxu0 0.0
    %1814 = vmatprep.subr.mxu0 0.0
    %1815 = vmatpush1.msra.mxu0 0.0
    %1816 = vmatprep.subr.mxu0 0.0
    %1817 = vmatpush1.msra.mxu0 0.0
    %1818 = vmatprep.subr.mxu0 0.0
    %1819 = vmatpush1.msra.mxu0 0.0
    %1820 = vmatprep.subr.mxu0 0.0
    %1821 = vmatpush1.msra.mxu0 0.0
    %1822 = vmatprep.subr.mxu0 0.0
    %1823 = vmatpush1.msra.mxu0 0.0
    %1824 = vmatprep.subr.mxu0 0.0
    %1825 = vmatpush1.msra.mxu0 0.0
    %1826 = vmatprep.subr.mxu0 0.0
    %1827 = vmatpush1.msra.mxu0 0.0
    %1828 = vmatprep.subr.mxu0 0.0
    %1829 = vmatpush1.msra.mxu0 0.0
    %1830 = vmatprep.subr.mxu0 0.0
    %1831 = vmatpush1.msra.mxu0 0.0
    %1832 = vmatprep.subr.mxu0 0.0
    %1833 = vmatpush1.msra.mxu0 0.0
    %1834 = vmatprep.subr.mxu0 0.0
    %1835 = vmatpush1.msra.mxu0 0.0
    %1836 = vmatprep.subr.mxu0 0.0
    %1837 = vmatpush1.msra.mxu0 0.0
    %1838 = vmatprep.subr.mxu0 0.0
    %1839 = vmatpush1.msra.mxu0 0.0
    %1840 = vmatprep.subr.mxu0 0.0
    %1841 = vmatpush1.msra.mxu0 0.0
    %1842 = vmatprep.subr.mxu0 0.0
    %1843 = vmatpush1.msra.mxu0 0.0
    %1844 = vmatprep.subr.mxu0 0.0
    %1845 = vmatpush1.msra.mxu0 0.0
    %1846 = vmatprep.subr.mxu0 0.0
    %1847 = vmatpush1.msra.mxu0 0.0
    %1848 = vmatprep.subr.mxu0 0.0
    %1849 = vmatpush1.msra.mxu0 0.0
    %1850 = vmatprep.subr.mxu0 0.0
    %1851 = vmatpush1.msra.mxu0 0.0
    %1852 = vmatprep.subr.mxu0 0.0
    %1853 = vmatpush1.msra.mxu0 0.0
    %1854 = vmatprep.subr.mxu0 0.0
    %1855 = vmatpush1.msra.mxu0 0.0
    %1856 = vmatprep.subr.mxu0 0.0
    %1857 = vmatpush1.msra.mxu0 0.0
    %1858 = vmatprep.mubr.f32.mxu0 0.0
    %1859 = vmatmul.mubr.f32.gmra.mrb[0].mxu0 %v1789
    %v1860 = vpop.f32.mrb[0].mxu0
    %v1861 = vadd.f32 %v1786, %v1860
    %v1862 = vpop.f32.mrb[0].mxu0
    %1863 = vmatprep.mubr.f32.mxu0 0.0
    %1864 = vmatmul.mubr.f32.gmra.mrb[0].mxu0 %v1792
    %v1865 = vpop.f32.mrb[0].mxu0
    %v1866 = vadd.f32 %v1786, %v1865
    %v1867 = vpop.f32.mrb[0].mxu0
    %1868 = vdwg.mxu0
    %v1869 = vmul.f32 %v1861, %v1861
    %v1870 = vmul.f32 %v1866, %v1866
    %v1871 = vmul.f32 %v1861, %v1869
    %v1872 = vmul.f32 %v1866, %v1870
    %v1873 = vmul.f32 %v1871, 0.044715
    %v1874 = vmul.f32 %v1872, 0.044715
    %v1875 = vadd.f32 %v1861, %v1873
    %v1876 = vadd.f32 %v1866, %v1874
    %v1877 = vmul.f32 %v1875, 0.7978846
    %v1878 = vmul.f32 %v1876, 0.7978846
    %v1879 = vtanh.pop %v1877
    %v1880 = vtanh.pop %v1878
    %v1881 = vadd.f32 %v1879, 1.0
    %v1882 = vadd.f32 %v1880, 1.0
    %v1883 = vmul.f32 %v1881, 0.5
    %v1884 = vmul.f32 %v1882, 0.5
    %v1885 = vmul.f32 %v1861, %v1883
    %v1886 = vmul.f32 %v1866, %v1884
    %v1887 = vld [vmem:[%s12] sm:$0xff]
    %v1888 = vld [vmem:[%s12 + $0x8] sm:$0xff]
    %v1889 = vld [vmem:[%s12 + $0x10] sm:$0xff]
    %v1890 = vld [vmem:[%s12 + $0x18] sm:$0xff]
    %v1891 = vld [vmem:[%s12 + $0x20] sm:$0xff]
    %v1892 = vld [vmem:[%s12 + $0x28] sm:$0xff]
    %v1893 = vld [vmem:[%s12 + $0x30] sm:$0xff]
    %v1894 = vld [vmem:[%s12 + $0x38] sm:$0xff]
    %v1895 = vld [vmem:[%s12 + $0x40] sm:$0xff]
    %v1896 = vld [vmem:[%s12 + $0x48] sm:$0xff]
    %v1897 = vld [vmem:[%s12 + $0x50] sm:$0xff]
    %v1898 = vld [vmem:[%s12 + $0x58] sm:$0xff]
    %v1899 = vld [vmem:[%s12 + $0x60] sm:$0xff]
    %v1900 = vld [vmem:[%s12 + $0x68] sm:$0xff]
    %v1901 = vld [vmem:[%s12 + $0x70] sm:$0xff]
    %v1902 = vld [vmem:[%s12 + $0x78] sm:$0xff]
    %v1903 = vld [vmem:[%s13] sm:$0x1]
    %v1905 = vlaneseq
    %v1906 = vshrl.u32 %v1905, 7
    %v1907 = vsub.s32 0, %v1906
    %v1908 = vrot.slane %v1903, %v1907
    %1910 = vmatprep.subr.mxu0 0.0
    %1911 = vmatpush1.msra.mxu0 %v1887
    %1912 = vmatprep.subr.mxu0 0.0
    %1913 = vmatpush1.msra.mxu0 %v1888
    %1914 = vmatprep.subr.mxu0 0.0
    %1915 = vmatpush1.msra.mxu0 %v1889
    %1916 = vmatprep.subr.mxu0 0.0
    %1917 = vmatpush1.msra.mxu0 %v1890
    %1918 = vmatprep.subr.mxu0 0.0
    %1919 = vmatpush1.msra.mxu0 %v1891
    %1920 = vmatprep.subr.mxu0 0.0
    %1921 = vmatpush1.msra.mxu0 %v1892
    %1922 = vmatprep.subr.mxu0 0.0
    %1923 = vmatpush1.msra.mxu0 %v1893
    %1924 = vmatprep.subr.mxu0 0.0
    %1925 = vmatpush1.msra.mxu0 %v1894
    %1926 = vmatprep.subr.mxu0 0.0
    %1927 = vmatpush1.msra.mxu0 %v1895
    %1928 = vmatprep.subr.mxu0 0.0
    %1929 = vmatpush1.msra.mxu0 %v1896
    %1930 = vmatprep.subr.mxu0 0.0
    %1931 = vmatpush1.msra.mxu0 %v1897
    %1932 = vmatprep.subr.mxu0 0.0
    %1933 = vmatpush1.msra.mxu0 %v1898
    %1934 = vmatprep.subr.mxu0 0.0
    %1935 = vmatpush1.msra.mxu0 %v1899
    %1936 = vmatprep.subr.mxu0 0.0
    %1937 = vmatpush1.msra.mxu0 %v1900
    %1938 = vmatprep.subr.mxu0 0.0
    %1939 = vmatpush1.msra.mxu0 %v1901
    %1940 = vmatprep.subr.mxu0 0.0
    %1941 = vmatpush1.msra.mxu0 %v1902
    %1942 = vmatprep.subr.mxu0 0.0
    %1943 = vmatpush1.msra.mxu0 0.0
    %1944 = vmatprep.subr.mxu0 0.0
    %1945 = vmatpush1.msra.mxu0 0.0
    %1946 = vmatprep.subr.mxu0 0.0
    %1947 = vmatpush1.msra.mxu0 0.0
    %1948 = vmatprep.subr.mxu0 0.0
    %1949 = vmatpush1.msra.mxu0 0.0
    %1950 = vmatprep.subr.mxu0 0.0
    %1951 = vmatpush1.msra.mxu0 0.0
    %1952 = vmatprep.subr.mxu0 0.0
    %1953 = vmatpush1.msra.mxu0 0.0
    %1954 = vmatprep.subr.mxu0 0.0
    %1955 = vmatpush1.msra.mxu0 0.0
    %1956 = vmatprep.subr.mxu0 0.0
    %1957 = vmatpush1.msra.mxu0 0.0
    %1958 = vmatprep.subr.mxu0 0.0
    %1959 = vmatpush1.msra.mxu0 0.0
    %1960 = vmatprep.subr.mxu0 0.0
    %1961 = vmatpush1.msra.mxu0 0.0
    %1962 = vmatprep.subr.mxu0 0.0
    %1963 = vmatpush1.msra.mxu0 0.0
    %1964 = vmatprep.subr.mxu0 0.0
    %1965 = vmatpush1.msra.mxu0 0.0
    %1966 = vmatprep.subr.mxu0 0.0
    %1967 = vmatpush1.msra.mxu0 0.0
    %1968 = vmatprep.subr.mxu0 0.0
    %1969 = vmatpush1.msra.mxu0 0.0
    %1970 = vmatprep.subr.mxu0 0.0
    %1971 = vmatpush1.msra.mxu0 0.0
    %1972 = vmatprep.subr.mxu0 0.0
    %1973 = vmatpush1.msra.mxu0 0.0
    %1974 = vmatprep.mubr.f32.mxu0 0.0
    %1975 = vmatmul.mubr.f32.gmra.mrb[0].mxu0 %v1885
    %v1976 = vpop.f32.mrb[0].mxu0
    %v1977 = vadd.f32 %v1908, %v1976
    %v1978 = vpop.f32.mrb[0].mxu0
    %1979 = vmatprep.mubr.f32.mxu0 0.0
    %1980 = vmatmul.mubr.f32.gmra.mrb[0].mxu0 %v1886
    %v1981 = vpop.f32.mrb[0].mxu0
    %v1982 = vadd.f32 %v1908, %v1981
    %v1983 = vpop.f32.mrb[0].mxu0
    %1984 = vdwg.mxu0
    %v1985 = vadd.f32 %v1731, %v1977
    %v1986 = vadd.f32 %v1732, %v1982
    %s1987 = scalar_lea.vmem %s6, 1
    %v1988 = vld [vmem:[%s1987] sm:$0x1]
    %s1989 = scalar_lea.vmem %s7, 1
    %v1990 = vld [vmem:[%s1989] sm:$0x1]
    %v1991 = vsel %vm130, %v1985, 0.0
    %1992 = vadd.xlane.f32.xlu0 %v1991
    %v1993 = vpop.xlane.xlu0 %1992
    %v1994 = vsel %vm130, %v1986, 0.0
    %1995 = vadd.xlane.f32.xlu0 %v1994
    %v1996 = vpop.xlane.xlu0 %1995
    %v1997 = vmul.f32 %v1993, %v164
    %v1998 = vmul.f32 %v1996, %v164
    %v1999 = vsub.f32 %v1985, %v1997
    %v2000 = vsub.f32 %v1986, %v1998
    %v2001 = vmul.f32 %v1999, %v1999
    %v2002 = vmul.f32 %v2000, %v2000
    %v2003 = vsel %vm130, %v2001, 0.0
    %2004 = vadd.xlane.f32.xlu0 %v2003
    %v2005 = vpop.xlane.xlu0 %2004
    %v2006 = vsel %vm130, %v2002, 0.0
    %2007 = vadd.xlane.f32.xlu0 %v2006
    %v2008 = vpop.xlane.xlu0 %2007
    %v2009 = vmul.f32 %v2005, %v164
    %v2010 = vmul.f32 %v2008, %v164
    %v2011 = vadd.f32 %v2009, 1e-05
    %v2012 = vadd.f32 %v2010, 1e-05
    %v2013 = vrsqrt.pop %v2011
    %v2014 = vrsqrt.pop %v2012
    %v2015 = vmul.f32 %v1999, %v2013
    %v2016 = vmul.f32 %v2000, %v2014
    %v2018 = vlaneseq
    %v2019 = vshrl.u32 %v2018, 7
    %v2020 = vsub.s32 0, %v2019
    %v2021 = vrot.slane %v1988, %v2020
    %v2023 = vmul.f32 %v2015, %v2021
    %v2024 = vmul.f32 %v2016, %v2021
    %v2026 = vlaneseq
    %v2027 = vshrl.u32 %v2026, 7
    %v2028 = vsub.s32 0, %v2027
    %v2029 = vrot.slane %v1990, %v2028
    %v2031 = vadd.f32 %v2023, %v2029
    %v2032 = vadd.f32 %v2024, %v2029
    %s2033 = scalar_lea.vmem %s3, 32
    %v2034 = vld [vmem:[%s2033] sm:$0xff]
    %v2035 = vld [vmem:[%s2033 + $0x8] sm:$0xff]
    %v2036 = vld [vmem:[%s2033 + $0x10] sm:$0xff]
    %v2037 = vld [vmem:[%s2033 + $0x18] sm:$0xff]
    %v2039 = vsel %vm130, %v2031, 0
    %v2042 = vsel %vm130, %v2032, 0
    %2044 = vmatprep.subr.mxu0 0.0
    %2045 = vmatpush1.msra.mxu0 %v2034
    %2046 = vmatprep.subr.mxu0 0.0
    %2047 = vmatpush1.msra.mxu0 %v2035
    %2048 = vmatprep.subr.mxu0 0.0
    %2049 = vmatpush1.msra.mxu0 %v2036
    %2050 = vmatprep.subr.mxu0 0.0
    %2051 = vmatpush1.msra.mxu0 %v2037
    %2052 = vmatprep.subr.mxu0 0.0
    %2053 = vmatpush1.msra.mxu0 0.0
    %2054 = vmatprep.subr.mxu0 0.0
    %2055 = vmatpush1.msra.mxu0 0.0
    %2056 = vmatprep.subr.mxu0 0.0
    %2057 = vmatpush1.msra.mxu0 0.0
    %2058 = vmatprep.subr.mxu0 0.0
    %2059 = vmatpush1.msra.mxu0 0.0
    %2060 = vmatprep.subr.mxu0 0.0
    %2061 = vmatpush1.msra.mxu0 0.0
    %2062 = vmatprep.subr.mxu0 0.0
    %2063 = vmatpush1.msra.mxu0 0.0
    %2064 = vmatprep.subr.mxu0 0.0
    %2065 = vmatpush1.msra.mxu0 0.0
    %2066 = vmatprep.subr.mxu0 0.0
    %2067 = vmatpush1.msra.mxu0 0.0
    %2068 = vmatprep.subr.mxu0 0.0
    %2069 = vmatpush1.msra.mxu0 0.0
    %2070 = vmatprep.subr.mxu0 0.0
    %2071 = vmatpush1.msra.mxu0 0.0
    %2072 = vmatprep.subr.mxu0 0.0
    %2073 = vmatpush1.msra.mxu0 0.0
    %2074 = vmatprep.subr.mxu0 0.0
    %2075 = vmatpush1.msra.mxu0 0.0
    %2076 = vmatprep.subr.mxu0 0.0
    %2077 = vmatpush1.msra.mxu0 0.0
    %2078 = vmatprep.subr.mxu0 0.0
    %2079 = vmatpush1.msra.mxu0 0.0
    %2080 = vmatprep.subr.mxu0 0.0
    %2081 = vmatpush1.msra.mxu0 0.0
    %2082 = vmatprep.subr.mxu0 0.0
    %2083 = vmatpush1.msra.mxu0 0.0
    %2084 = vmatprep.subr.mxu0 0.0
    %2085 = vmatpush1.msra.mxu0 0.0
    %2086 = vmatprep.subr.mxu0 0.0
    %2087 = vmatpush1.msra.mxu0 0.0
    %2088 = vmatprep.subr.mxu0 0.0
    %2089 = vmatpush1.msra.mxu0 0.0
    %2090 = vmatprep.subr.mxu0 0.0
    %2091 = vmatpush1.msra.mxu0 0.0
    %2092 = vmatprep.subr.mxu0 0.0
    %2093 = vmatpush1.msra.mxu0 0.0
    %2094 = vmatprep.subr.mxu0 0.0
    %2095 = vmatpush1.msra.mxu0 0.0
    %2096 = vmatprep.subr.mxu0 0.0
    %2097 = vmatpush1.msra.mxu0 0.0
    %2098 = vmatprep.subr.mxu0 0.0
    %2099 = vmatpush1.msra.mxu0 0.0
    %2100 = vmatprep.subr.mxu0 0.0
    %2101 = vmatpush1.msra.mxu0 0.0
    %2102 = vmatprep.subr.mxu0 0.0
    %2103 = vmatpush1.msra.mxu0 0.0
    %2104 = vmatprep.subr.mxu0 0.0
    %2105 = vmatpush1.msra.mxu0 0.0
    %2106 = vmatprep.subr.mxu0 0.0
    %2107 = vmatpush1.msra.mxu0 0.0
    %2108 = vmatprep.mubr.f32.mxu0 0.0
    %2109 = vmatmul.mubr.f32.gmra.mrb[0].mxu0 %v2039
    %v2110 = vpop.f32.mrb[0].mxu0
    %v2111 = vadd.f32 0.0, %v2110
    %v2112 = vpop.f32.mrb[0].mxu0
    %2113 = vmatprep.mubr.f32.mxu0 0.0
    %2114 = vmatmul.mubr.f32.gmra.mrb[0].mxu0 %v2042
    %v2115 = vpop.f32.mrb[0].mxu0
    %v2116 = vadd.f32 0.0, %v2115
    %v2117 = vpop.f32.mrb[0].mxu0
    %2118 = vdwg.mxu0
    %2120 = vrot.lane.b32.xlu0 %v2111, 96
    %v2121 = vpop.permute.xlu0 %2120
    %v2122 = vsel %vm289, %v2111, 0
    %v2124 = vsel %vm289, %v2121, 0
    %2126 = vmatprep.subr.mxu0 0.0
    %2127 = vmatpush1.xpose.msra.mxu0 %v2124
    %2128 = vmatprep.subr.mxu0 0.0
    %2129 = vmatpush1.xpose.msra.mxu0 0.0
    %2130 = vmatprep.subr.mxu0 0.0
    %2131 = vmatpush1.xpose.msra.mxu0 0.0
    %2132 = vmatprep.subr.mxu0 0.0
    %2133 = vmatpush1.xpose.msra.mxu0 0.0
    %2134 = vmatprep.subr.mxu0 0.0
    %2135 = vmatpush1.xpose.msra.mxu0 0.0
    %2136 = vmatprep.subr.mxu0 0.0
    %2137 = vmatpush1.xpose.msra.mxu0 0.0
    %2138 = vmatprep.subr.mxu0 0.0
    %2139 = vmatpush1.xpose.msra.mxu0 0.0
    %2140 = vmatprep.subr.mxu0 0.0
    %2141 = vmatpush1.xpose.msra.mxu0 0.0
    %2142 = vmatprep.subr.mxu0 0.0
    %2143 = vmatpush1.xpose.msra.mxu0 0.0
    %2144 = vmatprep.subr.mxu0 0.0
    %2145 = vmatpush1.xpose.msra.mxu0 0.0
    %2146 = vmatprep.subr.mxu0 0.0
    %2147 = vmatpush1.xpose.msra.mxu0 0.0
    %2148 = vmatprep.subr.mxu0 0.0
    %2149 = vmatpush1.xpose.msra.mxu0 0.0
    %2150 = vmatprep.subr.mxu0 0.0
    %2151 = vmatpush1.xpose.msra.mxu0 0.0
    %2152 = vmatprep.subr.mxu0 0.0
    %2153 = vmatpush1.xpose.msra.mxu0 0.0
    %2154 = vmatprep.subr.mxu0 0.0
    %2155 = vmatpush1.xpose.msra.mxu0 0.0
    %2156 = vmatprep.subr.mxu0 0.0
    %2157 = vmatpush1.xpose.msra.mxu0 0.0
    %2158 = vmatprep.subr.mxu0 0.0
    %2159 = vmatpush1.xpose.msra.mxu0 0.0
    %2160 = vmatprep.subr.mxu0 0.0
    %2161 = vmatpush1.xpose.msra.mxu0 0.0
    %2162 = vmatprep.subr.mxu0 0.0
    %2163 = vmatpush1.xpose.msra.mxu0 0.0
    %2164 = vmatprep.subr.mxu0 0.0
    %2165 = vmatpush1.xpose.msra.mxu0 0.0
    %2166 = vmatprep.subr.mxu0 0.0
    %2167 = vmatpush1.xpose.msra.mxu0 0.0
    %2168 = vmatprep.subr.mxu0 0.0
    %2169 = vmatpush1.xpose.msra.mxu0 0.0
    %2170 = vmatprep.subr.mxu0 0.0
    %2171 = vmatpush1.xpose.msra.mxu0 0.0
    %2172 = vmatprep.subr.mxu0 0.0
    %2173 = vmatpush1.xpose.msra.mxu0 0.0
    %2174 = vmatprep.subr.mxu0 0.0
    %2175 = vmatpush1.xpose.msra.mxu0 0.0
    %2176 = vmatprep.subr.mxu0 0.0
    %2177 = vmatpush1.xpose.msra.mxu0 0.0
    %2178 = vmatprep.subr.mxu0 0.0
    %2179 = vmatpush1.xpose.msra.mxu0 0.0
    %2180 = vmatprep.subr.mxu0 0.0
    %2181 = vmatpush1.xpose.msra.mxu0 0.0
    %2182 = vmatprep.subr.mxu0 0.0
    %2183 = vmatpush1.xpose.msra.mxu0 0.0
    %2184 = vmatprep.subr.mxu0 0.0
    %2185 = vmatpush1.xpose.msra.mxu0 0.0
    %2186 = vmatprep.subr.mxu0 0.0
    %2187 = vmatpush1.xpose.msra.mxu0 0.0
    %2188 = vmatprep.subr.mxu0 0.0
    %2189 = vmatpush1.xpose.msra.mxu0 0.0
    %2190 = vmatprep.mubr.f32.mxu0 0.0
    %2191 = vmatmul.mubr.f32.gmra.mrb[0].mxu0 %v2122
    %v2192 = vpop.f32.mrb[0].mxu0
    %v2193 = vadd.f32 %v155, %v2192
    %v2194 = vpop.f32.mrb[0].mxu0
    %2195 = vdwg.mxu0
    %2197 = vrot.lane.b32.xlu0 %v2116, 96
    %v2198 = vpop.permute.xlu0 %2197
    %v2199 = vsel %vm289, %v2116, 0
    %v2201 = vsel %vm289, %v2198, 0
    %2203 = vmatprep.subr.mxu0 0.0
    %2204 = vmatpush1.xpose.msra.mxu0 %v2201
    %2205 = vmatprep.subr.mxu0 0.0
    %2206 = vmatpush1.xpose.msra.mxu0 0.0
    %2207 = vmatprep.subr.mxu0 0.0
    %2208 = vmatpush1.xpose.msra.mxu0 0.0
    %2209 = vmatprep.subr.mxu0 0.0
    %2210 = vmatpush1.xpose.msra.mxu0 0.0
    %2211 = vmatprep.subr.mxu0 0.0
    %2212 = vmatpush1.xpose.msra.mxu0 0.0
    %2213 = vmatprep.subr.mxu0 0.0
    %2214 = vmatpush1.xpose.msra.mxu0 0.0
    %2215 = vmatprep.subr.mxu0 0.0
    %2216 = vmatpush1.xpose.msra.mxu0 0.0
    %2217 = vmatprep.subr.mxu0 0.0
    %2218 = vmatpush1.xpose.msra.mxu0 0.0
    %2219 = vmatprep.subr.mxu0 0.0
    %2220 = vmatpush1.xpose.msra.mxu0 0.0
    %2221 = vmatprep.subr.mxu0 0.0
    %2222 = vmatpush1.xpose.msra.mxu0 0.0
    %2223 = vmatprep.subr.mxu0 0.0
    %2224 = vmatpush1.xpose.msra.mxu0 0.0
    %2225 = vmatprep.subr.mxu0 0.0
    %2226 = vmatpush1.xpose.msra.mxu0 0.0
    %2227 = vmatprep.subr.mxu0 0.0
    %2228 = vmatpush1.xpose.msra.mxu0 0.0
    %2229 = vmatprep.subr.mxu0 0.0
    %2230 = vmatpush1.xpose.msra.mxu0 0.0
    %2231 = vmatprep.subr.mxu0 0.0
    %2232 = vmatpush1.xpose.msra.mxu0 0.0
    %2233 = vmatprep.subr.mxu0 0.0
    %2234 = vmatpush1.xpose.msra.mxu0 0.0
    %2235 = vmatprep.subr.mxu0 0.0
    %2236 = vmatpush1.xpose.msra.mxu0 0.0
    %2237 = vmatprep.subr.mxu0 0.0
    %2238 = vmatpush1.xpose.msra.mxu0 0.0
    %2239 = vmatprep.subr.mxu0 0.0
    %2240 = vmatpush1.xpose.msra.mxu0 0.0
    %2241 = vmatprep.subr.mxu0 0.0
    %2242 = vmatpush1.xpose.msra.mxu0 0.0
    %2243 = vmatprep.subr.mxu0 0.0
    %2244 = vmatpush1.xpose.msra.mxu0 0.0
    %2245 = vmatprep.subr.mxu0 0.0
    %2246 = vmatpush1.xpose.msra.mxu0 0.0
    %2247 = vmatprep.subr.mxu0 0.0
    %2248 = vmatpush1.xpose.msra.mxu0 0.0
    %2249 = vmatprep.subr.mxu0 0.0
    %2250 = vmatpush1.xpose.msra.mxu0 0.0
    %2251 = vmatprep.subr.mxu0 0.0
    %2252 = vmatpush1.xpose.msra.mxu0 0.0
    %2253 = vmatprep.subr.mxu0 0.0
    %2254 = vmatpush1.xpose.msra.mxu0 0.0
    %2255 = vmatprep.subr.mxu0 0.0
    %2256 = vmatpush1.xpose.msra.mxu0 0.0
    %2257 = vmatprep.subr.mxu0 0.0
    %2258 = vmatpush1.xpose.msra.mxu0 0.0
    %2259 = vmatprep.subr.mxu0 0.0
    %2260 = vmatpush1.xpose.msra.mxu0 0.0
    %2261 = vmatprep.subr.mxu0 0.0
    %2262 = vmatpush1.xpose.msra.mxu0 0.0
    %2263 = vmatprep.subr.mxu0 0.0
    %2264 = vmatpush1.xpose.msra.mxu0 0.0
    %2265 = vmatprep.subr.mxu0 0.0
    %2266 = vmatpush1.xpose.msra.mxu0 0.0
    %2267 = vmatprep.mubr.f32.mxu0 0.0
    %2268 = vmatmul.mubr.f32.gmra.mrb[0].mxu0 %v2199
    %v2269 = vpop.f32.mrb[0].mxu0
    %v2270 = vadd.f32 %v155, %v2269
    %v2271 = vpop.f32.mrb[0].mxu0
    %2272 = vdwg.mxu0
    %v2273 = vsel %vm289, %v2193, -inf
    %2274 = vmax.xlane.f32.xlu0 %v2273
    %v2275 = vpop.xlane.xlu0 %2274
    %v2276 = vsel %vm289, %v2270, -inf
    %2277 = vmax.xlane.f32.xlu0 %v2276
    %v2278 = vpop.xlane.xlu0 %2277
    %v2279 = vsub.f32 %v2193, %v2275
    %v2280 = vsub.f32 %v2270, %v2278
    %v2281 = vmul.f32 %v2279, 1.442695
    %v2282 = vpow.pop %v2281
    %v2283 = vmul.f32 %v2280, 1.442695
    %v2284 = vpow.pop %v2283
    %v2285 = vsel %vm289, %v2282, 0.0
    %2286 = vadd.xlane.f32.xlu0 %v2285
    %v2287 = vpop.xlane.xlu0 %2286
    %v2288 = vsel %vm289, %v2284, 0.0
    %2289 = vadd.xlane.f32.xlu0 %v2288
    %v2290 = vpop.xlane.xlu0 %2289
    %v2291 = vrcp.pop %v2287
    %v2292 = vrcp.pop %v2290
    %v2293 = vmul.f32 %v2282, %v2291
    %v2294 = vmul.f32 %v2284, %v2292
    %2295 = vrot.lane.b32.xlu0 %v2111, 64
    %v2296 = vpop.permute.xlu0 %2295
    %v2299 = vsel %vm289, %v2293, 0
    %2301 = vmatprep.subr.mxu0 0.0
    %2302 = vmatpush1.msra.mxu0 %v2296
    %2303 = vmatprep.subr.mxu0 0.0
    %2304 = vmatpush1.msra.mxu0 0.0
    %2305 = vmatprep.subr.mxu0 0.0
    %2306 = vmatpush1.msra.mxu0 0.0
    %2307 = vmatprep.subr.mxu0 0.0
    %2308 = vmatpush1.msra.mxu0 0.0
    %2309 = vmatprep.subr.mxu0 0.0
    %2310 = vmatpush1.msra.mxu0 0.0
    %2311 = vmatprep.subr.mxu0 0.0
    %2312 = vmatpush1.msra.mxu0 0.0
    %2313 = vmatprep.subr.mxu0 0.0
    %2314 = vmatpush1.msra.mxu0 0.0
    %2315 = vmatprep.subr.mxu0 0.0
    %2316 = vmatpush1.msra.mxu0 0.0
    %2317 = vmatprep.subr.mxu0 0.0
    %2318 = vmatpush1.msra.mxu0 0.0
    %2319 = vmatprep.subr.mxu0 0.0
    %2320 = vmatpush1.msra.mxu0 0.0
    %2321 = vmatprep.subr.mxu0 0.0
    %2322 = vmatpush1.msra.mxu0 0.0
    %2323 = vmatprep.subr.mxu0 0.0
    %2324 = vmatpush1.msra.mxu0 0.0
    %2325 = vmatprep.subr.mxu0 0.0
    %2326 = vmatpush1.msra.mxu0 0.0
    %2327 = vmatprep.subr.mxu0 0.0
    %2328 = vmatpush1.msra.mxu0 0.0
    %2329 = vmatprep.subr.mxu0 0.0
    %2330 = vmatpush1.msra.mxu0 0.0
    %2331 = vmatprep.subr.mxu0 0.0
    %2332 = vmatpush1.msra.mxu0 0.0
    %2333 = vmatprep.subr.mxu0 0.0
    %2334 = vmatpush1.msra.mxu0 0.0
    %2335 = vmatprep.subr.mxu0 0.0
    %2336 = vmatpush1.msra.mxu0 0.0
    %2337 = vmatprep.subr.mxu0 0.0
    %2338 = vmatpush1.msra.mxu0 0.0
    %2339 = vmatprep.subr.mxu0 0.0
    %2340 = vmatpush1.msra.mxu0 0.0
    %2341 = vmatprep.subr.mxu0 0.0
    %2342 = vmatpush1.msra.mxu0 0.0
    %2343 = vmatprep.subr.mxu0 0.0
    %2344 = vmatpush1.msra.mxu0 0.0
    %2345 = vmatprep.subr.mxu0 0.0
    %2346 = vmatpush1.msra.mxu0 0.0
    %2347 = vmatprep.subr.mxu0 0.0
    %2348 = vmatpush1.msra.mxu0 0.0
    %2349 = vmatprep.subr.mxu0 0.0
    %2350 = vmatpush1.msra.mxu0 0.0
    %2351 = vmatprep.subr.mxu0 0.0
    %2352 = vmatpush1.msra.mxu0 0.0
    %2353 = vmatprep.subr.mxu0 0.0
    %2354 = vmatpush1.msra.mxu0 0.0
    %2355 = vmatprep.subr.mxu0 0.0
    %2356 = vmatpush1.msra.mxu0 0.0
    %2357 = vmatprep.subr.mxu0 0.0
    %2358 = vmatpush1.msra.mxu0 0.0
    %2359 = vmatprep.subr.mxu0 0.0
    %2360 = vmatpush1.msra.mxu0 0.0
    %2361 = vmatprep.subr.mxu0 0.0
    %2362 = vmatpush1.msra.mxu0 0.0
    %2363 = vmatprep.subr.mxu0 0.0
    %2364 = vmatpush1.msra.mxu0 0.0
    %2365 = vmatprep.mubr.f32.mxu0 0.0
    %2366 = vmatmul.mubr.f32.gmra.mrb[0].mxu0 %v2299
    %v2367 = vpop.f32.mrb[0].mxu0
    %v2368 = vadd.f32 0.0, %v2367
    %v2369 = vpop.f32.mrb[0].mxu0
    %2370 = vdwg.mxu0
    %2371 = vrot.lane.b32.xlu0 %v2116, 64
    %v2372 = vpop.permute.xlu0 %2371
    %v2375 = vsel %vm289, %v2294, 0
    %2377 = vmatprep.subr.mxu0 0.0
    %2378 = vmatpush1.msra.mxu0 %v2372
    %2379 = vmatprep.subr.mxu0 0.0
    %2380 = vmatpush1.msra.mxu0 0.0
    %2381 = vmatprep.subr.mxu0 0.0
    %2382 = vmatpush1.msra.mxu0 0.0
    %2383 = vmatprep.subr.mxu0 0.0
    %2384 = vmatpush1.msra.mxu0 0.0
    %2385 = vmatprep.subr.mxu0 0.0
    %2386 = vmatpush1.msra.mxu0 0.0
    %2387 = vmatprep.subr.mxu0 0.0
    %2388 = vmatpush1.msra.mxu0 0.0
    %2389 = vmatprep.subr.mxu0 0.0
    %2390 = vmatpush1.msra.mxu0 0.0
    %2391 = vmatprep.subr.mxu0 0.0
    %2392 = vmatpush1.msra.mxu0 0.0
    %2393 = vmatprep.subr.mxu0 0.0
    %2394 = vmatpush1.msra.mxu0 0.0
    %2395 = vmatprep.subr.mxu0 0.0
    %2396 = vmatpush1.msra.mxu0 0.0
    %2397 = vmatprep.subr.mxu0 0.0
    %2398 = vmatpush1.msra.mxu0 0.0
    %2399 = vmatprep.subr.mxu0 0.0
    %2400 = vmatpush1.msra.mxu0 0.0
    %2401 = vmatprep.subr.mxu0 0.0
    %2402 = vmatpush1.msra.mxu0 0.0
    %2403 = vmatprep.subr.mxu0 0.0
    %2404 = vmatpush1.msra.mxu0 0.0
    %2405 = vmatprep.subr.mxu0 0.0
    %2406 = vmatpush1.msra.mxu0 0.0
    %2407 = vmatprep.subr.mxu0 0.0
    %2408 = vmatpush1.msra.mxu0 0.0
    %2409 = vmatprep.subr.mxu0 0.0
    %2410 = vmatpush1.msra.mxu0 0.0
    %2411 = vmatprep.subr.mxu0 0.0
    %2412 = vmatpush1.msra.mxu0 0.0
    %2413 = vmatprep.subr.mxu0 0.0
    %2414 = vmatpush1.msra.mxu0 0.0
    %2415 = vmatprep.subr.mxu0 0.0
    %2416 = vmatpush1.msra.mxu0 0.0
    %2417 = vmatprep.subr.mxu0 0.0
    %2418 = vmatpush1.msra.mxu0 0.0
    %2419 = vmatprep.subr.mxu0 0.0
    %2420 = vmatpush1.msra.mxu0 0.0
    %2421 = vmatprep.subr.mxu0 0.0
    %2422 = vmatpush1.msra.mxu0 0.0
    %2423 = vmatprep.subr.mxu0 0.0
    %2424 = vmatpush1.msra.mxu0 0.0
    %2425 = vmatprep.subr.mxu0 0.0
    %2426 = vmatpush1.msra.mxu0 0.0
    %2427 = vmatprep.subr.mxu0 0.0
    %2428 = vmatpush1.msra.mxu0 0.0
    %2429 = vmatprep.subr.mxu0 0.0
    %2430 = vmatpush1.msra.mxu0 0.0
    %2431 = vmatprep.subr.mxu0 0.0
    %2432 = vmatpush1.msra.mxu0 0.0
    %2433 = vmatprep.subr.mxu0 0.0
    %2434 = vmatpush1.msra.mxu0 0.0
    %2435 = vmatprep.subr.mxu0 0.0
    %2436 = vmatpush1.msra.mxu0 0.0
    %2437 = vmatprep.subr.mxu0 0.0
    %2438 = vmatpush1.msra.mxu0 0.0
    %2439 = vmatprep.subr.mxu0 0.0
    %2440 = vmatpush1.msra.mxu0 0.0
    %2441 = vmatprep.mubr.f32.mxu0 0.0
    %2442 = vmatmul.mubr.f32.gmra.mrb[0].mxu0 %v2375
    %v2443 = vpop.f32.mrb[0].mxu0
    %v2444 = vadd.f32 0.0, %v2443
    %v2445 = vpop.f32.mrb[0].mxu0
    %2446 = vdwg.mxu0
    %2447 = vrot.lane.b32.xlu0 %v2111, 120
    %v2448 = vpop.permute.xlu0 %2447
    %2449 = vrot.lane.b32.xlu0 %v2111, 88
    %v2450 = vpop.permute.xlu0 %2449
    %v2451 = vsel %vm289, %v2448, 0
    %v2453 = vsel %vm289, %v2450, 0
    %2455 = vmatprep.subr.mxu0 0.0
    %2456 = vmatpush1.xpose.msra.mxu0 %v2453
    %2457 = vmatprep.subr.mxu0 0.0
    %2458 = vmatpush1.xpose.msra.mxu0 0.0
    %2459 = vmatprep.subr.mxu0 0.0
    %2460 = vmatpush1.xpose.msra.mxu0 0.0
    %2461 = vmatprep.subr.mxu0 0.0
    %2462 = vmatpush1.xpose.msra.mxu0 0.0
    %2463 = vmatprep.subr.mxu0 0.0
    %2464 = vmatpush1.xpose.msra.mxu0 0.0
    %2465 = vmatprep.subr.mxu0 0.0
    %2466 = vmatpush1.xpose.msra.mxu0 0.0
    %2467 = vmatprep.subr.mxu0 0.0
    %2468 = vmatpush1.xpose.msra.mxu0 0.0
    %2469 = vmatprep.subr.mxu0 0.0
    %2470 = vmatpush1.xpose.msra.mxu0 0.0
    %2471 = vmatprep.subr.mxu0 0.0
    %2472 = vmatpush1.xpose.msra.mxu0 0.0
    %2473 = vmatprep.subr.mxu0 0.0
    %2474 = vmatpush1.xpose.msra.mxu0 0.0
    %2475 = vmatprep.subr.mxu0 0.0
    %2476 = vmatpush1.xpose.msra.mxu0 0.0
    %2477 = vmatprep.subr.mxu0 0.0
    %2478 = vmatpush1.xpose.msra.mxu0 0.0
    %2479 = vmatprep.subr.mxu0 0.0
    %2480 = vmatpush1.xpose.msra.mxu0 0.0
    %2481 = vmatprep.subr.mxu0 0.0
    %2482 = vmatpush1.xpose.msra.mxu0 0.0
    %2483 = vmatprep.subr.mxu0 0.0
    %2484 = vmatpush1.xpose.msra.mxu0 0.0
    %2485 = vmatprep.subr.mxu0 0.0
    %2486 = vmatpush1.xpose.msra.mxu0 0.0
    %2487 = vmatprep.subr.mxu0 0.0
    %2488 = vmatpush1.xpose.msra.mxu0 0.0
    %2489 = vmatprep.subr.mxu0 0.0
    %2490 = vmatpush1.xpose.msra.mxu0 0.0
    %2491 = vmatprep.subr.mxu0 0.0
    %2492 = vmatpush1.xpose.msra.mxu0 0.0
    %2493 = vmatprep.subr.mxu0 0.0
    %2494 = vmatpush1.xpose.msra.mxu0 0.0
    %2495 = vmatprep.subr.mxu0 0.0
    %2496 = vmatpush1.xpose.msra.mxu0 0.0
    %2497 = vmatprep.subr.mxu0 0.0
    %2498 = vmatpush1.xpose.msra.mxu0 0.0
    %2499 = vmatprep.subr.mxu0 0.0
    %2500 = vmatpush1.xpose.msra.mxu0 0.0
    %2501 = vmatprep.subr.mxu0 0.0
    %2502 = vmatpush1.xpose.msra.mxu0 0.0
    %2503 = vmatprep.subr.mxu0 0.0
    %2504 = vmatpush1.xpose.msra.mxu0 0.0
    %2505 = vmatprep.subr.mxu0 0.0
    %2506 = vmatpush1.xpose.msra.mxu0 0.0
    %2507 = vmatprep.subr.mxu0 0.0
    %2508 = vmatpush1.xpose.msra.mxu0 0.0
    %2509 = vmatprep.subr.mxu0 0.0
    %2510 = vmatpush1.xpose.msra.mxu0 0.0
    %2511 = vmatprep.subr.mxu0 0.0
    %2512 = vmatpush1.xpose.msra.mxu0 0.0
    %2513 = vmatprep.subr.mxu0 0.0
    %2514 = vmatpush1.xpose.msra.mxu0 0.0
    %2515 = vmatprep.subr.mxu0 0.0
    %2516 = vmatpush1.xpose.msra.mxu0 0.0
    %2517 = vmatprep.subr.mxu0 0.0
    %2518 = vmatpush1.xpose.msra.mxu0 0.0
    %2519 = vmatprep.mubr.f32.mxu0 0.0
    %2520 = vmatmul.mubr.f32.gmra.mrb[0].mxu0 %v2451
    %v2521 = vpop.f32.mrb[0].mxu0
    %v2522 = vadd.f32 %v155, %v2521
    %v2523 = vpop.f32.mrb[0].mxu0
    %2524 = vdwg.mxu0
    %2525 = vrot.lane.b32.xlu0 %v2116, 120
    %v2526 = vpop.permute.xlu0 %2525
    %2527 = vrot.lane.b32.xlu0 %v2116, 88
    %v2528 = vpop.permute.xlu0 %2527
    %v2529 = vsel %vm289, %v2526, 0
    %v2531 = vsel %vm289, %v2528, 0
    %2533 = vmatprep.subr.mxu0 0.0
    %2534 = vmatpush1.xpose.msra.mxu0 %v2531
    %2535 = vmatprep.subr.mxu0 0.0
    %2536 = vmatpush1.xpose.msra.mxu0 0.0
    %2537 = vmatprep.subr.mxu0 0.0
    %2538 = vmatpush1.xpose.msra.mxu0 0.0
    %2539 = vmatprep.subr.mxu0 0.0
    %2540 = vmatpush1.xpose.msra.mxu0 0.0
    %2541 = vmatprep.subr.mxu0 0.0
    %2542 = vmatpush1.xpose.msra.mxu0 0.0
    %2543 = vmatprep.subr.mxu0 0.0
    %2544 = vmatpush1.xpose.msra.mxu0 0.0
    %2545 = vmatprep.subr.mxu0 0.0
    %2546 = vmatpush1.xpose.msra.mxu0 0.0
    %2547 = vmatprep.subr.mxu0 0.0
    %2548 = vmatpush1.xpose.msra.mxu0 0.0
    %2549 = vmatprep.subr.mxu0 0.0
    %2550 = vmatpush1.xpose.msra.mxu0 0.0
    %2551 = vmatprep.subr.mxu0 0.0
    %2552 = vmatpush1.xpose.msra.mxu0 0.0
    %2553 = vmatprep.subr.mxu0 0.0
    %2554 = vmatpush1.xpose.msra.mxu0 0.0
    %2555 = vmatprep.subr.mxu0 0.0
    %2556 = vmatpush1.xpose.msra.mxu0 0.0
    %2557 = vmatprep.subr.mxu0 0.0
    %2558 = vmatpush1.xpose.msra.mxu0 0.0
    %2559 = vmatprep.subr.mxu0 0.0
    %2560 = vmatpush1.xpose.msra.mxu0 0.0
    %2561 = vmatprep.subr.mxu0 0.0
    %2562 = vmatpush1.xpose.msra.mxu0 0.0
    %2563 = vmatprep.subr.mxu0 0.0
    %2564 = vmatpush1.xpose.msra.mxu0 0.0
    %2565 = vmatprep.subr.mxu0 0.0
    %2566 = vmatpush1.xpose.msra.mxu0 0.0
    %2567 = vmatprep.subr.mxu0 0.0
    %2568 = vmatpush1.xpose.msra.mxu0 0.0
    %2569 = vmatprep.subr.mxu0 0.0
    %2570 = vmatpush1.xpose.msra.mxu0 0.0
    %2571 = vmatprep.subr.mxu0 0.0
    %2572 = vmatpush1.xpose.msra.mxu0 0.0
    %2573 = vmatprep.subr.mxu0 0.0
    %2574 = vmatpush1.xpose.msra.mxu0 0.0
    %2575 = vmatprep.subr.mxu0 0.0
    %2576 = vmatpush1.xpose.msra.mxu0 0.0
    %2577 = vmatprep.subr.mxu0 0.0
    %2578 = vmatpush1.xpose.msra.mxu0 0.0
    %2579 = vmatprep.subr.mxu0 0.0
    %2580 = vmatpush1.xpose.msra.mxu0 0.0
    %2581 = vmatprep.subr.mxu0 0.0
    %2582 = vmatpush1.xpose.msra.mxu0 0.0
    %2583 = vmatprep.subr.mxu0 0.0
    %2584 = vmatpush1.xpose.msra.mxu0 0.0
    %2585 = vmatprep.subr.mxu0 0.0
    %2586 = vmatpush1.xpose.msra.mxu0 0.0
    %2587 = vmatprep.subr.mxu0 0.0
    %2588 = vmatpush1.xpose.msra.mxu0 0.0
    %2589 = vmatprep.subr.mxu0 0.0
    %2590 = vmatpush1.xpose.msra.mxu0 0.0
    %2591 = vmatprep.subr.mxu0 0.0
    %2592 = vmatpush1.xpose.msra.mxu0 0.0
    %2593 = vmatprep.subr.mxu0 0.0
    %2594 = vmatpush1.xpose.msra.mxu0 0.0
    %2595 = vmatprep.subr.mxu0 0.0
    %2596 = vmatpush1.xpose.msra.mxu0 0.0
    %2597 = vmatprep.mubr.f32.mxu0 0.0
    %2598 = vmatmul.mubr.f32.gmra.mrb[0].mxu0 %v2529
    %v2599 = vpop.f32.mrb[0].mxu0
    %v2600 = vadd.f32 %v155, %v2599
    %v2601 = vpop.f32.mrb[0].mxu0
    %2602 = vdwg.mxu0
    %v2603 = vsel %vm289, %v2522, -inf
    %2604 = vmax.xlane.f32.xlu0 %v2603
    %v2605 = vpop.xlane.xlu0 %2604
    %v2606 = vsel %vm289, %v2600, -inf
    %2607 = vmax.xlane.f32.xlu0 %v2606
    %v2608 = vpop.xlane.xlu0 %2607
    %v2609 = vsub.f32 %v2522, %v2605
    %v2610 = vsub.f32 %v2600, %v2608
    %v2611 = vmul.f32 %v2609, 1.442695
    %v2612 = vpow.pop %v2611
    %v2613 = vmul.f32 %v2610, 1.442695
    %v2614 = vpow.pop %v2613
    %v2615 = vsel %vm289, %v2612, 0.0
    %2616 = vadd.xlane.f32.xlu0 %v2615
    %v2617 = vpop.xlane.xlu0 %2616
    %v2618 = vsel %vm289, %v2614, 0.0
    %2619 = vadd.xlane.f32.xlu0 %v2618
    %v2620 = vpop.xlane.xlu0 %2619
    %v2621 = vrcp.pop %v2617
    %v2622 = vrcp.pop %v2620
    %v2623 = vmul.f32 %v2612, %v2621
    %v2624 = vmul.f32 %v2614, %v2622
    %2625 = vrot.lane.b32.xlu0 %v2111, 56
    %v2626 = vpop.permute.xlu0 %2625
    %v2629 = vsel %vm289, %v2623, 0
    %2631 = vmatprep.subr.mxu0 0.0
    %2632 = vmatpush1.msra.mxu0 %v2626
    %2633 = vmatprep.subr.mxu0 0.0
    %2634 = vmatpush1.msra.mxu0 0.0
    %2635 = vmatprep.subr.mxu0 0.0
    %2636 = vmatpush1.msra.mxu0 0.0
    %2637 = vmatprep.subr.mxu0 0.0
    %2638 = vmatpush1.msra.mxu0 0.0
    %2639 = vmatprep.subr.mxu0 0.0
    %2640 = vmatpush1.msra.mxu0 0.0
    %2641 = vmatprep.subr.mxu0 0.0
    %2642 = vmatpush1.msra.mxu0 0.0
    %2643 = vmatprep.subr.mxu0 0.0
    %2644 = vmatpush1.msra.mxu0 0.0
    %2645 = vmatprep.subr.mxu0 0.0
    %2646 = vmatpush1.msra.mxu0 0.0
    %2647 = vmatprep.subr.mxu0 0.0
    %2648 = vmatpush1.msra.mxu0 0.0
    %2649 = vmatprep.subr.mxu0 0.0
    %2650 = vmatpush1.msra.mxu0 0.0
    %2651 = vmatprep.subr.mxu0 0.0
    %2652 = vmatpush1.msra.mxu0 0.0
    %2653 = vmatprep.subr.mxu0 0.0
    %2654 = vmatpush1.msra.mxu0 0.0
    %2655 = vmatprep.subr.mxu0 0.0
    %2656 = vmatpush1.msra.mxu0 0.0
    %2657 = vmatprep.subr.mxu0 0.0
    %2658 = vmatpush1.msra.mxu0 0.0
    %2659 = vmatprep.subr.mxu0 0.0
    %2660 = vmatpush1.msra.mxu0 0.0
    %2661 = vmatprep.subr.mxu0 0.0
    %2662 = vmatpush1.msra.mxu0 0.0
    %2663 = vmatprep.subr.mxu0 0.0
    %2664 = vmatpush1.msra.mxu0 0.0
    %2665 = vmatprep.subr.mxu0 0.0
    %2666 = vmatpush1.msra.mxu0 0.0
    %2667 = vmatprep.subr.mxu0 0.0
    %2668 = vmatpush1.msra.mxu0 0.0
    %2669 = vmatprep.subr.mxu0 0.0
    %2670 = vmatpush1.msra.mxu0 0.0
    %2671 = vmatprep.subr.mxu0 0.0
    %2672 = vmatpush1.msra.mxu0 0.0
    %2673 = vmatprep.subr.mxu0 0.0
    %2674 = vmatpush1.msra.mxu0 0.0
    %2675 = vmatprep.subr.mxu0 0.0
    %2676 = vmatpush1.msra.mxu0 0.0
    %2677 = vmatprep.subr.mxu0 0.0
    %2678 = vmatpush1.msra.mxu0 0.0
    %2679 = vmatprep.subr.mxu0 0.0
    %2680 = vmatpush1.msra.mxu0 0.0
    %2681 = vmatprep.subr.mxu0 0.0
    %2682 = vmatpush1.msra.mxu0 0.0
    %2683 = vmatprep.subr.mxu0 0.0
    %2684 = vmatpush1.msra.mxu0 0.0
    %2685 = vmatprep.subr.mxu0 0.0
    %2686 = vmatpush1.msra.mxu0 0.0
    %2687 = vmatprep.subr.mxu0 0.0
    %2688 = vmatpush1.msra.mxu0 0.0
    %2689 = vmatprep.subr.mxu0 0.0
    %2690 = vmatpush1.msra.mxu0 0.0
    %2691 = vmatprep.subr.mxu0 0.0
    %2692 = vmatpush1.msra.mxu0 0.0
    %2693 = vmatprep.subr.mxu0 0.0
    %2694 = vmatpush1.msra.mxu0 0.0
    %2695 = vmatprep.mubr.f32.mxu0 0.0
    %2696 = vmatmul.mubr.f32.gmra.mrb[0].mxu0 %v2629
    %v2697 = vpop.f32.mrb[0].mxu0
    %v2698 = vadd.f32 0.0, %v2697
    %v2699 = vpop.f32.mrb[0].mxu0
    %2700 = vdwg.mxu0
    %2701 = vrot.lane.b32.xlu0 %v2116, 56
    %v2702 = vpop.permute.xlu0 %2701
    %v2705 = vsel %vm289, %v2624, 0
    %2707 = vmatprep.subr.mxu0 0.0
    %2708 = vmatpush1.msra.mxu0 %v2702
    %2709 = vmatprep.subr.mxu0 0.0
    %2710 = vmatpush1.msra.mxu0 0.0
    %2711 = vmatprep.subr.mxu0 0.0
    %2712 = vmatpush1.msra.mxu0 0.0
    %2713 = vmatprep.subr.mxu0 0.0
    %2714 = vmatpush1.msra.mxu0 0.0
    %2715 = vmatprep.subr.mxu0 0.0
    %2716 = vmatpush1.msra.mxu0 0.0
    %2717 = vmatprep.subr.mxu0 0.0
    %2718 = vmatpush1.msra.mxu0 0.0
    %2719 = vmatprep.subr.mxu0 0.0
    %2720 = vmatpush1.msra.mxu0 0.0
    %2721 = vmatprep.subr.mxu0 0.0
    %2722 = vmatpush1.msra.mxu0 0.0
    %2723 = vmatprep.subr.mxu0 0.0
    %2724 = vmatpush1.msra.mxu0 0.0
    %2725 = vmatprep.subr.mxu0 0.0
    %2726 = vmatpush1.msra.mxu0 0.0
    %2727 = vmatprep.subr.mxu0 0.0
    %2728 = vmatpush1.msra.mxu0 0.0
    %2729 = vmatprep.subr.mxu0 0.0
    %2730 = vmatpush1.msra.mxu0 0.0
    %2731 = vmatprep.subr.mxu0 0.0
    %2732 = vmatpush1.msra.mxu0 0.0
    %2733 = vmatprep.subr.mxu0 0.0
    %2734 = vmatpush1.msra.mxu0 0.0
    %2735 = vmatprep.subr.mxu0 0.0
    %2736 = vmatpush1.msra.mxu0 0.0
    %2737 = vmatprep.subr.mxu0 0.0
    %2738 = vmatpush1.msra.mxu0 0.0
    %2739 = vmatprep.subr.mxu0 0.0
    %2740 = vmatpush1.msra.mxu0 0.0
    %2741 = vmatprep.subr.mxu0 0.0
    %2742 = vmatpush1.msra.mxu0 0.0
    %2743 = vmatprep.subr.mxu0 0.0
    %2744 = vmatpush1.msra.mxu0 0.0
    %2745 = vmatprep.subr.mxu0 0.0
    %2746 = vmatpush1.msra.mxu0 0.0
    %2747 = vmatprep.subr.mxu0 0.0
    %2748 = vmatpush1.msra.mxu0 0.0
    %2749 = vmatprep.subr.mxu0 0.0
    %2750 = vmatpush1.msra.mxu0 0.0
    %2751 = vmatprep.subr.mxu0 0.0
    %2752 = vmatpush1.msra.mxu0 0.0
    %2753 = vmatprep.subr.mxu0 0.0
    %2754 = vmatpush1.msra.mxu0 0.0
    %2755 = vmatprep.subr.mxu0 0.0
    %2756 = vmatpush1.msra.mxu0 0.0
    %2757 = vmatprep.subr.mxu0 0.0
    %2758 = vmatpush1.msra.mxu0 0.0
    %2759 = vmatprep.subr.mxu0 0.0
    %2760 = vmatpush1.msra.mxu0 0.0
    %2761 = vmatprep.subr.mxu0 0.0
    %2762 = vmatpush1.msra.mxu0 0.0
    %2763 = vmatprep.subr.mxu0 0.0
    %2764 = vmatpush1.msra.mxu0 0.0
    %2765 = vmatprep.subr.mxu0 0.0
    %2766 = vmatpush1.msra.mxu0 0.0
    %2767 = vmatprep.subr.mxu0 0.0
    %2768 = vmatpush1.msra.mxu0 0.0
    %2769 = vmatprep.subr.mxu0 0.0
    %2770 = vmatpush1.msra.mxu0 0.0
    %2771 = vmatprep.mubr.f32.mxu0 0.0
    %2772 = vmatmul.mubr.f32.gmra.mrb[0].mxu0 %v2705
    %v2773 = vpop.f32.mrb[0].mxu0
    %v2774 = vadd.f32 0.0, %v2773
    %v2775 = vpop.f32.mrb[0].mxu0
    %2776 = vdwg.mxu0
    %2777 = vrot.lane.b32.xlu0 %v2111, 112
    %v2778 = vpop.permute.xlu0 %2777
    %2779 = vrot.lane.b32.xlu0 %v2111, 80
    %v2780 = vpop.permute.xlu0 %2779
    %v2781 = vsel %vm289, %v2778, 0
    %v2783 = vsel %vm289, %v2780, 0
    %2785 = vmatprep.subr.mxu0 0.0
    %2786 = vmatpush1.xpose.msra.mxu0 %v2783
    %2787 = vmatprep.subr.mxu0 0.0
    %2788 = vmatpush1.xpose.msra.mxu0 0.0
    %2789 = vmatprep.subr.mxu0 0.0
    %2790 = vmatpush1.xpose.msra.mxu0 0.0
    %2791 = vmatprep.subr.mxu0 0.0
    %2792 = vmatpush1.xpose.msra.mxu0 0.0
    %2793 = vmatprep.subr.mxu0 0.0
    %2794 = vmatpush1.xpose.msra.mxu0 0.0
    %2795 = vmatprep.subr.mxu0 0.0
    %2796 = vmatpush1.xpose.msra.mxu0 0.0
    %2797 = vmatprep.subr.mxu0 0.0
    %2798 = vmatpush1.xpose.msra.mxu0 0.0
    %2799 = vmatprep.subr.mxu0 0.0
    %2800 = vmatpush1.xpose.msra.mxu0 0.0
    %2801 = vmatprep.subr.mxu0 0.0
    %2802 = vmatpush1.xpose.msra.mxu0 0.0
    %2803 = vmatprep.subr.mxu0 0.0
    %2804 = vmatpush1.xpose.msra.mxu0 0.0
    %2805 = vmatprep.subr.mxu0 0.0
    %2806 = vmatpush1.xpose.msra.mxu0 0.0
    %2807 = vmatprep.subr.mxu0 0.0
    %2808 = vmatpush1.xpose.msra.mxu0 0.0
    %2809 = vmatprep.subr.mxu0 0.0
    %2810 = vmatpush1.xpose.msra.mxu0 0.0
    %2811 = vmatprep.subr.mxu0 0.0
    %2812 = vmatpush1.xpose.msra.mxu0 0.0
    %2813 = vmatprep.subr.mxu0 0.0
    %2814 = vmatpush1.xpose.msra.mxu0 0.0
    %2815 = vmatprep.subr.mxu0 0.0
    %2816 = vmatpush1.xpose.msra.mxu0 0.0
    %2817 = vmatprep.subr.mxu0 0.0
    %2818 = vmatpush1.xpose.msra.mxu0 0.0
    %2819 = vmatprep.subr.mxu0 0.0
    %2820 = vmatpush1.xpose.msra.mxu0 0.0
    %2821 = vmatprep.subr.mxu0 0.0
    %2822 = vmatpush1.xpose.msra.mxu0 0.0
    %2823 = vmatprep.subr.mxu0 0.0
    %2824 = vmatpush1.xpose.msra.mxu0 0.0
    %2825 = vmatprep.subr.mxu0 0.0
    %2826 = vmatpush1.xpose.msra.mxu0 0.0
    %2827 = vmatprep.subr.mxu0 0.0
    %2828 = vmatpush1.xpose.msra.mxu0 0.0
    %2829 = vmatprep.subr.mxu0 0.0
    %2830 = vmatpush1.xpose.msra.mxu0 0.0
    %2831 = vmatprep.subr.mxu0 0.0
    %2832 = vmatpush1.xpose.msra.mxu0 0.0
    %2833 = vmatprep.subr.mxu0 0.0
    %2834 = vmatpush1.xpose.msra.mxu0 0.0
    %2835 = vmatprep.subr.mxu0 0.0
    %2836 = vmatpush1.xpose.msra.mxu0 0.0
    %2837 = vmatprep.subr.mxu0 0.0
    %2838 = vmatpush1.xpose.msra.mxu0 0.0
    %2839 = vmatprep.subr.mxu0 0.0
    %2840 = vmatpush1.xpose.msra.mxu0 0.0
    %2841 = vmatprep.subr.mxu0 0.0
    %2842 = vmatpush1.xpose.msra.mxu0 0.0
    %2843 = vmatprep.subr.mxu0 0.0
    %2844 = vmatpush1.xpose.msra.mxu0 0.0
    %2845 = vmatprep.subr.mxu0 0.0
    %2846 = vmatpush1.xpose.msra.mxu0 0.0
    %2847 = vmatprep.subr.mxu0 0.0
    %2848 = vmatpush1.xpose.msra.mxu0 0.0
    %2849 = vmatprep.mubr.f32.mxu0 0.0
    %2850 = vmatmul.mubr.f32.gmra.mrb[0].mxu0 %v2781
    %v2851 = vpop.f32.mrb[0].mxu0
    %v2852 = vadd.f32 %v155, %v2851
    %v2853 = vpop.f32.mrb[0].mxu0
    %2854 = vdwg.mxu0
    %2855 = vrot.lane.b32.xlu0 %v2116, 112
    %v2856 = vpop.permute.xlu0 %2855
    %2857 = vrot.lane.b32.xlu0 %v2116, 80
    %v2858 = vpop.permute.xlu0 %2857
    %v2859 = vsel %vm289, %v2856, 0
    %v2861 = vsel %vm289, %v2858, 0
    %2863 = vmatprep.subr.mxu0 0.0
    %2864 = vmatpush1.xpose.msra.mxu0 %v2861
    %2865 = vmatprep.subr.mxu0 0.0
    %2866 = vmatpush1.xpose.msra.mxu0 0.0
    %2867 = vmatprep.subr.mxu0 0.0
    %2868 = vmatpush1.xpose.msra.mxu0 0.0
    %2869 = vmatprep.subr.mxu0 0.0
    %2870 = vmatpush1.xpose.msra.mxu0 0.0
    %2871 = vmatprep.subr.mxu0 0.0
    %2872 = vmatpush1.xpose.msra.mxu0 0.0
    %2873 = vmatprep.subr.mxu0 0.0
    %2874 = vmatpush1.xpose.msra.mxu0 0.0
    %2875 = vmatprep.subr.mxu0 0.0
    %2876 = vmatpush1.xpose.msra.mxu0 0.0
    %2877 = vmatprep.subr.mxu0 0.0
    %2878 = vmatpush1.xpose.msra.mxu0 0.0
    %2879 = vmatprep.subr.mxu0 0.0
    %2880 = vmatpush1.xpose.msra.mxu0 0.0
    %2881 = vmatprep.subr.mxu0 0.0
    %2882 = vmatpush1.xpose.msra.mxu0 0.0
    %2883 = vmatprep.subr.mxu0 0.0
    %2884 = vmatpush1.xpose.msra.mxu0 0.0
    %2885 = vmatprep.subr.mxu0 0.0
    %2886 = vmatpush1.xpose.msra.mxu0 0.0
    %2887 = vmatprep.subr.mxu0 0.0
    %2888 = vmatpush1.xpose.msra.mxu0 0.0
    %2889 = vmatprep.subr.mxu0 0.0
    %2890 = vmatpush1.xpose.msra.mxu0 0.0
    %2891 = vmatprep.subr.mxu0 0.0
    %2892 = vmatpush1.xpose.msra.mxu0 0.0
    %2893 = vmatprep.subr.mxu0 0.0
    %2894 = vmatpush1.xpose.msra.mxu0 0.0
    %2895 = vmatprep.subr.mxu0 0.0
    %2896 = vmatpush1.xpose.msra.mxu0 0.0
    %2897 = vmatprep.subr.mxu0 0.0
    %2898 = vmatpush1.xpose.msra.mxu0 0.0
    %2899 = vmatprep.subr.mxu0 0.0
    %2900 = vmatpush1.xpose.msra.mxu0 0.0
    %2901 = vmatprep.subr.mxu0 0.0
    %2902 = vmatpush1.xpose.msra.mxu0 0.0
    %2903 = vmatprep.subr.mxu0 0.0
    %2904 = vmatpush1.xpose.msra.mxu0 0.0
    %2905 = vmatprep.subr.mxu0 0.0
    %2906 = vmatpush1.xpose.msra.mxu0 0.0
    %2907 = vmatprep.subr.mxu0 0.0
    %2908 = vmatpush1.xpose.msra.mxu0 0.0
    %2909 = vmatprep.subr.mxu0 0.0
    %2910 = vmatpush1.xpose.msra.mxu0 0.0
    %2911 = vmatprep.subr.mxu0 0.0
    %2912 = vmatpush1.xpose.msra.mxu0 0.0
    %2913 = vmatprep.subr.mxu0 0.0
    %2914 = vmatpush1.xpose.msra.mxu0 0.0
    %2915 = vmatprep.subr.mxu0 0.0
    %2916 = vmatpush1.xpose.msra.mxu0 0.0
    %2917 = vmatprep.subr.mxu0 0.0
    %2918 = vmatpush1.xpose.msra.mxu0 0.0
    %2919 = vmatprep.subr.mxu0 0.0
    %2920 = vmatpush1.xpose.msra.mxu0 0.0
    %2921 = vmatprep.subr.mxu0 0.0
    %2922 = vmatpush1.xpose.msra.mxu0 0.0
    %2923 = vmatprep.subr.mxu0 0.0
    %2924 = vmatpush1.xpose.msra.mxu0 0.0
    %2925 = vmatprep.subr.mxu0 0.0
    %2926 = vmatpush1.xpose.msra.mxu0 0.0
    %2927 = vmatprep.mubr.f32.mxu0 0.0
    %2928 = vmatmul.mubr.f32.gmra.mrb[0].mxu0 %v2859
    %v2929 = vpop.f32.mrb[0].mxu0
    %v2930 = vadd.f32 %v155, %v2929
    %v2931 = vpop.f32.mrb[0].mxu0
    %2932 = vdwg.mxu0
    %v2933 = vsel %vm289, %v2852, -inf
    %2934 = vmax.xlane.f32.xlu0 %v2933
    %v2935 = vpop.xlane.xlu0 %2934
    %v2936 = vsel %vm289, %v2930, -inf
    %2937 = vmax.xlane.f32.xlu0 %v2936
    %v2938 = vpop.xlane.xlu0 %2937
    %v2939 = vsub.f32 %v2852, %v2935
    %v2940 = vsub.f32 %v2930, %v2938
    %v2941 = vmul.f32 %v2939, 1.442695
    %v2942 = vpow.pop %v2941
    %v2943 = vmul.f32 %v2940, 1.442695
    %v2944 = vpow.pop %v2943
    %v2945 = vsel %vm289, %v2942, 0.0
    %2946 = vadd.xlane.f32.xlu0 %v2945
    %v2947 = vpop.xlane.xlu0 %2946
    %v2948 = vsel %vm289, %v2944, 0.0
    %2949 = vadd.xlane.f32.xlu0 %v2948
    %v2950 = vpop.xlane.xlu0 %2949
    %v2951 = vrcp.pop %v2947
    %v2952 = vrcp.pop %v2950
    %v2953 = vmul.f32 %v2942, %v2951
    %v2954 = vmul.f32 %v2944, %v2952
    %2955 = vrot.lane.b32.xlu0 %v2111, 48
    %v2956 = vpop.permute.xlu0 %2955
    %v2959 = vsel %vm289, %v2953, 0
    %2961 = vmatprep.subr.mxu0 0.0
    %2962 = vmatpush1.msra.mxu0 %v2956
    %2963 = vmatprep.subr.mxu0 0.0
    %2964 = vmatpush1.msra.mxu0 0.0
    %2965 = vmatprep.subr.mxu0 0.0
    %2966 = vmatpush1.msra.mxu0 0.0
    %2967 = vmatprep.subr.mxu0 0.0
    %2968 = vmatpush1.msra.mxu0 0.0
    %2969 = vmatprep.subr.mxu0 0.0
    %2970 = vmatpush1.msra.mxu0 0.0
    %2971 = vmatprep.subr.mxu0 0.0
    %2972 = vmatpush1.msra.mxu0 0.0
    %2973 = vmatprep.subr.mxu0 0.0
    %2974 = vmatpush1.msra.mxu0 0.0
    %2975 = vmatprep.subr.mxu0 0.0
    %2976 = vmatpush1.msra.mxu0 0.0
    %2977 = vmatprep.subr.mxu0 0.0
    %2978 = vmatpush1.msra.mxu0 0.0
    %2979 = vmatprep.subr.mxu0 0.0
    %2980 = vmatpush1.msra.mxu0 0.0
    %2981 = vmatprep.subr.mxu0 0.0
    %2982 = vmatpush1.msra.mxu0 0.0
    %2983 = vmatprep.subr.mxu0 0.0
    %2984 = vmatpush1.msra.mxu0 0.0
    %2985 = vmatprep.subr.mxu0 0.0
    %2986 = vmatpush1.msra.mxu0 0.0
    %2987 = vmatprep.subr.mxu0 0.0
    %2988 = vmatpush1.msra.mxu0 0.0
    %2989 = vmatprep.subr.mxu0 0.0
    %2990 = vmatpush1.msra.mxu0 0.0
    %2991 = vmatprep.subr.mxu0 0.0
    %2992 = vmatpush1.msra.mxu0 0.0
    %2993 = vmatprep.subr.mxu0 0.0
    %2994 = vmatpush1.msra.mxu0 0.0
    %2995 = vmatprep.subr.mxu0 0.0
    %2996 = vmatpush1.msra.mxu0 0.0
    %2997 = vmatprep.subr.mxu0 0.0
    %2998 = vmatpush1.msra.mxu0 0.0
    %2999 = vmatprep.subr.mxu0 0.0
    %3000 = vmatpush1.msra.mxu0 0.0
    %3001 = vmatprep.subr.mxu0 0.0
    %3002 = vmatpush1.msra.mxu0 0.0
    %3003 = vmatprep.subr.mxu0 0.0
    %3004 = vmatpush1.msra.mxu0 0.0
    %3005 = vmatprep.subr.mxu0 0.0
    %3006 = vmatpush1.msra.mxu0 0.0
    %3007 = vmatprep.subr.mxu0 0.0
    %3008 = vmatpush1.msra.mxu0 0.0
    %3009 = vmatprep.subr.mxu0 0.0
    %3010 = vmatpush1.msra.mxu0 0.0
    %3011 = vmatprep.subr.mxu0 0.0
    %3012 = vmatpush1.msra.mxu0 0.0
    %3013 = vmatprep.subr.mxu0 0.0
    %3014 = vmatpush1.msra.mxu0 0.0
    %3015 = vmatprep.subr.mxu0 0.0
    %3016 = vmatpush1.msra.mxu0 0.0
    %3017 = vmatprep.subr.mxu0 0.0
    %3018 = vmatpush1.msra.mxu0 0.0
    %3019 = vmatprep.subr.mxu0 0.0
    %3020 = vmatpush1.msra.mxu0 0.0
    %3021 = vmatprep.subr.mxu0 0.0
    %3022 = vmatpush1.msra.mxu0 0.0
    %3023 = vmatprep.subr.mxu0 0.0
    %3024 = vmatpush1.msra.mxu0 0.0
    %3025 = vmatprep.mubr.f32.mxu0 0.0
    %3026 = vmatmul.mubr.f32.gmra.mrb[0].mxu0 %v2959
    %v3027 = vpop.f32.mrb[0].mxu0
    %v3028 = vadd.f32 0.0, %v3027
    %v3029 = vpop.f32.mrb[0].mxu0
    %3030 = vdwg.mxu0
    %3031 = vrot.lane.b32.xlu0 %v2116, 48
    %v3032 = vpop.permute.xlu0 %3031
    %v3035 = vsel %vm289, %v2954, 0
    %3037 = vmatprep.subr.mxu0 0.0
    %3038 = vmatpush1.msra.mxu0 %v3032
    %3039 = vmatprep.subr.mxu0 0.0
    %3040 = vmatpush1.msra.mxu0 0.0
    %3041 = vmatprep.subr.mxu0 0.0
    %3042 = vmatpush1.msra.mxu0 0.0
    %3043 = vmatprep.subr.mxu0 0.0
    %3044 = vmatpush1.msra.mxu0 0.0
    %3045 = vmatprep.subr.mxu0 0.0
    %3046 = vmatpush1.msra.mxu0 0.0
    %3047 = vmatprep.subr.mxu0 0.0
    %3048 = vmatpush1.msra.mxu0 0.0
    %3049 = vmatprep.subr.mxu0 0.0
    %3050 = vmatpush1.msra.mxu0 0.0
    %3051 = vmatprep.subr.mxu0 0.0
    %3052 = vmatpush1.msra.mxu0 0.0
    %3053 = vmatprep.subr.mxu0 0.0
    %3054 = vmatpush1.msra.mxu0 0.0
    %3055 = vmatprep.subr.mxu0 0.0
    %3056 = vmatpush1.msra.mxu0 0.0
    %3057 = vmatprep.subr.mxu0 0.0
    %3058 = vmatpush1.msra.mxu0 0.0
    %3059 = vmatprep.subr.mxu0 0.0
    %3060 = vmatpush1.msra.mxu0 0.0
    %3061 = vmatprep.subr.mxu0 0.0
    %3062 = vmatpush1.msra.mxu0 0.0
    %3063 = vmatprep.subr.mxu0 0.0
    %3064 = vmatpush1.msra.mxu0 0.0
    %3065 = vmatprep.subr.mxu0 0.0
    %3066 = vmatpush1.msra.mxu0 0.0
    %3067 = vmatprep.subr.mxu0 0.0
    %3068 = vmatpush1.msra.mxu0 0.0
    %3069 = vmatprep.subr.mxu0 0.0
    %3070 = vmatpush1.msra.mxu0 0.0
    %3071 = vmatprep.subr.mxu0 0.0
    %3072 = vmatpush1.msra.mxu0 0.0
    %3073 = vmatprep.subr.mxu0 0.0
    %3074 = vmatpush1.msra.mxu0 0.0
    %3075 = vmatprep.subr.mxu0 0.0
    %3076 = vmatpush1.msra.mxu0 0.0
    %3077 = vmatprep.subr.mxu0 0.0
    %3078 = vmatpush1.msra.mxu0 0.0
    %3079 = vmatprep.subr.mxu0 0.0
    %3080 = vmatpush1.msra.mxu0 0.0
    %3081 = vmatprep.subr.mxu0 0.0
    %3082 = vmatpush1.msra.mxu0 0.0
    %3083 = vmatprep.subr.mxu0 0.0
    %3084 = vmatpush1.msra.mxu0 0.0
    %3085 = vmatprep.subr.mxu0 0.0
    %3086 = vmatpush1.msra.mxu0 0.0
    %3087 = vmatprep.subr.mxu0 0.0
    %3088 = vmatpush1.msra.mxu0 0.0
    %3089 = vmatprep.subr.mxu0 0.0
    %3090 = vmatpush1.msra.mxu0 0.0
    %3091 = vmatprep.subr.mxu0 0.0
    %3092 = vmatpush1.msra.mxu0 0.0
    %3093 = vmatprep.subr.mxu0 0.0
    %3094 = vmatpush1.msra.mxu0 0.0
    %3095 = vmatprep.subr.mxu0 0.0
    %3096 = vmatpush1.msra.mxu0 0.0
    %3097 = vmatprep.subr.mxu0 0.0
    %3098 = vmatpush1.msra.mxu0 0.0
    %3099 = vmatprep.subr.mxu0 0.0
    %3100 = vmatpush1.msra.mxu0 0.0
    %3101 = vmatprep.mubr.f32.mxu0 0.0
    %3102 = vmatmul.mubr.f32.gmra.mrb[0].mxu0 %v3035
    %v3103 = vpop.f32.mrb[0].mxu0
    %v3104 = vadd.f32 0.0, %v3103
    %v3105 = vpop.f32.mrb[0].mxu0
    %3106 = vdwg.mxu0
    %3107 = vrot.lane.b32.xlu0 %v2111, 104
    %v3108 = vpop.permute.xlu0 %3107
    %3109 = vrot.lane.b32.xlu0 %v2111, 72
    %v3110 = vpop.permute.xlu0 %3109
    %v3111 = vsel %vm289, %v3108, 0
    %v3113 = vsel %vm289, %v3110, 0
    %3115 = vmatprep.subr.mxu0 0.0
    %3116 = vmatpush1.xpose.msra.mxu0 %v3113
    %3117 = vmatprep.subr.mxu0 0.0
    %3118 = vmatpush1.xpose.msra.mxu0 0.0
    %3119 = vmatprep.subr.mxu0 0.0
    %3120 = vmatpush1.xpose.msra.mxu0 0.0
    %3121 = vmatprep.subr.mxu0 0.0
    %3122 = vmatpush1.xpose.msra.mxu0 0.0
    %3123 = vmatprep.subr.mxu0 0.0
    %3124 = vmatpush1.xpose.msra.mxu0 0.0
    %3125 = vmatprep.subr.mxu0 0.0
    %3126 = vmatpush1.xpose.msra.mxu0 0.0
    %3127 = vmatprep.subr.mxu0 0.0
    %3128 = vmatpush1.xpose.msra.mxu0 0.0
    %3129 = vmatprep.subr.mxu0 0.0
    %3130 = vmatpush1.xpose.msra.mxu0 0.0
    %3131 = vmatprep.subr.mxu0 0.0
    %3132 = vmatpush1.xpose.msra.mxu0 0.0
    %3133 = vmatprep.subr.mxu0 0.0
    %3134 = vmatpush1.xpose.msra.mxu0 0.0
    %3135 = vmatprep.subr.mxu0 0.0
    %3136 = vmatpush1.xpose.msra.mxu0 0.0
    %3137 = vmatprep.subr.mxu0 0.0
    %3138 = vmatpush1.xpose.msra.mxu0 0.0
    %3139 = vmatprep.subr.mxu0 0.0
    %3140 = vmatpush1.xpose.msra.mxu0 0.0
    %3141 = vmatprep.subr.mxu0 0.0
    %3142 = vmatpush1.xpose.msra.mxu0 0.0
    %3143 = vmatprep.subr.mxu0 0.0
    %3144 = vmatpush1.xpose.msra.mxu0 0.0
    %3145 = vmatprep.subr.mxu0 0.0
    %3146 = vmatpush1.xpose.msra.mxu0 0.0
    %3147 = vmatprep.subr.mxu0 0.0
    %3148 = vmatpush1.xpose.msra.mxu0 0.0
    %3149 = vmatprep.subr.mxu0 0.0
    %3150 = vmatpush1.xpose.msra.mxu0 0.0
    %3151 = vmatprep.subr.mxu0 0.0
    %3152 = vmatpush1.xpose.msra.mxu0 0.0
    %3153 = vmatprep.subr.mxu0 0.0
    %3154 = vmatpush1.xpose.msra.mxu0 0.0
    %3155 = vmatprep.subr.mxu0 0.0
    %3156 = vmatpush1.xpose.msra.mxu0 0.0
    %3157 = vmatprep.subr.mxu0 0.0
    %3158 = vmatpush1.xpose.msra.mxu0 0.0
    %3159 = vmatprep.subr.mxu0 0.0
    %3160 = vmatpush1.xpose.msra.mxu0 0.0
    %3161 = vmatprep.subr.mxu0 0.0
    %3162 = vmatpush1.xpose.msra.mxu0 0.0
    %3163 = vmatprep.subr.mxu0 0.0
    %3164 = vmatpush1.xpose.msra.mxu0 0.0
    %3165 = vmatprep.subr.mxu0 0.0
    %3166 = vmatpush1.xpose.msra.mxu0 0.0
    %3167 = vmatprep.subr.mxu0 0.0
    %3168 = vmatpush1.xpose.msra.mxu0 0.0
    %3169 = vmatprep.subr.mxu0 0.0
    %3170 = vmatpush1.xpose.msra.mxu0 0.0
    %3171 = vmatprep.subr.mxu0 0.0
    %3172 = vmatpush1.xpose.msra.mxu0 0.0
    %3173 = vmatprep.subr.mxu0 0.0
    %3174 = vmatpush1.xpose.msra.mxu0 0.0
    %3175 = vmatprep.subr.mxu0 0.0
    %3176 = vmatpush1.xpose.msra.mxu0 0.0
    %3177 = vmatprep.subr.mxu0 0.0
    %3178 = vmatpush1.xpose.msra.mxu0 0.0
    %3179 = vmatprep.mubr.f32.mxu0 0.0
    %3180 = vmatmul.mubr.f32.gmra.mrb[0].mxu0 %v3111
    %v3181 = vpop.f32.mrb[0].mxu0
    %v3182 = vadd.f32 %v155, %v3181
    %v3183 = vpop.f32.mrb[0].mxu0
    %3184 = vdwg.mxu0
    %3185 = vrot.lane.b32.xlu0 %v2116, 104
    %v3186 = vpop.permute.xlu0 %3185
    %3187 = vrot.lane.b32.xlu0 %v2116, 72
    %v3188 = vpop.permute.xlu0 %3187
    %v3189 = vsel %vm289, %v3186, 0
    %v3191 = vsel %vm289, %v3188, 0
    %3193 = vmatprep.subr.mxu0 0.0
    %3194 = vmatpush1.xpose.msra.mxu0 %v3191
    %3195 = vmatprep.subr.mxu0 0.0
    %3196 = vmatpush1.xpose.msra.mxu0 0.0
    %3197 = vmatprep.subr.mxu0 0.0
    %3198 = vmatpush1.xpose.msra.mxu0 0.0
    %3199 = vmatprep.subr.mxu0 0.0
    %3200 = vmatpush1.xpose.msra.mxu0 0.0
    %3201 = vmatprep.subr.mxu0 0.0
    %3202 = vmatpush1.xpose.msra.mxu0 0.0
    %3203 = vmatprep.subr.mxu0 0.0
    %3204 = vmatpush1.xpose.msra.mxu0 0.0
    %3205 = vmatprep.subr.mxu0 0.0
    %3206 = vmatpush1.xpose.msra.mxu0 0.0
    %3207 = vmatprep.subr.mxu0 0.0
    %3208 = vmatpush1.xpose.msra.mxu0 0.0
    %3209 = vmatprep.subr.mxu0 0.0
    %3210 = vmatpush1.xpose.msra.mxu0 0.0
    %3211 = vmatprep.subr.mxu0 0.0
    %3212 = vmatpush1.xpose.msra.mxu0 0.0
    %3213 = vmatprep.subr.mxu0 0.0
    %3214 = vmatpush1.xpose.msra.mxu0 0.0
    %3215 = vmatprep.subr.mxu0 0.0
    %3216 = vmatpush1.xpose.msra.mxu0 0.0
    %3217 = vmatprep.subr.mxu0 0.0
    %3218 = vmatpush1.xpose.msra.mxu0 0.0
    %3219 = vmatprep.subr.mxu0 0.0
    %3220 = vmatpush1.xpose.msra.mxu0 0.0
    %3221 = vmatprep.subr.mxu0 0.0
    %3222 = vmatpush1.xpose.msra.mxu0 0.0
    %3223 = vmatprep.subr.mxu0 0.0
    %3224 = vmatpush1.xpose.msra.mxu0 0.0
    %3225 = vmatprep.subr.mxu0 0.0
    %3226 = vmatpush1.xpose.msra.mxu0 0.0
    %3227 = vmatprep.subr.mxu0 0.0
    %3228 = vmatpush1.xpose.msra.mxu0 0.0
    %3229 = vmatprep.subr.mxu0 0.0
    %3230 = vmatpush1.xpose.msra.mxu0 0.0
    %3231 = vmatprep.subr.mxu0 0.0
    %3232 = vmatpush1.xpose.msra.mxu0 0.0
    %3233 = vmatprep.subr.mxu0 0.0
    %3234 = vmatpush1.xpose.msra.mxu0 0.0
    %3235 = vmatprep.subr.mxu0 0.0
    %3236 = vmatpush1.xpose.msra.mxu0 0.0
    %3237 = vmatprep.subr.mxu0 0.0
    %3238 = vmatpush1.xpose.msra.mxu0 0.0
    %3239 = vmatprep.subr.mxu0 0.0
    %3240 = vmatpush1.xpose.msra.mxu0 0.0
    %3241 = vmatprep.subr.mxu0 0.0
    %3242 = vmatpush1.xpose.msra.mxu0 0.0
    %3243 = vmatprep.subr.mxu0 0.0
    %3244 = vmatpush1.xpose.msra.mxu0 0.0
    %3245 = vmatprep.subr.mxu0 0.0
    %3246 = vmatpush1.xpose.msra.mxu0 0.0
    %3247 = vmatprep.subr.mxu0 0.0
    %3248 = vmatpush1.xpose.msra.mxu0 0.0
    %3249 = vmatprep.subr.mxu0 0.0
    %3250 = vmatpush1.xpose.msra.mxu0 0.0
    %3251 = vmatprep.subr.mxu0 0.0
    %3252 = vmatpush1.xpose.msra.mxu0 0.0
    %3253 = vmatprep.subr.mxu0 0.0
    %3254 = vmatpush1.xpose.msra.mxu0 0.0
    %3255 = vmatprep.subr.mxu0 0.0
    %3256 = vmatpush1.xpose.msra.mxu0 0.0
    %3257 = vmatprep.mubr.f32.mxu0 0.0
    %3258 = vmatmul.mubr.f32.gmra.mrb[0].mxu0 %v3189
    %v3259 = vpop.f32.mrb[0].mxu0
    %v3260 = vadd.f32 %v155, %v3259
    %v3261 = vpop.f32.mrb[0].mxu0
    %3262 = vdwg.mxu0
    %v3263 = vsel %vm289, %v3182, -inf
    %3264 = vmax.xlane.f32.xlu0 %v3263
    %v3265 = vpop.xlane.xlu0 %3264
    %v3266 = vsel %vm289, %v3260, -inf
    %3267 = vmax.xlane.f32.xlu0 %v3266
    %v3268 = vpop.xlane.xlu0 %3267
    %v3269 = vsub.f32 %v3182, %v3265
    %v3270 = vsub.f32 %v3260, %v3268
    %v3271 = vmul.f32 %v3269, 1.442695
    %v3272 = vpow.pop %v3271
    %v3273 = vmul.f32 %v3270, 1.442695
    %v3274 = vpow.pop %v3273
    %v3275 = vsel %vm289, %v3272, 0.0
    %3276 = vadd.xlane.f32.xlu0 %v3275
    %v3277 = vpop.xlane.xlu0 %3276
    %v3278 = vsel %vm289, %v3274, 0.0
    %3279 = vadd.xlane.f32.xlu0 %v3278
    %v3280 = vpop.xlane.xlu0 %3279
    %v3281 = vrcp.pop %v3277
    %v3282 = vrcp.pop %v3280
    %v3283 = vmul.f32 %v3272, %v3281
    %v3284 = vmul.f32 %v3274, %v3282
    %3285 = vrot.lane.b32.xlu0 %v2111, 40
    %v3286 = vpop.permute.xlu0 %3285
    %v3289 = vsel %vm289, %v3283, 0
    %3291 = vmatprep.subr.mxu0 0.0
    %3292 = vmatpush1.msra.mxu0 %v3286
    %3293 = vmatprep.subr.mxu0 0.0
    %3294 = vmatpush1.msra.mxu0 0.0
    %3295 = vmatprep.subr.mxu0 0.0
    %3296 = vmatpush1.msra.mxu0 0.0
    %3297 = vmatprep.subr.mxu0 0.0
    %3298 = vmatpush1.msra.mxu0 0.0
    %3299 = vmatprep.subr.mxu0 0.0
    %3300 = vmatpush1.msra.mxu0 0.0
    %3301 = vmatprep.subr.mxu0 0.0
    %3302 = vmatpush1.msra.mxu0 0.0
    %3303 = vmatprep.subr.mxu0 0.0
    %3304 = vmatpush1.msra.mxu0 0.0
    %3305 = vmatprep.subr.mxu0 0.0
    %3306 = vmatpush1.msra.mxu0 0.0
    %3307 = vmatprep.subr.mxu0 0.0
    %3308 = vmatpush1.msra.mxu0 0.0
    %3309 = vmatprep.subr.mxu0 0.0
    %3310 = vmatpush1.msra.mxu0 0.0
    %3311 = vmatprep.subr.mxu0 0.0
    %3312 = vmatpush1.msra.mxu0 0.0
    %3313 = vmatprep.subr.mxu0 0.0
    %3314 = vmatpush1.msra.mxu0 0.0
    %3315 = vmatprep.subr.mxu0 0.0
    %3316 = vmatpush1.msra.mxu0 0.0
    %3317 = vmatprep.subr.mxu0 0.0
    %3318 = vmatpush1.msra.mxu0 0.0
    %3319 = vmatprep.subr.mxu0 0.0
    %3320 = vmatpush1.msra.mxu0 0.0
    %3321 = vmatprep.subr.mxu0 0.0
    %3322 = vmatpush1.msra.mxu0 0.0
    %3323 = vmatprep.subr.mxu0 0.0
    %3324 = vmatpush1.msra.mxu0 0.0
    %3325 = vmatprep.subr.mxu0 0.0
    %3326 = vmatpush1.msra.mxu0 0.0
    %3327 = vmatprep.subr.mxu0 0.0
    %3328 = vmatpush1.msra.mxu0 0.0
    %3329 = vmatprep.subr.mxu0 0.0
    %3330 = vmatpush1.msra.mxu0 0.0
    %3331 = vmatprep.subr.mxu0 0.0
    %3332 = vmatpush1.msra.mxu0 0.0
    %3333 = vmatprep.subr.mxu0 0.0
    %3334 = vmatpush1.msra.mxu0 0.0
    %3335 = vmatprep.subr.mxu0 0.0
    %3336 = vmatpush1.msra.mxu0 0.0
    %3337 = vmatprep.subr.mxu0 0.0
    %3338 = vmatpush1.msra.mxu0 0.0
    %3339 = vmatprep.subr.mxu0 0.0
    %3340 = vmatpush1.msra.mxu0 0.0
    %3341 = vmatprep.subr.mxu0 0.0
    %3342 = vmatpush1.msra.mxu0 0.0
    %3343 = vmatprep.subr.mxu0 0.0
    %3344 = vmatpush1.msra.mxu0 0.0
    %3345 = vmatprep.subr.mxu0 0.0
    %3346 = vmatpush1.msra.mxu0 0.0
    %3347 = vmatprep.subr.mxu0 0.0
    %3348 = vmatpush1.msra.mxu0 0.0
    %3349 = vmatprep.subr.mxu0 0.0
    %3350 = vmatpush1.msra.mxu0 0.0
    %3351 = vmatprep.subr.mxu0 0.0
    %3352 = vmatpush1.msra.mxu0 0.0
    %3353 = vmatprep.subr.mxu0 0.0
    %3354 = vmatpush1.msra.mxu0 0.0
    %3355 = vmatprep.mubr.f32.mxu0 0.0
    %3356 = vmatmul.mubr.f32.gmra.mrb[0].mxu0 %v3289
    %v3357 = vpop.f32.mrb[0].mxu0
    %v3358 = vadd.f32 0.0, %v3357
    %v3359 = vpop.f32.mrb[0].mxu0
    %3360 = vdwg.mxu0
    %3361 = vrot.lane.b32.xlu0 %v2116, 40
    %v3362 = vpop.permute.xlu0 %3361
    %v3365 = vsel %vm289, %v3284, 0
    %3367 = vmatprep.subr.mxu0 0.0
    %3368 = vmatpush1.msra.mxu0 %v3362
    %3369 = vmatprep.subr.mxu0 0.0
    %3370 = vmatpush1.msra.mxu0 0.0
    %3371 = vmatprep.subr.mxu0 0.0
    %3372 = vmatpush1.msra.mxu0 0.0
    %3373 = vmatprep.subr.mxu0 0.0
    %3374 = vmatpush1.msra.mxu0 0.0
    %3375 = vmatprep.subr.mxu0 0.0
    %3376 = vmatpush1.msra.mxu0 0.0
    %3377 = vmatprep.subr.mxu0 0.0
    %3378 = vmatpush1.msra.mxu0 0.0
    %3379 = vmatprep.subr.mxu0 0.0
    %3380 = vmatpush1.msra.mxu0 0.0
    %3381 = vmatprep.subr.mxu0 0.0
    %3382 = vmatpush1.msra.mxu0 0.0
    %3383 = vmatprep.subr.mxu0 0.0
    %3384 = vmatpush1.msra.mxu0 0.0
    %3385 = vmatprep.subr.mxu0 0.0
    %3386 = vmatpush1.msra.mxu0 0.0
    %3387 = vmatprep.subr.mxu0 0.0
    %3388 = vmatpush1.msra.mxu0 0.0
    %3389 = vmatprep.subr.mxu0 0.0
    %3390 = vmatpush1.msra.mxu0 0.0
    %3391 = vmatprep.subr.mxu0 0.0
    %3392 = vmatpush1.msra.mxu0 0.0
    %3393 = vmatprep.subr.mxu0 0.0
    %3394 = vmatpush1.msra.mxu0 0.0
    %3395 = vmatprep.subr.mxu0 0.0
    %3396 = vmatpush1.msra.mxu0 0.0
    %3397 = vmatprep.subr.mxu0 0.0
    %3398 = vmatpush1.msra.mxu0 0.0
    %3399 = vmatprep.subr.mxu0 0.0
    %3400 = vmatpush1.msra.mxu0 0.0
    %3401 = vmatprep.subr.mxu0 0.0
    %3402 = vmatpush1.msra.mxu0 0.0
    %3403 = vmatprep.subr.mxu0 0.0
    %3404 = vmatpush1.msra.mxu0 0.0
    %3405 = vmatprep.subr.mxu0 0.0
    %3406 = vmatpush1.msra.mxu0 0.0
    %3407 = vmatprep.subr.mxu0 0.0
    %3408 = vmatpush1.msra.mxu0 0.0
    %3409 = vmatprep.subr.mxu0 0.0
    %3410 = vmatpush1.msra.mxu0 0.0
    %3411 = vmatprep.subr.mxu0 0.0
    %3412 = vmatpush1.msra.mxu0 0.0
    %3413 = vmatprep.subr.mxu0 0.0
    %3414 = vmatpush1.msra.mxu0 0.0
    %3415 = vmatprep.subr.mxu0 0.0
    %3416 = vmatpush1.msra.mxu0 0.0
    %3417 = vmatprep.subr.mxu0 0.0
    %3418 = vmatpush1.msra.mxu0 0.0
    %3419 = vmatprep.subr.mxu0 0.0
    %3420 = vmatpush1.msra.mxu0 0.0
    %3421 = vmatprep.subr.mxu0 0.0
    %3422 = vmatpush1.msra.mxu0 0.0
    %3423 = vmatprep.subr.mxu0 0.0
    %3424 = vmatpush1.msra.mxu0 0.0
    %3425 = vmatprep.subr.mxu0 0.0
    %3426 = vmatpush1.msra.mxu0 0.0
    %3427 = vmatprep.subr.mxu0 0.0
    %3428 = vmatpush1.msra.mxu0 0.0
    %3429 = vmatprep.subr.mxu0 0.0
    %3430 = vmatpush1.msra.mxu0 0.0
    %3431 = vmatprep.mubr.f32.mxu0 0.0
    %3432 = vmatmul.mubr.f32.gmra.mrb[0].mxu0 %v3365
    %v3433 = vpop.f32.mrb[0].mxu0
    %v3434 = vadd.f32 0.0, %v3433
    %v3435 = vpop.f32.mrb[0].mxu0
    %3436 = vdwg.mxu0
    %3439 = vrot.lane.b32.xlu0 %v2698, 8
    %v3440 = vpop.permute.xlu0 %3439
    %3441 = vrot.lane.b32.xlu0 %v2774, 8
    %v3442 = vpop.permute.xlu0 %3441
    %3447 = vrot.lane.b32.xlu0 %v3028, 16
    %v3448 = vpop.permute.xlu0 %3447
    %3449 = vrot.lane.b32.xlu0 %v3104, 16
    %v3450 = vpop.permute.xlu0 %3449
    %3455 = vrot.lane.b32.xlu0 %v3358, 24
    %v3456 = vpop.permute.xlu0 %3455
    %3457 = vrot.lane.b32.xlu0 %v3434, 24
    %v3458 = vpop.permute.xlu0 %3457
    %v3461 = vsel %vm289, %v2368, %v3440
    %v3462 = vsel %vm289, %v2444, %v3442
    %v3463 = vsel %vm1631, %v3461, %v3448
    %v3464 = vsel %vm1631, %v3462, %v3450
    %v3465 = vsel %vm1634, %v3463, %v3456
    %v3466 = vsel %vm1634, %v3464, %v3458
    %s3467 = scalar_lea.vmem %s4, 32
    %v3468 = vld [vmem:[%s3467] sm:$0xff]
    %v3469 = vld [vmem:[%s3467 + $0x8] sm:$0xff]
    %v3470 = vld [vmem:[%s3467 + $0x10] sm:$0xff]
    %v3471 = vld [vmem:[%s3467 + $0x18] sm:$0xff]
    %v3473 = vsel %vm130, %v3465, 0
    %v3476 = vsel %vm130, %v3466, 0
    %3478 = vmatprep.subr.mxu0 0.0
    %3479 = vmatpush1.msra.mxu0 %v3468
    %3480 = vmatprep.subr.mxu0 0.0
    %3481 = vmatpush1.msra.mxu0 %v3469
    %3482 = vmatprep.subr.mxu0 0.0
    %3483 = vmatpush1.msra.mxu0 %v3470
    %3484 = vmatprep.subr.mxu0 0.0
    %3485 = vmatpush1.msra.mxu0 %v3471
    %3486 = vmatprep.subr.mxu0 0.0
    %3487 = vmatpush1.msra.mxu0 0.0
    %3488 = vmatprep.subr.mxu0 0.0
    %3489 = vmatpush1.msra.mxu0 0.0
    %3490 = vmatprep.subr.mxu0 0.0
    %3491 = vmatpush1.msra.mxu0 0.0
    %3492 = vmatprep.subr.mxu0 0.0
    %3493 = vmatpush1.msra.mxu0 0.0
    %3494 = vmatprep.subr.mxu0 0.0
    %3495 = vmatpush1.msra.mxu0 0.0
    %3496 = vmatprep.subr.mxu0 0.0
    %3497 = vmatpush1.msra.mxu0 0.0
    %3498 = vmatprep.subr.mxu0 0.0
    %3499 = vmatpush1.msra.mxu0 0.0
    %3500 = vmatprep.subr.mxu0 0.0
    %3501 = vmatpush1.msra.mxu0 0.0
    %3502 = vmatprep.subr.mxu0 0.0
    %3503 = vmatpush1.msra.mxu0 0.0
    %3504 = vmatprep.subr.mxu0 0.0
    %3505 = vmatpush1.msra.mxu0 0.0
    %3506 = vmatprep.subr.mxu0 0.0
    %3507 = vmatpush1.msra.mxu0 0.0
    %3508 = vmatprep.subr.mxu0 0.0
    %3509 = vmatpush1.msra.mxu0 0.0
    %3510 = vmatprep.subr.mxu0 0.0
    %3511 = vmatpush1.msra.mxu0 0.0
    %3512 = vmatprep.subr.mxu0 0.0
    %3513 = vmatpush1.msra.mxu0 0.0
    %3514 = vmatprep.subr.mxu0 0.0
    %3515 = vmatpush1.msra.mxu0 0.0
    %3516 = vmatprep.subr.mxu0 0.0
    %3517 = vmatpush1.msra.mxu0 0.0
    %3518 = vmatprep.subr.mxu0 0.0
    %3519 = vmatpush1.msra.mxu0 0.0
    %3520 = vmatprep.subr.mxu0 0.0
    %3521 = vmatpush1.msra.mxu0 0.0
    %3522 = vmatprep.subr.mxu0 0.0
    %3523 = vmatpush1.msra.mxu0 0.0
    %3524 = vmatprep.subr.mxu0 0.0
    %3525 = vmatpush1.msra.mxu0 0.0
    %3526 = vmatprep.subr.mxu0 0.0
    %3527 = vmatpush1.msra.mxu0 0.0
    %3528 = vmatprep.subr.mxu0 0.0
    %3529 = vmatpush1.msra.mxu0 0.0
    %3530 = vmatprep.subr.mxu0 0.0
    %3531 = vmatpush1.msra.mxu0 0.0
    %3532 = vmatprep.subr.mxu0 0.0
    %3533 = vmatpush1.msra.mxu0 0.0
    %3534 = vmatprep.subr.mxu0 0.0
    %3535 = vmatpush1.msra.mxu0 0.0
    %3536 = vmatprep.subr.mxu0 0.0
    %3537 = vmatpush1.msra.mxu0 0.0
    %3538 = vmatprep.subr.mxu0 0.0
    %3539 = vmatpush1.msra.mxu0 0.0
    %3540 = vmatprep.subr.mxu0 0.0
    %3541 = vmatpush1.msra.mxu0 0.0
    %3542 = vmatprep.mubr.f32.mxu0 0.0
    %3543 = vmatmul.mubr.f32.gmra.mrb[0].mxu0 %v3473
    %v3544 = vpop.f32.mrb[0].mxu0
    %v3545 = vadd.f32 0.0, %v3544
    %v3546 = vpop.f32.mrb[0].mxu0
    %3547 = vmatprep.mubr.f32.mxu0 0.0
    %3548 = vmatmul.mubr.f32.gmra.mrb[0].mxu0 %v3476
    %v3549 = vpop.f32.mrb[0].mxu0
    %v3550 = vadd.f32 0.0, %v3549
    %v3551 = vpop.f32.mrb[0].mxu0
    %3552 = vdwg.mxu0
    %v3553 = vadd.f32 %v1985, %v3545
    %v3554 = vadd.f32 %v1986, %v3550
    %s3555 = scalar_lea.vmem %s5, 1
    %v3556 = vld [vmem:[%s3555] sm:$0x1]
    %v3558 = vlaneseq
    %v3559 = vshrl.u32 %v3558, 7
    %v3560 = vsub.s32 0, %v3559
    %v3561 = vrot.slane %v3556, %v3560
    %v3563 = vadd.f32 %v3553, %v3561
    %v3564 = vadd.f32 %v3554, %v3561
    %s3565 = scalar_lea.vmem %s8, 1
    %v3566 = vld [vmem:[%s3565] sm:$0x1]
    %s3567 = scalar_lea.vmem %s9, 1
    %v3568 = vld [vmem:[%s3567] sm:$0x1]
    %v3569 = vsel %vm130, %v3563, 0.0
    %3570 = vadd.xlane.f32.xlu0 %v3569
    %v3571 = vpop.xlane.xlu0 %3570
    %v3572 = vsel %vm130, %v3564, 0.0
    %3573 = vadd.xlane.f32.xlu0 %v3572
    %v3574 = vpop.xlane.xlu0 %3573
    %v3575 = vmul.f32 %v3571, %v164
    %v3576 = vmul.f32 %v3574, %v164
    %v3577 = vsub.f32 %v3563, %v3575
    %v3578 = vsub.f32 %v3564, %v3576
    %v3579 = vmul.f32 %v3577, %v3577
    %v3580 = vmul.f32 %v3578, %v3578
    %v3581 = vsel %vm130, %v3579, 0.0
    %3582 = vadd.xlane.f32.xlu0 %v3581
    %v3583 = vpop.xlane.xlu0 %3582
    %v3584 = vsel %vm130, %v3580, 0.0
    %3585 = vadd.xlane.f32.xlu0 %v3584
    %v3586 = vpop.xlane.xlu0 %3585
    %v3587 = vmul.f32 %v3583, %v164
    %v3588 = vmul.f32 %v3586, %v164
    %v3589 = vadd.f32 %v3587, 1e-05
    %v3590 = vadd.f32 %v3588, 1e-05
    %v3591 = vrsqrt.pop %v3589
    %v3592 = vrsqrt.pop %v3590
    %v3593 = vmul.f32 %v3577, %v3591
    %v3594 = vmul.f32 %v3578, %v3592
    %v3596 = vlaneseq
    %v3597 = vshrl.u32 %v3596, 7
    %v3598 = vsub.s32 0, %v3597
    %v3599 = vrot.slane %v3566, %v3598
    %v3601 = vmul.f32 %v3593, %v3599
    %v3602 = vmul.f32 %v3594, %v3599
    %v3604 = vlaneseq
    %v3605 = vshrl.u32 %v3604, 7
    %v3606 = vsub.s32 0, %v3605
    %v3607 = vrot.slane %v3568, %v3606
    %v3609 = vadd.f32 %v3601, %v3607
    %v3610 = vadd.f32 %v3602, %v3607
    %s3611 = scalar_lea.vmem %s10, 32
    %v3612 = vld [vmem:[%s3611] sm:$0xff]
    %v3613 = vld [vmem:[%s3611 + $0x8] sm:$0xff]
    %v3614 = vld [vmem:[%s3611 + $0x10] sm:$0xff]
    %v3615 = vld [vmem:[%s3611 + $0x18] sm:$0xff]
    %s3616 = scalar_lea.vmem %s11, 1
    %v3617 = vld [vmem:[%s3616] sm:$0x1]
    %v3619 = vlaneseq
    %v3620 = vshrl.u32 %v3619, 7
    %v3621 = vsub.s32 0, %v3620
    %v3622 = vrot.slane %v3617, %v3621
    %v3625 = vsel %vm130, %v3609, 0
    %v3628 = vsel %vm130, %v3610, 0
    %3630 = vmatprep.subr.mxu0 0.0
    %3631 = vmatpush1.msra.mxu0 %v3612
    %3632 = vmatprep.subr.mxu0 0.0
    %3633 = vmatpush1.msra.mxu0 %v3613
    %3634 = vmatprep.subr.mxu0 0.0
    %3635 = vmatpush1.msra.mxu0 %v3614
    %3636 = vmatprep.subr.mxu0 0.0
    %3637 = vmatpush1.msra.mxu0 %v3615
    %3638 = vmatprep.subr.mxu0 0.0
    %3639 = vmatpush1.msra.mxu0 0.0
    %3640 = vmatprep.subr.mxu0 0.0
    %3641 = vmatpush1.msra.mxu0 0.0
    %3642 = vmatprep.subr.mxu0 0.0
    %3643 = vmatpush1.msra.mxu0 0.0
    %3644 = vmatprep.subr.mxu0 0.0
    %3645 = vmatpush1.msra.mxu0 0.0
    %3646 = vmatprep.subr.mxu0 0.0
    %3647 = vmatpush1.msra.mxu0 0.0
    %3648 = vmatprep.subr.mxu0 0.0
    %3649 = vmatpush1.msra.mxu0 0.0
    %3650 = vmatprep.subr.mxu0 0.0
    %3651 = vmatpush1.msra.mxu0 0.0
    %3652 = vmatprep.subr.mxu0 0.0
    %3653 = vmatpush1.msra.mxu0 0.0
    %3654 = vmatprep.subr.mxu0 0.0
    %3655 = vmatpush1.msra.mxu0 0.0
    %3656 = vmatprep.subr.mxu0 0.0
    %3657 = vmatpush1.msra.mxu0 0.0
    %3658 = vmatprep.subr.mxu0 0.0
    %3659 = vmatpush1.msra.mxu0 0.0
    %3660 = vmatprep.subr.mxu0 0.0
    %3661 = vmatpush1.msra.mxu0 0.0
    %3662 = vmatprep.subr.mxu0 0.0
    %3663 = vmatpush1.msra.mxu0 0.0
    %3664 = vmatprep.subr.mxu0 0.0
    %3665 = vmatpush1.msra.mxu0 0.0
    %3666 = vmatprep.subr.mxu0 0.0
    %3667 = vmatpush1.msra.mxu0 0.0
    %3668 = vmatprep.subr.mxu0 0.0
    %3669 = vmatpush1.msra.mxu0 0.0
    %3670 = vmatprep.subr.mxu0 0.0
    %3671 = vmatpush1.msra.mxu0 0.0
    %3672 = vmatprep.subr.mxu0 0.0
    %3673 = vmatpush1.msra.mxu0 0.0
    %3674 = vmatprep.subr.mxu0 0.0
    %3675 = vmatpush1.msra.mxu0 0.0
    %3676 = vmatprep.subr.mxu0 0.0
    %3677 = vmatpush1.msra.mxu0 0.0
    %3678 = vmatprep.subr.mxu0 0.0
    %3679 = vmatpush1.msra.mxu0 0.0
    %3680 = vmatprep.subr.mxu0 0.0
    %3681 = vmatpush1.msra.mxu0 0.0
    %3682 = vmatprep.subr.mxu0 0.0
    %3683 = vmatpush1.msra.mxu0 0.0
    %3684 = vmatprep.subr.mxu0 0.0
    %3685 = vmatpush1.msra.mxu0 0.0
    %3686 = vmatprep.subr.mxu0 0.0
    %3687 = vmatpush1.msra.mxu0 0.0
    %3688 = vmatprep.subr.mxu0 0.0
    %3689 = vmatpush1.msra.mxu0 0.0
    %3690 = vmatprep.subr.mxu0 0.0
    %3691 = vmatpush1.msra.mxu0 0.0
    %3692 = vmatprep.subr.mxu0 0.0
    %3693 = vmatpush1.msra.mxu0 0.0
    %3694 = vmatprep.mubr.f32.mxu0 0.0
    %3695 = vmatmul.mubr.f32.gmra.mrb[0].mxu0 %v3625
    %v3696 = vpop.f32.mrb[0].mxu0
    %v3697 = vadd.f32 %v3622, %v3696
    %v3698 = vpop.f32.mrb[0].mxu0
    %3699 = vmatprep.mubr.f32.mxu0 0.0
    %3700 = vmatmul.mubr.f32.gmra.mrb[0].mxu0 %v3628
    %v3701 = vpop.f32.mrb[0].mxu0
    %v3702 = vadd.f32 %v3622, %v3701
    %v3703 = vpop.f32.mrb[0].mxu0
    %3704 = vdwg.mxu0
    %v3705 = vmul.f32 %v3697, %v3697
    %v3706 = vmul.f32 %v3702, %v3702
    %v3707 = vmul.f32 %v3697, %v3705
    %v3708 = vmul.f32 %v3702, %v3706
    %v3709 = vmul.f32 %v3707, 0.044715
    %v3710 = vmul.f32 %v3708, 0.044715
    %v3711 = vadd.f32 %v3697, %v3709
    %v3712 = vadd.f32 %v3702, %v3710
    %v3713 = vmul.f32 %v3711, 0.7978846
    %v3714 = vmul.f32 %v3712, 0.7978846
    %v3715 = vtanh.pop %v3713
    %v3716 = vtanh.pop %v3714
    %v3717 = vadd.f32 %v3715, 1.0
    %v3718 = vadd.f32 %v3716, 1.0
    %v3719 = vmul.f32 %v3717, 0.5
    %v3720 = vmul.f32 %v3718, 0.5
    %v3721 = vmul.f32 %v3697, %v3719
    %v3722 = vmul.f32 %v3702, %v3720
    %s3723 = scalar_lea.vmem %s12, 128
    %v3724 = vld [vmem:[%s3723] sm:$0xff]
    %v3725 = vld [vmem:[%s3723 + $0x8] sm:$0xff]
    %v3726 = vld [vmem:[%s3723 + $0x10] sm:$0xff]
    %v3727 = vld [vmem:[%s3723 + $0x18] sm:$0xff]
    %v3728 = vld [vmem:[%s3723 + $0x20] sm:$0xff]
    %v3729 = vld [vmem:[%s3723 + $0x28] sm:$0xff]
    %v3730 = vld [vmem:[%s3723 + $0x30] sm:$0xff]
    %v3731 = vld [vmem:[%s3723 + $0x38] sm:$0xff]
    %v3732 = vld [vmem:[%s3723 + $0x40] sm:$0xff]
    %v3733 = vld [vmem:[%s3723 + $0x48] sm:$0xff]
    %v3734 = vld [vmem:[%s3723 + $0x50] sm:$0xff]
    %v3735 = vld [vmem:[%s3723 + $0x58] sm:$0xff]
    %v3736 = vld [vmem:[%s3723 + $0x60] sm:$0xff]
    %v3737 = vld [vmem:[%s3723 + $0x68] sm:$0xff]
    %v3738 = vld [vmem:[%s3723 + $0x70] sm:$0xff]
    %v3739 = vld [vmem:[%s3723 + $0x78] sm:$0xff]
    %s3740 = scalar_lea.vmem %s13, 1
    %v3741 = vld [vmem:[%s3740] sm:$0x1]
    %v3743 = vlaneseq
    %v3744 = vshrl.u32 %v3743, 7
    %v3745 = vsub.s32 0, %v3744
    %v3746 = vrot.slane %v3741, %v3745
    %3748 = vmatprep.subr.mxu0 0.0
    %3749 = vmatpush1.msra.mxu0 %v3724
    %3750 = vmatprep.subr.mxu0 0.0
    %3751 = vmatpush1.msra.mxu0 %v3725
    %3752 = vmatprep.subr.mxu0 0.0
    %3753 = vmatpush1.msra.mxu0 %v3726
    %3754 = vmatprep.subr.mxu0 0.0
    %3755 = vmatpush1.msra.mxu0 %v3727
    %3756 = vmatprep.subr.mxu0 0.0
    %3757 = vmatpush1.msra.mxu0 %v3728
    %3758 = vmatprep.subr.mxu0 0.0
    %3759 = vmatpush1.msra.mxu0 %v3729
    %3760 = vmatprep.subr.mxu0 0.0
    %3761 = vmatpush1.msra.mxu0 %v3730
    %3762 = vmatprep.subr.mxu0 0.0
    %3763 = vmatpush1.msra.mxu0 %v3731
    %3764 = vmatprep.subr.mxu0 0.0
    %3765 = vmatpush1.msra.mxu0 %v3732
    %3766 = vmatprep.subr.mxu0 0.0
    %3767 = vmatpush1.msra.mxu0 %v3733
    %3768 = vmatprep.subr.mxu0 0.0
    %3769 = vmatpush1.msra.mxu0 %v3734
    %3770 = vmatprep.subr.mxu0 0.0
    %3771 = vmatpush1.msra.mxu0 %v3735
    %3772 = vmatprep.subr.mxu0 0.0
    %3773 = vmatpush1.msra.mxu0 %v3736
    %3774 = vmatprep.subr.mxu0 0.0
    %3775 = vmatpush1.msra.mxu0 %v3737
    %3776 = vmatprep.subr.mxu0 0.0
    %3777 = vmatpush1.msra.mxu0 %v3738
    %3778 = vmatprep.subr.mxu0 0.0
    %3779 = vmatpush1.msra.mxu0 %v3739
    %3780 = vmatprep.subr.mxu0 0.0
    %3781 = vmatpush1.msra.mxu0 0.0
    %3782 = vmatprep.subr.mxu0 0.0
    %3783 = vmatpush1.msra.mxu0 0.0
    %3784 = vmatprep.subr.mxu0 0.0
    %3785 = vmatpush1.msra.mxu0 0.0
    %3786 = vmatprep.subr.mxu0 0.0
    %3787 = vmatpush1.msra.mxu0 0.0
    %3788 = vmatprep.subr.mxu0 0.0
    %3789 = vmatpush1.msra.mxu0 0.0
    %3790 = vmatprep.subr.mxu0 0.0
    %3791 = vmatpush1.msra.mxu0 0.0
    %3792 = vmatprep.subr.mxu0 0.0
    %3793 = vmatpush1.msra.mxu0 0.0
    %3794 = vmatprep.subr.mxu0 0.0
    %3795 = vmatpush1.msra.mxu0 0.0
    %3796 = vmatprep.subr.mxu0 0.0
    %3797 = vmatpush1.msra.mxu0 0.0
    %3798 = vmatprep.subr.mxu0 0.0
    %3799 = vmatpush1.msra.mxu0 0.0
    %3800 = vmatprep.subr.mxu0 0.0
    %3801 = vmatpush1.msra.mxu0 0.0
    %3802 = vmatprep.subr.mxu0 0.0
    %3803 = vmatpush1.msra.mxu0 0.0
    %3804 = vmatprep.subr.mxu0 0.0
    %3805 = vmatpush1.msra.mxu0 0.0
    %3806 = vmatprep.subr.mxu0 0.0
    %3807 = vmatpush1.msra.mxu0 0.0
    %3808 = vmatprep.subr.mxu0 0.0
    %3809 = vmatpush1.msra.mxu0 0.0
    %3810 = vmatprep.subr.mxu0 0.0
    %3811 = vmatpush1.msra.mxu0 0.0
    %3812 = vmatprep.mubr.f32.mxu0 0.0
    %3813 = vmatmul.mubr.f32.gmra.mrb[0].mxu0 %v3721
    %v3814 = vpop.f32.mrb[0].mxu0
    %v3815 = vadd.f32 %v3746, %v3814
    %v3816 = vpop.f32.mrb[0].mxu0
    %3817 = vmatprep.mubr.f32.mxu0 0.0
    %3818 = vmatmul.mubr.f32.gmra.mrb[0].mxu0 %v3722
    %v3819 = vpop.f32.mrb[0].mxu0
    %v3820 = vadd.f32 %v3746, %v3819
    %v3821 = vpop.f32.mrb[0].mxu0
    %3822 = vdwg.mxu0
    %v3823 = vadd.f32 %v3563, %v3815
    %v3824 = vadd.f32 %v3564, %v3820
    %v3825 = vld [vmem:[%s14] sm:$0x1]
    %v3826 = vld [vmem:[%s15] sm:$0x1]
    %v3827 = vsel %vm130, %v3823, 0.0
    %3828 = vadd.xlane.f32.xlu0 %v3827
    %v3829 = vpop.xlane.xlu0 %3828
    %v3830 = vsel %vm130, %v3824, 0.0
    %3831 = vadd.xlane.f32.xlu0 %v3830
    %v3832 = vpop.xlane.xlu0 %3831
    %v3833 = vmul.f32 %v3829, %v164
    %v3834 = vmul.f32 %v3832, %v164
    %v3835 = vsub.f32 %v3823, %v3833
    %v3836 = vsub.f32 %v3824, %v3834
    %v3837 = vmul.f32 %v3835, %v3835
    %v3838 = vmul.f32 %v3836, %v3836
    %v3839 = vsel %vm130, %v3837, 0.0
    %3840 = vadd.xlane.f32.xlu0 %v3839
    %v3841 = vpop.xlane.xlu0 %3840
    %v3842 = vsel %vm130, %v3838, 0.0
    %3843 = vadd.xlane.f32.xlu0 %v3842
    %v3844 = vpop.xlane.xlu0 %3843
    %v3845 = vmul.f32 %v3841, %v164
    %v3846 = vmul.f32 %v3844, %v164
    %v3847 = vadd.f32 %v3845, 1e-05
    %v3848 = vadd.f32 %v3846, 1e-05
    %v3849 = vrsqrt.pop %v3847
    %v3850 = vrsqrt.pop %v3848
    %v3851 = vmul.f32 %v3835, %v3849
    %v3852 = vmul.f32 %v3836, %v3850
    %v3854 = vlaneseq
    %v3855 = vshrl.u32 %v3854, 7
    %v3856 = vsub.s32 0, %v3855
    %v3857 = vrot.slane %v3825, %v3856
    %v3859 = vmul.f32 %v3851, %v3857
    %v3860 = vmul.f32 %v3852, %v3857
    %v3862 = vlaneseq
    %v3863 = vshrl.u32 %v3862, 7
    %v3864 = vsub.s32 0, %v3863
    %v3865 = vrot.slane %v3826, %v3864
    %v3867 = vadd.f32 %v3859, %v3865
    %v3868 = vadd.f32 %v3860, %v3865
    %v3869 = vld [vmem:[%s16] sm:$0xff]
    %v3870 = vld [vmem:[%s16 + $0x8] sm:$0xff]
    %v3871 = vld [vmem:[%s16 + $0x10] sm:$0xff]
    %v3872 = vld [vmem:[%s16 + $0x18] sm:$0xff]
    %v3874 = vsel %vm130, %v3867, 0
    %v3877 = vsel %vm130, %v3868, 0
    %3879 = vmatprep.subr.mxu0 0.0
    %3880 = vmatpush1.msra.mxu0 %v3869
    %3881 = vmatprep.subr.mxu0 0.0
    %3882 = vmatpush1.msra.mxu0 %v3870
    %3883 = vmatprep.subr.mxu0 0.0
    %3884 = vmatpush1.msra.mxu0 %v3871
    %3885 = vmatprep.subr.mxu0 0.0
    %3886 = vmatpush1.msra.mxu0 %v3872
    %3887 = vmatprep.subr.mxu0 0.0
    %3888 = vmatpush1.msra.mxu0 0.0
    %3889 = vmatprep.subr.mxu0 0.0
    %3890 = vmatpush1.msra.mxu0 0.0
    %3891 = vmatprep.subr.mxu0 0.0
    %3892 = vmatpush1.msra.mxu0 0.0
    %3893 = vmatprep.subr.mxu0 0.0
    %3894 = vmatpush1.msra.mxu0 0.0
    %3895 = vmatprep.subr.mxu0 0.0
    %3896 = vmatpush1.msra.mxu0 0.0
    %3897 = vmatprep.subr.mxu0 0.0
    %3898 = vmatpush1.msra.mxu0 0.0
    %3899 = vmatprep.subr.mxu0 0.0
    %3900 = vmatpush1.msra.mxu0 0.0
    %3901 = vmatprep.subr.mxu0 0.0
    %3902 = vmatpush1.msra.mxu0 0.0
    %3903 = vmatprep.subr.mxu0 0.0
    %3904 = vmatpush1.msra.mxu0 0.0
    %3905 = vmatprep.subr.mxu0 0.0
    %3906 = vmatpush1.msra.mxu0 0.0
    %3907 = vmatprep.subr.mxu0 0.0
    %3908 = vmatpush1.msra.mxu0 0.0
    %3909 = vmatprep.subr.mxu0 0.0
    %3910 = vmatpush1.msra.mxu0 0.0
    %3911 = vmatprep.subr.mxu0 0.0
    %3912 = vmatpush1.msra.mxu0 0.0
    %3913 = vmatprep.subr.mxu0 0.0
    %3914 = vmatpush1.msra.mxu0 0.0
    %3915 = vmatprep.subr.mxu0 0.0
    %3916 = vmatpush1.msra.mxu0 0.0
    %3917 = vmatprep.subr.mxu0 0.0
    %3918 = vmatpush1.msra.mxu0 0.0
    %3919 = vmatprep.subr.mxu0 0.0
    %3920 = vmatpush1.msra.mxu0 0.0
    %3921 = vmatprep.subr.mxu0 0.0
    %3922 = vmatpush1.msra.mxu0 0.0
    %3923 = vmatprep.subr.mxu0 0.0
    %3924 = vmatpush1.msra.mxu0 0.0
    %3925 = vmatprep.subr.mxu0 0.0
    %3926 = vmatpush1.msra.mxu0 0.0
    %3927 = vmatprep.subr.mxu0 0.0
    %3928 = vmatpush1.msra.mxu0 0.0
    %3929 = vmatprep.subr.mxu0 0.0
    %3930 = vmatpush1.msra.mxu0 0.0
    %3931 = vmatprep.subr.mxu0 0.0
    %3932 = vmatpush1.msra.mxu0 0.0
    %3933 = vmatprep.subr.mxu0 0.0
    %3934 = vmatpush1.msra.mxu0 0.0
    %3935 = vmatprep.subr.mxu0 0.0
    %3936 = vmatpush1.msra.mxu0 0.0
    %3937 = vmatprep.subr.mxu0 0.0
    %3938 = vmatpush1.msra.mxu0 0.0
    %3939 = vmatprep.subr.mxu0 0.0
    %3940 = vmatpush1.msra.mxu0 0.0
    %3941 = vmatprep.subr.mxu0 0.0
    %3942 = vmatpush1.msra.mxu0 0.0
    %3943 = vmatprep.mubr.f32.mxu0 0.0
    %3944 = vmatmul.mubr.f32.gmra.mrb[0].mxu0 %v3874
    %v3945 = vpop.f32.mrb[0].mxu0
    %v3946 = vadd.f32 0.0, %v3945
    %v3947 = vpop.f32.mrb[0].mxu0
    %3948 = vmatprep.mubr.f32.mxu0 0.0
    %3949 = vmatmul.mubr.f32.gmra.mrb[0].mxu0 %v3877
    %v3950 = vpop.f32.mrb[0].mxu0
    %v3951 = vadd.f32 0.0, %v3950
    %v3952 = vpop.f32.mrb[0].mxu0
    %3953 = vdwg.mxu0
    %3954 = vst [vmem:[#allocation5] sm:$0xff] %v3946
    %3955 = vst [vmem:[#allocation5 + $0x8] sm:$0xff] %v3951
    // Predicated region
    $region66: #{tpu_custom_call.1} parent=1 // pred_check
      _
    $region67: #{tpu_custom_call.1} parent=1 // pred_check_branch
      %3957 = sbr.rel (0) target = $region69
    $region68: #{tpu_custom_call.1} parent=1 // pred_region
      %s3959 = ssub.s32 256, 256
      %3960 = vsyncadd [#allocation6], %s3959
      %s3961 = sshll.u32 [#allocation5], 4
      %s3962 = int_to_ptr.vmem [resolvable:$true] %s3961
      %3967 = dma.vmem_to_hbm [thread:$0]  %s3962, 256, %s17, [#allocation6], 128, 128, 8
    $region69: #{tpu_custom_call.1} parent=1 // pred_fallthru
      _
    // Predicated region
    $region70: #{tpu_custom_call.1} parent=1 // pred_check
      _
    $region71: #{tpu_custom_call.1} parent=1 // pred_check_branch
      %3969 = sbr.rel (0) target = $region73
    $region72: #{tpu_custom_call.1} parent=1 // pred_region
      %3970 = dma.done [#allocation6], 256
    $region73: #{tpu_custom_call.1} parent=1 // pred_fallthru
      _
    %3971 = vsyncpa [#allocation6], 1

</llo_original>
